<compile_context>
chip_gen: v7x
topology: tpu7x:2x2x1
jax: 0.10.0
libtpu: 0.0.40
codegen_flags: <defaults>
</compile_context>

<pallas_src>
import functools

import numpy as np
import jax
import jax.numpy as jnp
from jax import lax
from jax.experimental import pallas as pl
from jax.experimental.pallas import tpu as pltpu

# Hyperparameters (reduced from the CNNIQAnet defaults 50/800/800 to keep the
# demo small; the kernel is parametric in these).
KER = 7        # ker_size
N_KERS = 16    # n_kers   -> features = 2 * n_kers
N1 = 64        # n1_nodes
N2 = 64        # n2_nodes

TB = 128       # patches processed per grid step (lane width)


# ----------------------------------------------------------------------------
# Host-side: banded conv matrix so the 7x7 conv becomes a 2-D MXU matmul.
# WB[ow*Kp + k, di*W + j] = w[k, di, j - ow]  for ow <= j < ow + KER, else 0.
# ----------------------------------------------------------------------------
def _build_conv_matrix(w_conv, W, OW, Kp):
    K, ker, _ = w_conv.shape
    wnp = np.asarray(w_conv, np.float32)
    wb = np.zeros((OW * Kp, ker * W), np.float32)
    for ow in range(OW):
        for k in range(K):
            for di in range(ker):
                wb[ow * Kp + k, di * W + ow: di * W + ow + ker] = wnp[k, di, :]
    return jnp.asarray(wb)


# ----------------------------------------------------------------------------
# Fused kernel: conv(1->K, 7x7, VALID) on the MXU + global max/min pool + MLP.
# ----------------------------------------------------------------------------
def fused_cnniqa_kernel(x_ref, wb_ref, bc_ref, w1_ref, b1_ref, w2_ref, b2_ref,
                        w3_ref, b3_ref, o_ref, *, K, Kp, ker, W, OH, OW):
    # x_ref  : (H*W, TB)        VMEM -- TB gray patches, batch on the lane axis
    # wb_ref : (OW*Kp, KER*W)   VMEM -- banded conv weight matrix (resident)
    # bc_ref : (2K, 1)          VMEM -- conv bias duplicated for max/min halves
    # w1_ref : (N1, 2K)  b1_ref: (N1, 1)      (torch Linear layout: (out, in))
    # w2_ref : (N2, N1)  b2_ref: (N2, 1)
    # w3_ref : (1,  N2)  b3_ref: (1, 1)
    # o_ref  : (1, TB)
    wb = wb_ref[...]                                   # hoisted once (VMEM tile)

    run_max = None
    run_min = None
    for oh in range(OH):                               # unrolled: static slices
        # (KER*W, TB) input-row window; start is a multiple of W (tile-aligned).
        xs = x_ref[pl.ds(oh * W, ker * W), :]
        # All K channels x all OW output columns for this output row, one MXU op.
        y = jnp.dot(wb, xs, preferred_element_type=jnp.float32)   # (OW*Kp, TB)
        ymax = y[0:Kp, :]
        ymin = y[0:Kp, :]
        for ow in range(1, OW):                        # pool over output columns
            blk = y[ow * Kp:(ow + 1) * Kp, :]
            ymax = jnp.maximum(ymax, blk)
            ymin = jnp.minimum(ymin, blk)
        if run_max is None:
            run_max, run_min = ymax, ymin
        else:
            run_max = jnp.maximum(run_max, ymax)
            run_min = jnp.minimum(run_min, ymin)

    # Drop channel padding (if any); conv bias commutes with spatial max/min.
    feat = jnp.concatenate([run_max[0:K, :], run_min[0:K, :]], axis=0)
    feat = feat + bc_ref[...]                          # (2K, TB)

    h = jnp.dot(w1_ref[...], feat,
                preferred_element_type=jnp.float32) + b1_ref[...]
    h = jnp.maximum(h, 0.0)
    # TODO(synk): F.dropout(p=0.5) is stochastic during training; identity
    # (inference semantics) here.
    h = jnp.dot(w2_ref[...], h,
                preferred_element_type=jnp.float32) + b2_ref[...]
    h = jnp.maximum(h, 0.0)
    q = jnp.dot(w3_ref[...], h,
                preferred_element_type=jnp.float32) + b3_ref[...]
    o_ref[...] = q                                     # single lane-dense store


def cnniqa_forward(x, params):
    """params: conv weight (K, KER, KER); fc weights in torch (out, in) layout."""
    w_conv, b_conv, w1, b1, w2, b2, w3, b3 = params
    H, W = x.shape[-2], x.shape[-1]
    ker = w_conv.shape[-1]
    OH, OW = H - ker + 1, W - ker + 1
    assert W % 8 == 0, "W must be a multiple of 8 for the tile-aligned row flatten"

    # torch: x.view(-1, C, H, W) with C == 1 -> squeeze the channel.
    xg = x.reshape(-1, H, W).astype(jnp.float32)
    B = xg.shape[0]
    K = w_conv.shape[0]
    Kp = ((K + 7) // 8) * 8          # channel count padded to a sublane multiple
    n1, n2 = w1.shape[0], w2.shape[0]

    # Batch on the lane axis, flattened spatial on sublanes, padded to TB.
    Bp = ((B + TB - 1) // TB) * TB
    xt = jnp.transpose(xg, (1, 2, 0)).reshape(H * W, B)        # (H*W, B)
    if Bp != B:
        xt = jnp.pad(xt, ((0, 0), (0, Bp - B)))
    # TODO(synk): this relayout+pad is an extra XLA pass over the input; emit
    # patches directly in (H*W, B) layout upstream to avoid it.

    wb = _build_conv_matrix(w_conv, W, OW, Kp)                  # (OW*Kp, KER*W)
    bc_cat = jnp.concatenate([b_conv, b_conv]).reshape(2 * K, 1)

    kernel = functools.partial(fused_cnniqa_kernel,
                               K=K, Kp=Kp, ker=ker, W=W, OH=OH, OW=OW)

    out = pl.pallas_call(
        kernel,
        out_shape=jax.ShapeDtypeStruct((1, Bp), jnp.float32),
        grid_spec=pltpu.PrefetchScalarGridSpec(
            num_scalar_prefetch=0,
            grid=(Bp // TB,),
            in_specs=[
                pl.BlockSpec((H * W, TB), lambda i: (0, i)),          # patches
                pl.BlockSpec((OW * Kp, ker * W), lambda i: (0, 0)),   # conv WB
                pl.BlockSpec((2 * K, 1), lambda i: (0, 0)),           # conv b
                pl.BlockSpec((n1, 2 * K), lambda i: (0, 0)),          # fc1 w
                pl.BlockSpec((n1, 1), lambda i: (0, 0)),              # fc1 b
                pl.BlockSpec((n2, n1), lambda i: (0, 0)),             # fc2 w
                pl.BlockSpec((n2, 1), lambda i: (0, 0)),              # fc2 b
                pl.BlockSpec((1, n2), lambda i: (0, 0)),              # fc3 w
                pl.BlockSpec((1, 1), lambda i: (0, 0)),               # fc3 b
            ],
            out_specs=pl.BlockSpec((1, TB), lambda i: (0, i)),
        ),
        compiler_params=pltpu.CompilerParams(
            dimension_semantics=("parallel",)),
    )(xt, wb, bc_cat, w1, b1.reshape(-1, 1), w2, b2.reshape(-1, 1),
      w3, b3.reshape(1, 1))

    return out[0, :B].reshape(B, 1)


# ----------------------------------------------------------------------------
# Pure-JAX reference (same math, XLA ops) for a sanity check.
# ----------------------------------------------------------------------------
def reference_forward(x, params):
    w_conv, b_conv, w1, b1, w2, b2, w3, b3 = params
    H, W = x.shape[-2], x.shape[-1]
    x4 = x.reshape(-1, 1, H, W)
    w4 = w_conv[:, None, :, :]
    h = lax.conv_general_dilated(x4, w4, (1, 1), "VALID",
                                 dimension_numbers=("NCHW", "OIHW", "NCHW"))
    h = h + b_conv[None, :, None, None]
    h1 = h.max(axis=(2, 3))
    h2 = h.min(axis=(2, 3))
    f = jnp.concatenate([h1, h2], axis=1)
    h = jnp.maximum(f @ w1.T + b1, 0.0)
    h = jnp.maximum(h @ w2.T + b2, 0.0)
    return h @ w3.T + b3


def init_params(key):
    ks = jax.random.split(key, 8)
    w_conv = 0.1 * jax.random.normal(ks[0], (N_KERS, KER, KER), jnp.float32)
    b_conv = 0.1 * jax.random.normal(ks[1], (N_KERS,), jnp.float32)
    w1 = 0.1 * jax.random.normal(ks[2], (N1, 2 * N_KERS), jnp.float32)  # (out, in)
    b1 = 0.1 * jax.random.normal(ks[3], (N1,), jnp.float32)
    w2 = 0.1 * jax.random.normal(ks[4], (N2, N1), jnp.float32)
    b2 = 0.1 * jax.random.normal(ks[5], (N2,), jnp.float32)
    w3 = 0.1 * jax.random.normal(ks[6], (1, N2), jnp.float32)
    b3 = 0.1 * jax.random.normal(ks[7], (1,), jnp.float32)
    return (w_conv, b_conv, w1, b1, w2, b2, w3, b3)


if __name__ == "__main__":
    key = jax.random.PRNGKey(0)
    pkey, xkey = jax.random.split(key)
    params = init_params(pkey)
    x = jax.random.normal(xkey, (2, 1, 16, 16), jnp.float32)  # NCHW, C=1 gray patch

    q = cnniqa_forward(x, params)
    q = jax.block_until_ready(q)

    q_ref = reference_forward(x, params)
    assert q.shape == (2, 1), q.shape
    assert jnp.allclose(q, q_ref, atol=1e-3, rtol=1e-3), (q, q_ref)

    print("KERNEL_OK")
</pallas_src>

<mosaic_0001>
module attributes {stable_mosaic.version = 11 : i64} {
  func.func @fused_cnniqa_kernel(%arg0: i32, %arg1: memref<256x128xf32, #tpu.memory_space<vmem>>, %arg2: memref<160x112xf32, #tpu.memory_space<vmem>>, %arg3: memref<32x1xf32, #tpu.memory_space<vmem>>, %arg4: memref<64x32xf32, #tpu.memory_space<vmem>>, %arg5: memref<64x1xf32, #tpu.memory_space<vmem>>, %arg6: memref<64x64xf32, #tpu.memory_space<vmem>>, %arg7: memref<64x1xf32, #tpu.memory_space<vmem>>, %arg8: memref<1x64xf32, #tpu.memory_space<vmem>>, %arg9: memref<1x1xf32, #tpu.memory_space<vmem>>, %arg10: memref<1x128xf32, #tpu.memory_space<vmem>>) attributes {dimension_semantics = [#tpu.dimension_semantics<parallel>], iteration_bounds = array<i64: 1>, scalar_prefetch = 0 : i64, scratch_operands = 0 : i64, tpu.core_type = #tpu.core_type<tc>, window_params = [{transform_indices = @transform_0, window_bounds = array<i64: 256, 128>}, {pipeline_mode = #tpu.pipeline_mode<synchronous>, transform_indices = @transform_1, window_bounds = array<i64: 160, 112>}, {pipeline_mode = #tpu.pipeline_mode<synchronous>, transform_indices = @transform_2, window_bounds = array<i64: 32, 1>}, {pipeline_mode = #tpu.pipeline_mode<synchronous>, transform_indices = @transform_3, window_bounds = array<i64: 64, 32>}, {pipeline_mode = #tpu.pipeline_mode<synchronous>, transform_indices = @transform_4, window_bounds = array<i64: 64, 1>}, {pipeline_mode = #tpu.pipeline_mode<synchronous>, transform_indices = @transform_5, window_bounds = array<i64: 64, 64>}, {pipeline_mode = #tpu.pipeline_mode<synchronous>, transform_indices = @transform_6, window_bounds = array<i64: 64, 1>}, {pipeline_mode = #tpu.pipeline_mode<synchronous>, transform_indices = @transform_7, window_bounds = array<i64: 1, 64>}, {pipeline_mode = #tpu.pipeline_mode<synchronous>, transform_indices = @transform_8, window_bounds = array<i64: 1, 1>}, {transform_indices = @transform_9, window_bounds = array<i64: 1, 128>}]} {
    %c0 = arith.constant 0 : index
    %c0_0 = arith.constant 0 : index
    %0 = vector.load %arg2[%c0, %c0_0] : memref<160x112xf32, #tpu.memory_space<vmem>>, vector<160x112xf32>
    %c0_1 = arith.constant 0 : index
    %c0_2 = arith.constant 0 : index
    %1 = vector.load %arg1[%c0_1, %c0_2] : memref<256x128xf32, #tpu.memory_space<vmem>>, vector<112x128xf32>
    %cst = arith.constant dense<0.000000e+00> : vector<160x128xf32>
    %2 = tpu.matmul %0, %1, %cst {dimension_numbers = #tpu.dot_dimension_numbers<[1], [0], [0], [1], [0, 0, 1, 1], [], []>} : vector<160x112xf32>, vector<112x128xf32>, vector<160x128xf32> -> vector<160x128xf32>
    %3 = vector.extract_strided_slice %2 {offsets = [0, 0], sizes = [16, 128], strides = [1, 1]} : vector<160x128xf32> to vector<16x128xf32>
    %4 = vector.extract_strided_slice %2 {offsets = [0, 0], sizes = [16, 128], strides = [1, 1]} : vector<160x128xf32> to vector<16x128xf32>
    %5 = vector.extract_strided_slice %2 {offsets = [16, 0], sizes = [16, 128], strides = [1, 1]} : vector<160x128xf32> to vector<16x128xf32>
    %6 = arith.maximumf %3, %5 : vector<16x128xf32>
    %7 = arith.minimumf %4, %5 : vector<16x128xf32>
    %8 = vector.extract_strided_slice %2 {offsets = [32, 0], sizes = [16, 128], strides = [1, 1]} : vector<160x128xf32> to vector<16x128xf32>
    %9 = arith.maximumf %6, %8 : vector<16x128xf32>
    %10 = arith.minimumf %7, %8 : vector<16x128xf32>
    %11 = vector.extract_strided_slice %2 {offsets = [48, 0], sizes = [16, 128], strides = [1, 1]} : vector<160x128xf32> to vector<16x128xf32>
    %12 = arith.maximumf %9, %11 : vector<16x128xf32>
    %13 = arith.minimumf %10, %11 : vector<16x128xf32>
    %14 = vector.extract_strided_slice %2 {offsets = [64, 0], sizes = [16, 128], strides = [1, 1]} : vector<160x128xf32> to vector<16x128xf32>
    %15 = arith.maximumf %12, %14 : vector<16x128xf32>
    %16 = arith.minimumf %13, %14 : vector<16x128xf32>
    %17 = vector.extract_strided_slice %2 {offsets = [80, 0], sizes = [16, 128], strides = [1, 1]} : vector<160x128xf32> to vector<16x128xf32>
    %18 = arith.maximumf %15, %17 : vector<16x128xf32>
    %19 = arith.minimumf %16, %17 : vector<16x128xf32>
    %20 = vector.extract_strided_slice %2 {offsets = [96, 0], sizes = [16, 128], strides = [1, 1]} : vector<160x128xf32> to vector<16x128xf32>
    %21 = arith.maximumf %18, %20 : vector<16x128xf32>
    %22 = arith.minimumf %19, %20 : vector<16x128xf32>
    %23 = vector.extract_strided_slice %2 {offsets = [112, 0], sizes = [16, 128], strides = [1, 1]} : vector<160x128xf32> to vector<16x128xf32>
    %24 = arith.maximumf %21, %23 : vector<16x128xf32>
    %25 = arith.minimumf %22, %23 : vector<16x128xf32>
    %26 = vector.extract_strided_slice %2 {offsets = [128, 0], sizes = [16, 128], strides = [1, 1]} : vector<160x128xf32> to vector<16x128xf32>
    %27 = arith.maximumf %24, %26 : vector<16x128xf32>
    %28 = arith.minimumf %25, %26 : vector<16x128xf32>
    %29 = vector.extract_strided_slice %2 {offsets = [144, 0], sizes = [16, 128], strides = [1, 1]} : vector<160x128xf32> to vector<16x128xf32>
    %30 = arith.maximumf %27, %29 : vector<16x128xf32>
    %31 = arith.minimumf %28, %29 : vector<16x128xf32>
    %c16 = arith.constant 16 : index
    %c0_3 = arith.constant 0 : index
    %32 = vector.load %arg1[%c16, %c0_3] : memref<256x128xf32, #tpu.memory_space<vmem>>, vector<112x128xf32>
    %cst_4 = arith.constant dense<0.000000e+00> : vector<160x128xf32>
    %33 = tpu.matmul %0, %32, %cst_4 {dimension_numbers = #tpu.dot_dimension_numbers<[1], [0], [0], [1], [0, 0, 1, 1], [], []>} : vector<160x112xf32>, vector<112x128xf32>, vector<160x128xf32> -> vector<160x128xf32>
    %34 = vector.extract_strided_slice %33 {offsets = [0, 0], sizes = [16, 128], strides = [1, 1]} : vector<160x128xf32> to vector<16x128xf32>
    %35 = vector.extract_strided_slice %33 {offsets = [0, 0], sizes = [16, 128], strides = [1, 1]} : vector<160x128xf32> to vector<16x128xf32>
    %36 = vector.extract_strided_slice %33 {offsets = [16, 0], sizes = [16, 128], strides = [1, 1]} : vector<160x128xf32> to vector<16x128xf32>
    %37 = arith.maximumf %34, %36 : vector<16x128xf32>
    %38 = arith.minimumf %35, %36 : vector<16x128xf32>
    %39 = vector.extract_strided_slice %33 {offsets = [32, 0], sizes = [16, 128], strides = [1, 1]} : vector<160x128xf32> to vector<16x128xf32>
    %40 = arith.maximumf %37, %39 : vector<16x128xf32>
    %41 = arith.minimumf %38, %39 : vector<16x128xf32>
    %42 = vector.extract_strided_slice %33 {offsets = [48, 0], sizes = [16, 128], strides = [1, 1]} : vector<160x128xf32> to vector<16x128xf32>
    %43 = arith.maximumf %40, %42 : vector<16x128xf32>
    %44 = arith.minimumf %41, %42 : vector<16x128xf32>
    %45 = vector.extract_strided_slice %33 {offsets = [64, 0], sizes = [16, 128], strides = [1, 1]} : vector<160x128xf32> to vector<16x128xf32>
    %46 = arith.maximumf %43, %45 : vector<16x128xf32>
    %47 = arith.minimumf %44, %45 : vector<16x128xf32>
    %48 = vector.extract_strided_slice %33 {offsets = [80, 0], sizes = [16, 128], strides = [1, 1]} : vector<160x128xf32> to vector<16x128xf32>
    %49 = arith.maximumf %46, %48 : vector<16x128xf32>
    %50 = arith.minimumf %47, %48 : vector<16x128xf32>
    %51 = vector.extract_strided_slice %33 {offsets = [96, 0], sizes = [16, 128], strides = [1, 1]} : vector<160x128xf32> to vector<16x128xf32>
    %52 = arith.maximumf %49, %51 : vector<16x128xf32>
    %53 = arith.minimumf %50, %51 : vector<16x128xf32>
    %54 = vector.extract_strided_slice %33 {offsets = [112, 0], sizes = [16, 128], strides = [1, 1]} : vector<160x128xf32> to vector<16x128xf32>
    %55 = arith.maximumf %52, %54 : vector<16x128xf32>
    %56 = arith.minimumf %53, %54 : vector<16x128xf32>
    %57 = vector.extract_strided_slice %33 {offsets = [128, 0], sizes = [16, 128], strides = [1, 1]} : vector<160x128xf32> to vector<16x128xf32>
    %58 = arith.maximumf %55, %57 : vector<16x128xf32>
    %59 = arith.minimumf %56, %57 : vector<16x128xf32>
    %60 = vector.extract_strided_slice %33 {offsets = [144, 0], sizes = [16, 128], strides = [1, 1]} : vector<160x128xf32> to vector<16x128xf32>
    %61 = arith.maximumf %58, %60 : vector<16x128xf32>
    %62 = arith.minimumf %59, %60 : vector<16x128xf32>
    %63 = arith.maximumf %30, %61 : vector<16x128xf32>
    %64 = arith.minimumf %31, %62 : vector<16x128xf32>
    %c32 = arith.constant 32 : index
    %c0_5 = arith.constant 0 : index
    %65 = vector.load %arg1[%c32, %c0_5] : memref<256x128xf32, #tpu.memory_space<vmem>>, vector<112x128xf32>
    %cst_6 = arith.constant dense<0.000000e+00> : vector<160x128xf32>
    %66 = tpu.matmul %0, %65, %cst_6 {dimension_numbers = #tpu.dot_dimension_numbers<[1], [0], [0], [1], [0, 0, 1, 1], [], []>} : vector<160x112xf32>, vector<112x128xf32>, vector<160x128xf32> -> vector<160x128xf32>
    %67 = vector.extract_strided_slice %66 {offsets = [0, 0], sizes = [16, 128], strides = [1, 1]} : vector<160x128xf32> to vector<16x128xf32>
    %68 = vector.extract_strided_slice %66 {offsets = [0, 0], sizes = [16, 128], strides = [1, 1]} : vector<160x128xf32> to vector<16x128xf32>
    %69 = vector.extract_strided_slice %66 {offsets = [16, 0], sizes = [16, 128], strides = [1, 1]} : vector<160x128xf32> to vector<16x128xf32>
    %70 = arith.maximumf %67, %69 : vector<16x128xf32>
    %71 = arith.minimumf %68, %69 : vector<16x128xf32>
    %72 = vector.extract_strided_slice %66 {offsets = [32, 0], sizes = [16, 128], strides = [1, 1]} : vector<160x128xf32> to vector<16x128xf32>
    %73 = arith.maximumf %70, %72 : vector<16x128xf32>
    %74 = arith.minimumf %71, %72 : vector<16x128xf32>
    %75 = vector.extract_strided_slice %66 {offsets = [48, 0], sizes = [16, 128], strides = [1, 1]} : vector<160x128xf32> to vector<16x128xf32>
    %76 = arith.maximumf %73, %75 : vector<16x128xf32>
    %77 = arith.minimumf %74, %75 : vector<16x128xf32>
    %78 = vector.extract_strided_slice %66 {offsets = [64, 0], sizes = [16, 128], strides = [1, 1]} : vector<160x128xf32> to vector<16x128xf32>
    %79 = arith.maximumf %76, %78 : vector<16x128xf32>
    %80 = arith.minimumf %77, %78 : vector<16x128xf32>
    %81 = vector.extract_strided_slice %66 {offsets = [80, 0], sizes = [16, 128], strides = [1, 1]} : vector<160x128xf32> to vector<16x128xf32>
    %82 = arith.maximumf %79, %81 : vector<16x128xf32>
    %83 = arith.minimumf %80, %81 : vector<16x128xf32>
    %84 = vector.extract_strided_slice %66 {offsets = [96, 0], sizes = [16, 128], strides = [1, 1]} : vector<160x128xf32> to vector<16x128xf32>
    %85 = arith.maximumf %82, %84 : vector<16x128xf32>
    %86 = arith.minimumf %83, %84 : vector<16x128xf32>
    %87 = vector.extract_strided_slice %66 {offsets = [112, 0], sizes = [16, 128], strides = [1, 1]} : vector<160x128xf32> to vector<16x128xf32>
    %88 = arith.maximumf %85, %87 : vector<16x128xf32>
    %89 = arith.minimumf %86, %87 : vector<16x128xf32>
    %90 = vector.extract_strided_slice %66 {offsets = [128, 0], sizes = [16, 128], strides = [1, 1]} : vector<160x128xf32> to vector<16x128xf32>
    %91 = arith.maximumf %88, %90 : vector<16x128xf32>
    %92 = arith.minimumf %89, %90 : vector<16x128xf32>
    %93 = vector.extract_strided_slice %66 {offsets = [144, 0], sizes = [16, 128], strides = [1, 1]} : vector<160x128xf32> to vector<16x128xf32>
    %94 = arith.maximumf %91, %93 : vector<16x128xf32>
    %95 = arith.minimumf %92, %93 : vector<16x128xf32>
    %96 = arith.maximumf %63, %94 : vector<16x128xf32>
    %97 = arith.minimumf %64, %95 : vector<16x128xf32>
    %c48 = arith.constant 48 : index
    %c0_7 = arith.constant 0 : index
    %98 = vector.load %arg1[%c48, %c0_7] : memref<256x128xf32, #tpu.memory_space<vmem>>, vector<112x128xf32>
    %cst_8 = arith.constant dense<0.000000e+00> : vector<160x128xf32>
    %99 = tpu.matmul %0, %98, %cst_8 {dimension_numbers = #tpu.dot_dimension_numbers<[1], [0], [0], [1], [0, 0, 1, 1], [], []>} : vector<160x112xf32>, vector<112x128xf32>, vector<160x128xf32> -> vector<160x128xf32>
    %100 = vector.extract_strided_slice %99 {offsets = [0, 0], sizes = [16, 128], strides = [1, 1]} : vector<160x128xf32> to vector<16x128xf32>
    %101 = vector.extract_strided_slice %99 {offsets = [0, 0], sizes = [16, 128], strides = [1, 1]} : vector<160x128xf32> to vector<16x128xf32>
    %102 = vector.extract_strided_slice %99 {offsets = [16, 0], sizes = [16, 128], strides = [1, 1]} : vector<160x128xf32> to vector<16x128xf32>
    %103 = arith.maximumf %100, %102 : vector<16x128xf32>
    %104 = arith.minimumf %101, %102 : vector<16x128xf32>
    %105 = vector.extract_strided_slice %99 {offsets = [32, 0], sizes = [16, 128], strides = [1, 1]} : vector<160x128xf32> to vector<16x128xf32>
    %106 = arith.maximumf %103, %105 : vector<16x128xf32>
    %107 = arith.minimumf %104, %105 : vector<16x128xf32>
    %108 = vector.extract_strided_slice %99 {offsets = [48, 0], sizes = [16, 128], strides = [1, 1]} : vector<160x128xf32> to vector<16x128xf32>
    %109 = arith.maximumf %106, %108 : vector<16x128xf32>
    %110 = arith.minimumf %107, %108 : vector<16x128xf32>
    %111 = vector.extract_strided_slice %99 {offsets = [64, 0], sizes = [16, 128], strides = [1, 1]} : vector<160x128xf32> to vector<16x128xf32>
    %112 = arith.maximumf %109, %111 : vector<16x128xf32>
    %113 = arith.minimumf %110, %111 : vector<16x128xf32>
    %114 = vector.extract_strided_slice %99 {offsets = [80, 0], sizes = [16, 128], strides = [1, 1]} : vector<160x128xf32> to vector<16x128xf32>
    %115 = arith.maximumf %112, %114 : vector<16x128xf32>
    %116 = arith.minimumf %113, %114 : vector<16x128xf32>
    %117 = vector.extract_strided_slice %99 {offsets = [96, 0], sizes = [16, 128], strides = [1, 1]} : vector<160x128xf32> to vector<16x128xf32>
    %118 = arith.maximumf %115, %117 : vector<16x128xf32>
    %119 = arith.minimumf %116, %117 : vector<16x128xf32>
    %120 = vector.extract_strided_slice %99 {offsets = [112, 0], sizes = [16, 128], strides = [1, 1]} : vector<160x128xf32> to vector<16x128xf32>
    %121 = arith.maximumf %118, %120 : vector<16x128xf32>
    %122 = arith.minimumf %119, %120 : vector<16x128xf32>
    %123 = vector.extract_strided_slice %99 {offsets = [128, 0], sizes = [16, 128], strides = [1, 1]} : vector<160x128xf32> to vector<16x128xf32>
    %124 = arith.maximumf %121, %123 : vector<16x128xf32>
    %125 = arith.minimumf %122, %123 : vector<16x128xf32>
    %126 = vector.extract_strided_slice %99 {offsets = [144, 0], sizes = [16, 128], strides = [1, 1]} : vector<160x128xf32> to vector<16x128xf32>
    %127 = arith.maximumf %124, %126 : vector<16x128xf32>
    %128 = arith.minimumf %125, %126 : vector<16x128xf32>
    %129 = arith.maximumf %96, %127 : vector<16x128xf32>
    %130 = arith.minimumf %97, %128 : vector<16x128xf32>
    %c64 = arith.constant 64 : index
    %c0_9 = arith.constant 0 : index
    %131 = vector.load %arg1[%c64, %c0_9] : memref<256x128xf32, #tpu.memory_space<vmem>>, vector<112x128xf32>
    %cst_10 = arith.constant dense<0.000000e+00> : vector<160x128xf32>
    %132 = tpu.matmul %0, %131, %cst_10 {dimension_numbers = #tpu.dot_dimension_numbers<[1], [0], [0], [1], [0, 0, 1, 1], [], []>} : vector<160x112xf32>, vector<112x128xf32>, vector<160x128xf32> -> vector<160x128xf32>
    %133 = vector.extract_strided_slice %132 {offsets = [0, 0], sizes = [16, 128], strides = [1, 1]} : vector<160x128xf32> to vector<16x128xf32>
    %134 = vector.extract_strided_slice %132 {offsets = [0, 0], sizes = [16, 128], strides = [1, 1]} : vector<160x128xf32> to vector<16x128xf32>
    %135 = vector.extract_strided_slice %132 {offsets = [16, 0], sizes = [16, 128], strides = [1, 1]} : vector<160x128xf32> to vector<16x128xf32>
    %136 = arith.maximumf %133, %135 : vector<16x128xf32>
    %137 = arith.minimumf %134, %135 : vector<16x128xf32>
    %138 = vector.extract_strided_slice %132 {offsets = [32, 0], sizes = [16, 128], strides = [1, 1]} : vector<160x128xf32> to vector<16x128xf32>
    %139 = arith.maximumf %136, %138 : vector<16x128xf32>
    %140 = arith.minimumf %137, %138 : vector<16x128xf32>
    %141 = vector.extract_strided_slice %132 {offsets = [48, 0], sizes = [16, 128], strides = [1, 1]} : vector<160x128xf32> to vector<16x128xf32>
    %142 = arith.maximumf %139, %141 : vector<16x128xf32>
    %143 = arith.minimumf %140, %141 : vector<16x128xf32>
    %144 = vector.extract_strided_slice %132 {offsets = [64, 0], sizes = [16, 128], strides = [1, 1]} : vector<160x128xf32> to vector<16x128xf32>
    %145 = arith.maximumf %142, %144 : vector<16x128xf32>
    %146 = arith.minimumf %143, %144 : vector<16x128xf32>
    %147 = vector.extract_strided_slice %132 {offsets = [80, 0], sizes = [16, 128], strides = [1, 1]} : vector<160x128xf32> to vector<16x128xf32>
    %148 = arith.maximumf %145, %147 : vector<16x128xf32>
    %149 = arith.minimumf %146, %147 : vector<16x128xf32>
    %150 = vector.extract_strided_slice %132 {offsets = [96, 0], sizes = [16, 128], strides = [1, 1]} : vector<160x128xf32> to vector<16x128xf32>
    %151 = arith.maximumf %148, %150 : vector<16x128xf32>
    %152 = arith.minimumf %149, %150 : vector<16x128xf32>
    %153 = vector.extract_strided_slice %132 {offsets = [112, 0], sizes = [16, 128], strides = [1, 1]} : vector<160x128xf32> to vector<16x128xf32>
    %154 = arith.maximumf %151, %153 : vector<16x128xf32>
    %155 = arith.minimumf %152, %153 : vector<16x128xf32>
    %156 = vector.extract_strided_slice %132 {offsets = [128, 0], sizes = [16, 128], strides = [1, 1]} : vector<160x128xf32> to vector<16x128xf32>
    %157 = arith.maximumf %154, %156 : vector<16x128xf32>
    %158 = arith.minimumf %155, %156 : vector<16x128xf32>
    %159 = vector.extract_strided_slice %132 {offsets = [144, 0], sizes = [16, 128], strides = [1, 1]} : vector<160x128xf32> to vector<16x128xf32>
    %160 = arith.maximumf %157, %159 : vector<16x128xf32>
    %161 = arith.minimumf %158, %159 : vector<16x128xf32>
    %162 = arith.maximumf %129, %160 : vector<16x128xf32>
    %163 = arith.minimumf %130, %161 : vector<16x128xf32>
    %c80 = arith.constant 80 : index
    %c0_11 = arith.constant 0 : index
    %164 = vector.load %arg1[%c80, %c0_11] : memref<256x128xf32, #tpu.memory_space<vmem>>, vector<112x128xf32>
    %cst_12 = arith.constant dense<0.000000e+00> : vector<160x128xf32>
    %165 = tpu.matmul %0, %164, %cst_12 {dimension_numbers = #tpu.dot_dimension_numbers<[1], [0], [0], [1], [0, 0, 1, 1], [], []>} : vector<160x112xf32>, vector<112x128xf32>, vector<160x128xf32> -> vector<160x128xf32>
    %166 = vector.extract_strided_slice %165 {offsets = [0, 0], sizes = [16, 128], strides = [1, 1]} : vector<160x128xf32> to vector<16x128xf32>
    %167 = vector.extract_strided_slice %165 {offsets = [0, 0], sizes = [16, 128], strides = [1, 1]} : vector<160x128xf32> to vector<16x128xf32>
    %168 = vector.extract_strided_slice %165 {offsets = [16, 0], sizes = [16, 128], strides = [1, 1]} : vector<160x128xf32> to vector<16x128xf32>
    %169 = arith.maximumf %166, %168 : vector<16x128xf32>
    %170 = arith.minimumf %167, %168 : vector<16x128xf32>
    %171 = vector.extract_strided_slice %165 {offsets = [32, 0], sizes = [16, 128], strides = [1, 1]} : vector<160x128xf32> to vector<16x128xf32>
    %172 = arith.maximumf %169, %171 : vector<16x128xf32>
    %173 = arith.minimumf %170, %171 : vector<16x128xf32>
    %174 = vector.extract_strided_slice %165 {offsets = [48, 0], sizes = [16, 128], strides = [1, 1]} : vector<160x128xf32> to vector<16x128xf32>
    %175 = arith.maximumf %172, %174 : vector<16x128xf32>
    %176 = arith.minimumf %173, %174 : vector<16x128xf32>
    %177 = vector.extract_strided_slice %165 {offsets = [64, 0], sizes = [16, 128], strides = [1, 1]} : vector<160x128xf32> to vector<16x128xf32>
    %178 = arith.maximumf %175, %177 : vector<16x128xf32>
    %179 = arith.minimumf %176, %177 : vector<16x128xf32>
    %180 = vector.extract_strided_slice %165 {offsets = [80, 0], sizes = [16, 128], strides = [1, 1]} : vector<160x128xf32> to vector<16x128xf32>
    %181 = arith.maximumf %178, %180 : vector<16x128xf32>
    %182 = arith.minimumf %179, %180 : vector<16x128xf32>
    %183 = vector.extract_strided_slice %165 {offsets = [96, 0], sizes = [16, 128], strides = [1, 1]} : vector<160x128xf32> to vector<16x128xf32>
    %184 = arith.maximumf %181, %183 : vector<16x128xf32>
    %185 = arith.minimumf %182, %183 : vector<16x128xf32>
    %186 = vector.extract_strided_slice %165 {offsets = [112, 0], sizes = [16, 128], strides = [1, 1]} : vector<160x128xf32> to vector<16x128xf32>
    %187 = arith.maximumf %184, %186 : vector<16x128xf32>
    %188 = arith.minimumf %185, %186 : vector<16x128xf32>
    %189 = vector.extract_strided_slice %165 {offsets = [128, 0], sizes = [16, 128], strides = [1, 1]} : vector<160x128xf32> to vector<16x128xf32>
    %190 = arith.maximumf %187, %189 : vector<16x128xf32>
    %191 = arith.minimumf %188, %189 : vector<16x128xf32>
    %192 = vector.extract_strided_slice %165 {offsets = [144, 0], sizes = [16, 128], strides = [1, 1]} : vector<160x128xf32> to vector<16x128xf32>
    %193 = arith.maximumf %190, %192 : vector<16x128xf32>
    %194 = arith.minimumf %191, %192 : vector<16x128xf32>
    %195 = arith.maximumf %162, %193 : vector<16x128xf32>
    %196 = arith.minimumf %163, %194 : vector<16x128xf32>
    %c96 = arith.constant 96 : index
    %c0_13 = arith.constant 0 : index
    %197 = vector.load %arg1[%c96, %c0_13] : memref<256x128xf32, #tpu.memory_space<vmem>>, vector<112x128xf32>
    %cst_14 = arith.constant dense<0.000000e+00> : vector<160x128xf32>
    %198 = tpu.matmul %0, %197, %cst_14 {dimension_numbers = #tpu.dot_dimension_numbers<[1], [0], [0], [1], [0, 0, 1, 1], [], []>} : vector<160x112xf32>, vector<112x128xf32>, vector<160x128xf32> -> vector<160x128xf32>
    %199 = vector.extract_strided_slice %198 {offsets = [0, 0], sizes = [16, 128], strides = [1, 1]} : vector<160x128xf32> to vector<16x128xf32>
    %200 = vector.extract_strided_slice %198 {offsets = [0, 0], sizes = [16, 128], strides = [1, 1]} : vector<160x128xf32> to vector<16x128xf32>
    %201 = vector.extract_strided_slice %198 {offsets = [16, 0], sizes = [16, 128], strides = [1, 1]} : vector<160x128xf32> to vector<16x128xf32>
    %202 = arith.maximumf %199, %201 : vector<16x128xf32>
    %203 = arith.minimumf %200, %201 : vector<16x128xf32>
    %204 = vector.extract_strided_slice %198 {offsets = [32, 0], sizes = [16, 128], strides = [1, 1]} : vector<160x128xf32> to vector<16x128xf32>
    %205 = arith.maximumf %202, %204 : vector<16x128xf32>
    %206 = arith.minimumf %203, %204 : vector<16x128xf32>
    %207 = vector.extract_strided_slice %198 {offsets = [48, 0], sizes = [16, 128], strides = [1, 1]} : vector<160x128xf32> to vector<16x128xf32>
    %208 = arith.maximumf %205, %207 : vector<16x128xf32>
    %209 = arith.minimumf %206, %207 : vector<16x128xf32>
    %210 = vector.extract_strided_slice %198 {offsets = [64, 0], sizes = [16, 128], strides = [1, 1]} : vector<160x128xf32> to vector<16x128xf32>
    %211 = arith.maximumf %208, %210 : vector<16x128xf32>
    %212 = arith.minimumf %209, %210 : vector<16x128xf32>
    %213 = vector.extract_strided_slice %198 {offsets = [80, 0], sizes = [16, 128], strides = [1, 1]} : vector<160x128xf32> to vector<16x128xf32>
    %214 = arith.maximumf %211, %213 : vector<16x128xf32>
    %215 = arith.minimumf %212, %213 : vector<16x128xf32>
    %216 = vector.extract_strided_slice %198 {offsets = [96, 0], sizes = [16, 128], strides = [1, 1]} : vector<160x128xf32> to vector<16x128xf32>
    %217 = arith.maximumf %214, %216 : vector<16x128xf32>
    %218 = arith.minimumf %215, %216 : vector<16x128xf32>
    %219 = vector.extract_strided_slice %198 {offsets = [112, 0], sizes = [16, 128], strides = [1, 1]} : vector<160x128xf32> to vector<16x128xf32>
    %220 = arith.maximumf %217, %219 : vector<16x128xf32>
    %221 = arith.minimumf %218, %219 : vector<16x128xf32>
    %222 = vector.extract_strided_slice %198 {offsets = [128, 0], sizes = [16, 128], strides = [1, 1]} : vector<160x128xf32> to vector<16x128xf32>
    %223 = arith.maximumf %220, %222 : vector<16x128xf32>
    %224 = arith.minimumf %221, %222 : vector<16x128xf32>
    %225 = vector.extract_strided_slice %198 {offsets = [144, 0], sizes = [16, 128], strides = [1, 1]} : vector<160x128xf32> to vector<16x128xf32>
    %226 = arith.maximumf %223, %225 : vector<16x128xf32>
    %227 = arith.minimumf %224, %225 : vector<16x128xf32>
    %228 = arith.maximumf %195, %226 : vector<16x128xf32>
    %229 = arith.minimumf %196, %227 : vector<16x128xf32>
    %c112 = arith.constant 112 : index
    %c0_15 = arith.constant 0 : index
    %230 = vector.load %arg1[%c112, %c0_15] : memref<256x128xf32, #tpu.memory_space<vmem>>, vector<112x128xf32>
    %cst_16 = arith.constant dense<0.000000e+00> : vector<160x128xf32>
    %231 = tpu.matmul %0, %230, %cst_16 {dimension_numbers = #tpu.dot_dimension_numbers<[1], [0], [0], [1], [0, 0, 1, 1], [], []>} : vector<160x112xf32>, vector<112x128xf32>, vector<160x128xf32> -> vector<160x128xf32>
    %232 = vector.extract_strided_slice %231 {offsets = [0, 0], sizes = [16, 128], strides = [1, 1]} : vector<160x128xf32> to vector<16x128xf32>
    %233 = vector.extract_strided_slice %231 {offsets = [0, 0], sizes = [16, 128], strides = [1, 1]} : vector<160x128xf32> to vector<16x128xf32>
    %234 = vector.extract_strided_slice %231 {offsets = [16, 0], sizes = [16, 128], strides = [1, 1]} : vector<160x128xf32> to vector<16x128xf32>
    %235 = arith.maximumf %232, %234 : vector<16x128xf32>
    %236 = arith.minimumf %233, %234 : vector<16x128xf32>
    %237 = vector.extract_strided_slice %231 {offsets = [32, 0], sizes = [16, 128], strides = [1, 1]} : vector<160x128xf32> to vector<16x128xf32>
    %238 = arith.maximumf %235, %237 : vector<16x128xf32>
    %239 = arith.minimumf %236, %237 : vector<16x128xf32>
    %240 = vector.extract_strided_slice %231 {offsets = [48, 0], sizes = [16, 128], strides = [1, 1]} : vector<160x128xf32> to vector<16x128xf32>
    %241 = arith.maximumf %238, %240 : vector<16x128xf32>
    %242 = arith.minimumf %239, %240 : vector<16x128xf32>
    %243 = vector.extract_strided_slice %231 {offsets = [64, 0], sizes = [16, 128], strides = [1, 1]} : vector<160x128xf32> to vector<16x128xf32>
    %244 = arith.maximumf %241, %243 : vector<16x128xf32>
    %245 = arith.minimumf %242, %243 : vector<16x128xf32>
    %246 = vector.extract_strided_slice %231 {offsets = [80, 0], sizes = [16, 128], strides = [1, 1]} : vector<160x128xf32> to vector<16x128xf32>
    %247 = arith.maximumf %244, %246 : vector<16x128xf32>
    %248 = arith.minimumf %245, %246 : vector<16x128xf32>
    %249 = vector.extract_strided_slice %231 {offsets = [96, 0], sizes = [16, 128], strides = [1, 1]} : vector<160x128xf32> to vector<16x128xf32>
    %250 = arith.maximumf %247, %249 : vector<16x128xf32>
    %251 = arith.minimumf %248, %249 : vector<16x128xf32>
    %252 = vector.extract_strided_slice %231 {offsets = [112, 0], sizes = [16, 128], strides = [1, 1]} : vector<160x128xf32> to vector<16x128xf32>
    %253 = arith.maximumf %250, %252 : vector<16x128xf32>
    %254 = arith.minimumf %251, %252 : vector<16x128xf32>
    %255 = vector.extract_strided_slice %231 {offsets = [128, 0], sizes = [16, 128], strides = [1, 1]} : vector<160x128xf32> to vector<16x128xf32>
    %256 = arith.maximumf %253, %255 : vector<16x128xf32>
    %257 = arith.minimumf %254, %255 : vector<16x128xf32>
    %258 = vector.extract_strided_slice %231 {offsets = [144, 0], sizes = [16, 128], strides = [1, 1]} : vector<160x128xf32> to vector<16x128xf32>
    %259 = arith.maximumf %256, %258 : vector<16x128xf32>
    %260 = arith.minimumf %257, %258 : vector<16x128xf32>
    %261 = arith.maximumf %228, %259 : vector<16x128xf32>
    %262 = arith.minimumf %229, %260 : vector<16x128xf32>
    %c128 = arith.constant 128 : index
    %c0_17 = arith.constant 0 : index
    %263 = vector.load %arg1[%c128, %c0_17] : memref<256x128xf32, #tpu.memory_space<vmem>>, vector<112x128xf32>
    %cst_18 = arith.constant dense<0.000000e+00> : vector<160x128xf32>
    %264 = tpu.matmul %0, %263, %cst_18 {dimension_numbers = #tpu.dot_dimension_numbers<[1], [0], [0], [1], [0, 0, 1, 1], [], []>} : vector<160x112xf32>, vector<112x128xf32>, vector<160x128xf32> -> vector<160x128xf32>
    %265 = vector.extract_strided_slice %264 {offsets = [0, 0], sizes = [16, 128], strides = [1, 1]} : vector<160x128xf32> to vector<16x128xf32>
    %266 = vector.extract_strided_slice %264 {offsets = [0, 0], sizes = [16, 128], strides = [1, 1]} : vector<160x128xf32> to vector<16x128xf32>
    %267 = vector.extract_strided_slice %264 {offsets = [16, 0], sizes = [16, 128], strides = [1, 1]} : vector<160x128xf32> to vector<16x128xf32>
    %268 = arith.maximumf %265, %267 : vector<16x128xf32>
    %269 = arith.minimumf %266, %267 : vector<16x128xf32>
    %270 = vector.extract_strided_slice %264 {offsets = [32, 0], sizes = [16, 128], strides = [1, 1]} : vector<160x128xf32> to vector<16x128xf32>
    %271 = arith.maximumf %268, %270 : vector<16x128xf32>
    %272 = arith.minimumf %269, %270 : vector<16x128xf32>
    %273 = vector.extract_strided_slice %264 {offsets = [48, 0], sizes = [16, 128], strides = [1, 1]} : vector<160x128xf32> to vector<16x128xf32>
    %274 = arith.maximumf %271, %273 : vector<16x128xf32>
    %275 = arith.minimumf %272, %273 : vector<16x128xf32>
    %276 = vector.extract_strided_slice %264 {offsets = [64, 0], sizes = [16, 128], strides = [1, 1]} : vector<160x128xf32> to vector<16x128xf32>
    %277 = arith.maximumf %274, %276 : vector<16x128xf32>
    %278 = arith.minimumf %275, %276 : vector<16x128xf32>
    %279 = vector.extract_strided_slice %264 {offsets = [80, 0], sizes = [16, 128], strides = [1, 1]} : vector<160x128xf32> to vector<16x128xf32>
    %280 = arith.maximumf %277, %279 : vector<16x128xf32>
    %281 = arith.minimumf %278, %279 : vector<16x128xf32>
    %282 = vector.extract_strided_slice %264 {offsets = [96, 0], sizes = [16, 128], strides = [1, 1]} : vector<160x128xf32> to vector<16x128xf32>
    %283 = arith.maximumf %280, %282 : vector<16x128xf32>
    %284 = arith.minimumf %281, %282 : vector<16x128xf32>
    %285 = vector.extract_strided_slice %264 {offsets = [112, 0], sizes = [16, 128], strides = [1, 1]} : vector<160x128xf32> to vector<16x128xf32>
    %286 = arith.maximumf %283, %285 : vector<16x128xf32>
    %287 = arith.minimumf %284, %285 : vector<16x128xf32>
    %288 = vector.extract_strided_slice %264 {offsets = [128, 0], sizes = [16, 128], strides = [1, 1]} : vector<160x128xf32> to vector<16x128xf32>
    %289 = arith.maximumf %286, %288 : vector<16x128xf32>
    %290 = arith.minimumf %287, %288 : vector<16x128xf32>
    %291 = vector.extract_strided_slice %264 {offsets = [144, 0], sizes = [16, 128], strides = [1, 1]} : vector<160x128xf32> to vector<16x128xf32>
    %292 = arith.maximumf %289, %291 : vector<16x128xf32>
    %293 = arith.minimumf %290, %291 : vector<16x128xf32>
    %294 = arith.maximumf %261, %292 : vector<16x128xf32>
    %295 = arith.minimumf %262, %293 : vector<16x128xf32>
    %c144 = arith.constant 144 : index
    %c0_19 = arith.constant 0 : index
    %296 = vector.load %arg1[%c144, %c0_19] : memref<256x128xf32, #tpu.memory_space<vmem>>, vector<112x128xf32>
    %cst_20 = arith.constant dense<0.000000e+00> : vector<160x128xf32>
    %297 = tpu.matmul %0, %296, %cst_20 {dimension_numbers = #tpu.dot_dimension_numbers<[1], [0], [0], [1], [0, 0, 1, 1], [], []>} : vector<160x112xf32>, vector<112x128xf32>, vector<160x128xf32> -> vector<160x128xf32>
    %298 = vector.extract_strided_slice %297 {offsets = [0, 0], sizes = [16, 128], strides = [1, 1]} : vector<160x128xf32> to vector<16x128xf32>
    %299 = vector.extract_strided_slice %297 {offsets = [0, 0], sizes = [16, 128], strides = [1, 1]} : vector<160x128xf32> to vector<16x128xf32>
    %300 = vector.extract_strided_slice %297 {offsets = [16, 0], sizes = [16, 128], strides = [1, 1]} : vector<160x128xf32> to vector<16x128xf32>
    %301 = arith.maximumf %298, %300 : vector<16x128xf32>
    %302 = arith.minimumf %299, %300 : vector<16x128xf32>
    %303 = vector.extract_strided_slice %297 {offsets = [32, 0], sizes = [16, 128], strides = [1, 1]} : vector<160x128xf32> to vector<16x128xf32>
    %304 = arith.maximumf %301, %303 : vector<16x128xf32>
    %305 = arith.minimumf %302, %303 : vector<16x128xf32>
    %306 = vector.extract_strided_slice %297 {offsets = [48, 0], sizes = [16, 128], strides = [1, 1]} : vector<160x128xf32> to vector<16x128xf32>
    %307 = arith.maximumf %304, %306 : vector<16x128xf32>
    %308 = arith.minimumf %305, %306 : vector<16x128xf32>
    %309 = vector.extract_strided_slice %297 {offsets = [64, 0], sizes = [16, 128], strides = [1, 1]} : vector<160x128xf32> to vector<16x128xf32>
    %310 = arith.maximumf %307, %309 : vector<16x128xf32>
    %311 = arith.minimumf %308, %309 : vector<16x128xf32>
    %312 = vector.extract_strided_slice %297 {offsets = [80, 0], sizes = [16, 128], strides = [1, 1]} : vector<160x128xf32> to vector<16x128xf32>
    %313 = arith.maximumf %310, %312 : vector<16x128xf32>
    %314 = arith.minimumf %311, %312 : vector<16x128xf32>
    %315 = vector.extract_strided_slice %297 {offsets = [96, 0], sizes = [16, 128], strides = [1, 1]} : vector<160x128xf32> to vector<16x128xf32>
    %316 = arith.maximumf %313, %315 : vector<16x128xf32>
    %317 = arith.minimumf %314, %315 : vector<16x128xf32>
    %318 = vector.extract_strided_slice %297 {offsets = [112, 0], sizes = [16, 128], strides = [1, 1]} : vector<160x128xf32> to vector<16x128xf32>
    %319 = arith.maximumf %316, %318 : vector<16x128xf32>
    %320 = arith.minimumf %317, %318 : vector<16x128xf32>
    %321 = vector.extract_strided_slice %297 {offsets = [128, 0], sizes = [16, 128], strides = [1, 1]} : vector<160x128xf32> to vector<16x128xf32>
    %322 = arith.maximumf %319, %321 : vector<16x128xf32>
    %323 = arith.minimumf %320, %321 : vector<16x128xf32>
    %324 = vector.extract_strided_slice %297 {offsets = [144, 0], sizes = [16, 128], strides = [1, 1]} : vector<160x128xf32> to vector<16x128xf32>
    %325 = arith.maximumf %322, %324 : vector<16x128xf32>
    %326 = arith.minimumf %323, %324 : vector<16x128xf32>
    %327 = arith.maximumf %294, %325 : vector<16x128xf32>
    %328 = arith.minimumf %295, %326 : vector<16x128xf32>
    %329 = tpu.concatenate %327, %328 in 0 : vector<16x128xf32>, vector<16x128xf32> -> vector<32x128xf32>
    %c0_21 = arith.constant 0 : index
    %c0_22 = arith.constant 0 : index
    %330 = vector.load %arg3[%c0_21, %c0_22] : memref<32x1xf32, #tpu.memory_space<vmem>>, vector<32x1xf32>
    %331 = vector.broadcast %330 : vector<32x1xf32> to vector<32x128xf32>
    %332 = arith.addf %329, %331 : vector<32x128xf32>
    %c0_23 = arith.constant 0 : index
    %c0_24 = arith.constant 0 : index
    %333 = vector.load %arg4[%c0_23, %c0_24] : memref<64x32xf32, #tpu.memory_space<vmem>>, vector<64x32xf32>
    %cst_25 = arith.constant dense<0.000000e+00> : vector<64x128xf32>
    %334 = tpu.matmul %333, %332, %cst_25 {dimension_numbers = #tpu.dot_dimension_numbers<[1], [0], [0], [1], [0, 0, 1, 1], [], []>} : vector<64x32xf32>, vector<32x128xf32>, vector<64x128xf32> -> vector<64x128xf32>
    %c0_26 = arith.constant 0 : index
    %c0_27 = arith.constant 0 : index
    %335 = vector.load %arg5[%c0_26, %c0_27] : memref<64x1xf32, #tpu.memory_space<vmem>>, vector<64x1xf32>
    %336 = vector.broadcast %335 : vector<64x1xf32> to vector<64x128xf32>
    %337 = arith.addf %334, %336 : vector<64x128xf32>
    %cst_28 = arith.constant 0.000000e+00 : f32
    %338 = vector.broadcast %cst_28 : f32 to vector<64x128xf32>
    %339 = arith.maximumf %337, %338 : vector<64x128xf32>
    %c0_29 = arith.constant 0 : index
    %c0_30 = arith.constant 0 : index
    %340 = vector.load %arg6[%c0_29, %c0_30] : memref<64x64xf32, #tpu.memory_space<vmem>>, vector<64x64xf32>
    %cst_31 = arith.constant dense<0.000000e+00> : vector<64x128xf32>
    %341 = tpu.matmul %340, %339, %cst_31 {dimension_numbers = #tpu.dot_dimension_numbers<[1], [0], [0], [1], [0, 0, 1, 1], [], []>} : vector<64x64xf32>, vector<64x128xf32>, vector<64x128xf32> -> vector<64x128xf32>
    %c0_32 = arith.constant 0 : index
    %c0_33 = arith.constant 0 : index
    %342 = vector.load %arg7[%c0_32, %c0_33] : memref<64x1xf32, #tpu.memory_space<vmem>>, vector<64x1xf32>
    %343 = vector.broadcast %342 : vector<64x1xf32> to vector<64x128xf32>
    %344 = arith.addf %341, %343 : vector<64x128xf32>
    %cst_34 = arith.constant 0.000000e+00 : f32
    %345 = vector.broadcast %cst_34 : f32 to vector<64x128xf32>
    %346 = arith.maximumf %344, %345 : vector<64x128xf32>
    %c0_35 = arith.constant 0 : index
    %c0_36 = arith.constant 0 : index
    %347 = vector.load %arg8[%c0_35, %c0_36] : memref<1x64xf32, #tpu.memory_space<vmem>>, vector<1x64xf32>
    %cst_37 = arith.constant dense<0.000000e+00> : vector<1x128xf32>
    %348 = tpu.matmul %347, %346, %cst_37 {dimension_numbers = #tpu.dot_dimension_numbers<[1], [0], [0], [1], [0, 0, 1, 1], [], []>} : vector<1x64xf32>, vector<64x128xf32>, vector<1x128xf32> -> vector<1x128xf32>
    %c0_38 = arith.constant 0 : index
    %c0_39 = arith.constant 0 : index
    %349 = vector.load %arg9[%c0_38, %c0_39] : memref<1x1xf32, #tpu.memory_space<vmem>>, vector<1x1xf32>
    %350 = vector.broadcast %349 : vector<1x1xf32> to vector<1x128xf32>
    %351 = arith.addf %348, %350 : vector<1x128xf32>
    %c0_40 = arith.constant 0 : index
    %c0_41 = arith.constant 0 : index
    %352 = vector.load %arg10[%c0_40, %c0_41] : memref<1x128xf32, #tpu.memory_space<vmem>>, vector<1x128xf32>
    tpu.vector_store %arg10[%c0_40, %c0_41], %351 {strides = array<i32>} : memref<1x128xf32, #tpu.memory_space<vmem>>, vector<1x128xf32>,
    return
  }
  func.func @transform_0(%arg0: i32) -> (i32, i32) {
    %c0_i32 = arith.constant 0 : i32
    %c0_i32_0 = arith.constant 0 : i32
    return %c0_i32, %arg0 : i32, i32
  }
  func.func @transform_1(%arg0: i32) -> (i32, i32) {
    %c0_i32 = arith.constant 0 : i32
    %c0_i32_0 = arith.constant 0 : i32
    %c0_i32_1 = arith.constant 0 : i32
    return %c0_i32, %c0_i32_0 : i32, i32
  }
  func.func @transform_2(%arg0: i32) -> (i32, i32) {
    %c0_i32 = arith.constant 0 : i32
    %c0_i32_0 = arith.constant 0 : i32
    %c0_i32_1 = arith.constant 0 : i32
    return %c0_i32, %c0_i32_0 : i32, i32
  }
  func.func @transform_3(%arg0: i32) -> (i32, i32) {
    %c0_i32 = arith.constant 0 : i32
    %c0_i32_0 = arith.constant 0 : i32
    %c0_i32_1 = arith.constant 0 : i32
    return %c0_i32, %c0_i32_0 : i32, i32
  }
  func.func @transform_4(%arg0: i32) -> (i32, i32) {
    %c0_i32 = arith.constant 0 : i32
    %c0_i32_0 = arith.constant 0 : i32
    %c0_i32_1 = arith.constant 0 : i32
    return %c0_i32, %c0_i32_0 : i32, i32
  }
  func.func @transform_5(%arg0: i32) -> (i32, i32) {
    %c0_i32 = arith.constant 0 : i32
    %c0_i32_0 = arith.constant 0 : i32
    %c0_i32_1 = arith.constant 0 : i32
    return %c0_i32, %c0_i32_0 : i32, i32
  }
  func.func @transform_6(%arg0: i32) -> (i32, i32) {
    %c0_i32 = arith.constant 0 : i32
    %c0_i32_0 = arith.constant 0 : i32
    %c0_i32_1 = arith.constant 0 : i32
    return %c0_i32, %c0_i32_0 : i32, i32
  }
  func.func @transform_7(%arg0: i32) -> (i32, i32) {
    %c0_i32 = arith.constant 0 : i32
    %c0_i32_0 = arith.constant 0 : i32
    %c0_i32_1 = arith.constant 0 : i32
    return %c0_i32, %c0_i32_0 : i32, i32
  }
  func.func @transform_8(%arg0: i32) -> (i32, i32) {
    %c0_i32 = arith.constant 0 : i32
    %c0_i32_0 = arith.constant 0 : i32
    %c0_i32_1 = arith.constant 0 : i32
    return %c0_i32, %c0_i32_0 : i32, i32
  }
  func.func @transform_9(%arg0: i32) -> (i32, i32) {
    %c0_i32 = arith.constant 0 : i32
    %c0_i32_0 = arith.constant 0 : i32
    return %c0_i32, %arg0 : i32, i32
  }
}

</mosaic_0001>

<llo_original>
// kernel: tpu_custom_call.1
$region0: #{tpu_custom_call.1}
  #allocation0 [shape = 'u32[]', space=smem, size = 0x4, offset = 0x4, fixed_abs, tag = 'smem constant byte address 0x4 - core index']
  #allocation1 [shape = 'u32[144,128]{1,0:T(1,128)}', space=vmem, size = 0x12000, scoped, tag = 'internal scratch']
  #allocation2 [shape = 'f32[1,1]{1,0:T(1,128)S(1)}', space=vmem, size = 0x200, scoped, tag = 'scoped memory for tpu_custom_call.1']
  %s0 = inlined_call_operand.vmem [shape: f32[256,128], index: 0, kind: input, shape index: {}]
  %s1 = inlined_call_operand.hbm [shape: f32[160,112], index: 1, kind: input, shape index: {}]
  %s2 = inlined_call_operand.vmem [shape: f32[32,1], index: 2, kind: input, shape index: {}]
  %s3 = inlined_call_operand.vmem [shape: f32[64,32], index: 3, kind: input, shape index: {}]
  %s4 = inlined_call_operand.vmem [shape: f32[64,1], index: 4, kind: input, shape index: {}]
  %s5 = inlined_call_operand.hbm [shape: f32[64,64], index: 5, kind: input, shape index: {}]
  %s6 = inlined_call_operand.vmem [shape: f32[64,1], index: 6, kind: input, shape index: {}]
  %s7 = inlined_call_operand.vmem [shape: f32[1,64], index: 7, kind: input, shape index: {}]
  %s8 = inlined_call_operand.<no memory space> [shape: f32[1,1], index: 8, kind: input, shape index: {}]
  %s9 = inlined_call_operand.hbm [shape: f32[1,128], index: 9, kind: output, shape index: {}]
  %s10 = sld [smem:[#allocation0]]
  $region54: #{tpu_custom_call.1} parent=0
    _
  %s12 = ssub.s32 1, %s10
  %s13 = scalar_select 0, %s12, %s10
  %v14 = vstv %s8
  %15 = vst [vmem:[#allocation2] sm:$0x1] %v14
  $region1: #{tpu_custom_call.1} parent=0
    #allocation3 [shape = 'u8[81920]{0}', space=vmem, size = 0x14000, scoped, tag = 'input window, operand 1, single buffered']
    #allocation4 [shape = 's32[1]{0}', space=sflag, size = 0x4, scoped, tag = 'scoped memory for tpu_custom_call.1']
    #allocation5 [shape = 's32[1]{0}', space=sflag, size = 0x4, scoped, tag = 'scoped memory for tpu_custom_call.1']
    #allocation6 [shape = 'u8[32768]{0}', space=vmem, size = 0x8000, scoped, tag = 'input window, operand 5, single buffered']
    #allocation7 [shape = 's32[1]{0}', space=sflag, size = 0x4, scoped, tag = 'scoped memory for tpu_custom_call.1']
    #allocation8 [shape = 'u8[512]{0}', space=vmem, size = 0x400, scoped, tag = 'output window, operand 0, single buffered']
    %16 = vsyncpa [#allocation4], 0
    %17 = vsyncpa [#allocation7], 0
    %18 = vsyncpa [#allocation5], 0
    // Predicated region
    $region2: #{tpu_custom_call.1} parent=1 // pred_check
      _
    $region3: #{tpu_custom_call.1} parent=1 // pred_check_branch
      %20 = sbr.rel (0) target = $region5
    $region4: #{tpu_custom_call.1} parent=1 // pred_region
      _
    $region5: #{tpu_custom_call.1} parent=1 // pred_fallthru
      _
    // Predicated region
    $region6: #{tpu_custom_call.1} parent=1 // pred_check
      _
    $region7: #{tpu_custom_call.1} parent=1 // pred_check_branch
      %22 = sbr.rel (0) target = $region9
    $region8: #{tpu_custom_call.1} parent=1 // pred_region
      %s24 = ssub.s32 2560, 2560
      %25 = vsyncadd [#allocation4], %s24
      %s26 = sshll.u32 [#allocation3], 4
      %s27 = int_to_ptr.vmem [resolvable:$true] %s26
      %32 = dma.hbm_to_vmem [thread:$0]  %s1, 2560, %s27, [#allocation4], 128, 128, 8
    $region9: #{tpu_custom_call.1} parent=1 // pred_fallthru
      _
    // Predicated region
    $region10: #{tpu_custom_call.1} parent=1 // pred_check
      _
    $region11: #{tpu_custom_call.1} parent=1 // pred_check_branch
      %34 = sbr.rel (0) target = $region13
    $region12: #{tpu_custom_call.1} parent=1 // pred_region
      _
    $region13: #{tpu_custom_call.1} parent=1 // pred_fallthru
      _
    // Predicated region
    $region14: #{tpu_custom_call.1} parent=1 // pred_check
      _
    $region15: #{tpu_custom_call.1} parent=1 // pred_check_branch
      %36 = sbr.rel (0) target = $region17
    $region16: #{tpu_custom_call.1} parent=1 // pred_region
      _
    $region17: #{tpu_custom_call.1} parent=1 // pred_fallthru
      _
    // Predicated region
    $region18: #{tpu_custom_call.1} parent=1 // pred_check
      _
    $region19: #{tpu_custom_call.1} parent=1 // pred_check_branch
      %38 = sbr.rel (0) target = $region21
    $region20: #{tpu_custom_call.1} parent=1 // pred_region
      _
    $region21: #{tpu_custom_call.1} parent=1 // pred_fallthru
      _
    // Predicated region
    $region22: #{tpu_custom_call.1} parent=1 // pred_check
      _
    $region23: #{tpu_custom_call.1} parent=1 // pred_check_branch
      %40 = sbr.rel (0) target = $region25
    $region24: #{tpu_custom_call.1} parent=1 // pred_region
      %s42 = ssub.s32 1024, 1024
      %43 = vsyncadd [#allocation7], %s42
      %s44 = sshll.u32 [#allocation6], 4
      %s45 = int_to_ptr.vmem [resolvable:$true] %s44
      %50 = dma.hbm_to_vmem [thread:$0]  %s5, 1024, %s45, [#allocation7], 128, 128, 8
    $region25: #{tpu_custom_call.1} parent=1 // pred_fallthru
      _
    // Predicated region
    $region26: #{tpu_custom_call.1} parent=1 // pred_check
      _
    $region27: #{tpu_custom_call.1} parent=1 // pred_check_branch
      %52 = sbr.rel (0) target = $region29
    $region28: #{tpu_custom_call.1} parent=1 // pred_region
      _
    $region29: #{tpu_custom_call.1} parent=1 // pred_fallthru
      _
    // Predicated region
    $region30: #{tpu_custom_call.1} parent=1 // pred_check
      _
    $region31: #{tpu_custom_call.1} parent=1 // pred_check_branch
      %54 = sbr.rel (0) target = $region33
    $region32: #{tpu_custom_call.1} parent=1 // pred_region
      _
    $region33: #{tpu_custom_call.1} parent=1 // pred_fallthru
      _
    // Predicated region
    $region34: #{tpu_custom_call.1} parent=1 // pred_check
      _
    $region35: #{tpu_custom_call.1} parent=1 // pred_check_branch
      %56 = sbr.rel (0) target = $region37
    $region36: #{tpu_custom_call.1} parent=1 // pred_region
      _
    $region37: #{tpu_custom_call.1} parent=1 // pred_fallthru
      _
    // Predicated region
    $region38: #{tpu_custom_call.1} parent=1 // pred_check
      _
    $region39: #{tpu_custom_call.1} parent=1 // pred_check_branch
      %58 = sbr.rel (0) target = $region41
    $region40: #{tpu_custom_call.1} parent=1 // pred_region
      %59 = dma.done [#allocation4], 2560
    $region41: #{tpu_custom_call.1} parent=1 // pred_fallthru
      _
    // Predicated region
    $region42: #{tpu_custom_call.1} parent=1 // pred_check
      _
    $region43: #{tpu_custom_call.1} parent=1 // pred_check_branch
      %61 = sbr.rel (0) target = $region45
    $region44: #{tpu_custom_call.1} parent=1 // pred_region
      %62 = dma.done [#allocation7], 1024
    $region45: #{tpu_custom_call.1} parent=1 // pred_fallthru
      _
    %v63 = vld [vmem:[#allocation3] sm:$0xff]
    %v64 = vld [vmem:[#allocation3 + $0x8] sm:$0xff]
    %v65 = vld [vmem:[#allocation3 + $0x10] sm:$0xff]
    %v66 = vld [vmem:[#allocation3 + $0x18] sm:$0xff]
    %v67 = vld [vmem:[#allocation3 + $0x20] sm:$0xff]
    %v68 = vld [vmem:[#allocation3 + $0x28] sm:$0xff]
    %v69 = vld [vmem:[#allocation3 + $0x30] sm:$0xff]
    %v70 = vld [vmem:[#allocation3 + $0x38] sm:$0xff]
    %v71 = vld [vmem:[#allocation3 + $0x40] sm:$0xff]
    %v72 = vld [vmem:[#allocation3 + $0x48] sm:$0xff]
    %v73 = vld [vmem:[#allocation3 + $0x50] sm:$0xff]
    %v74 = vld [vmem:[#allocation3 + $0x58] sm:$0xff]
    %v75 = vld [vmem:[#allocation3 + $0x60] sm:$0xff]
    %v76 = vld [vmem:[#allocation3 + $0x68] sm:$0xff]
    %v77 = vld [vmem:[#allocation3 + $0x70] sm:$0xff]
    %v78 = vld [vmem:[#allocation3 + $0x78] sm:$0xff]
    %v79 = vld [vmem:[#allocation3 + $0x80] sm:$0xff]
    %v80 = vld [vmem:[#allocation3 + $0x88] sm:$0xff]
    %v81 = vld [vmem:[#allocation3 + $0x90] sm:$0xff]
    %v82 = vld [vmem:[#allocation3 + $0x98] sm:$0xff]
    %v83 = vld [vmem:[%s0] sm:$0xff]
    %v84 = vld [vmem:[%s0 + $0x8] sm:$0xff]
    %v85 = vld [vmem:[%s0 + $0x10] sm:$0xff]
    %v86 = vld [vmem:[%s0 + $0x18] sm:$0xff]
    %v87 = vld [vmem:[%s0 + $0x20] sm:$0xff]
    %v88 = vld [vmem:[%s0 + $0x28] sm:$0xff]
    %v89 = vld [vmem:[%s0 + $0x30] sm:$0xff]
    %v90 = vld [vmem:[%s0 + $0x38] sm:$0xff]
    %v91 = vld [vmem:[%s0 + $0x40] sm:$0xff]
    %v92 = vld [vmem:[%s0 + $0x48] sm:$0xff]
    %v93 = vld [vmem:[%s0 + $0x50] sm:$0xff]
    %v94 = vld [vmem:[%s0 + $0x58] sm:$0xff]
    %v95 = vld [vmem:[%s0 + $0x60] sm:$0xff]
    %v96 = vld [vmem:[%s0 + $0x68] sm:$0xff]
    %vm97 = vcmask 916480
    %v99 = vsel %vm97, %v63, 0
    %v102 = vsel %vm97, %v64, 0
    %v105 = vsel %vm97, %v65, 0
    %v108 = vsel %vm97, %v66, 0
    %v111 = vsel %vm97, %v67, 0
    %v114 = vsel %vm97, %v68, 0
    %v117 = vsel %vm97, %v69, 0
    %v120 = vsel %vm97, %v70, 0
    %v123 = vsel %vm97, %v71, 0
    %v126 = vsel %vm97, %v72, 0
    %v129 = vsel %vm97, %v73, 0
    %v132 = vsel %vm97, %v74, 0
    %v135 = vsel %vm97, %v75, 0
    %v138 = vsel %vm97, %v76, 0
    %v141 = vsel %vm97, %v77, 0
    %v144 = vsel %vm97, %v78, 0
    %v147 = vsel %vm97, %v79, 0
    %v150 = vsel %vm97, %v80, 0
    %v153 = vsel %vm97, %v81, 0
    %v156 = vsel %vm97, %v82, 0
    %158 = vmatprep.subr.mxu0 0.0
    %159 = vmatpush1.msra.mxu0 %v83
    %160 = vmatprep.subr.mxu0 0.0
    %161 = vmatpush1.msra.mxu0 %v84
    %162 = vmatprep.subr.mxu0 0.0
    %163 = vmatpush1.msra.mxu0 %v85
    %164 = vmatprep.subr.mxu0 0.0
    %165 = vmatpush1.msra.mxu0 %v86
    %166 = vmatprep.subr.mxu0 0.0
    %167 = vmatpush1.msra.mxu0 %v87
    %168 = vmatprep.subr.mxu0 0.0
    %169 = vmatpush1.msra.mxu0 %v88
    %170 = vmatprep.subr.mxu0 0.0
    %171 = vmatpush1.msra.mxu0 %v89
    %172 = vmatprep.subr.mxu0 0.0
    %173 = vmatpush1.msra.mxu0 %v90
    %174 = vmatprep.subr.mxu0 0.0
    %175 = vmatpush1.msra.mxu0 %v91
    %176 = vmatprep.subr.mxu0 0.0
    %177 = vmatpush1.msra.mxu0 %v92
    %178 = vmatprep.subr.mxu0 0.0
    %179 = vmatpush1.msra.mxu0 %v93
    %180 = vmatprep.subr.mxu0 0.0
    %181 = vmatpush1.msra.mxu0 %v94
    %182 = vmatprep.subr.mxu0 0.0
    %183 = vmatpush1.msra.mxu0 %v95
    %184 = vmatprep.subr.mxu0 0.0
    %185 = vmatpush1.msra.mxu0 %v96
    %186 = vmatprep.subr.mxu0 0.0
    %187 = vmatpush1.msra.mxu0 0.0
    %188 = vmatprep.subr.mxu0 0.0
    %189 = vmatpush1.msra.mxu0 0.0
    %190 = vmatprep.subr.mxu0 0.0
    %191 = vmatpush1.msra.mxu0 0.0
    %192 = vmatprep.subr.mxu0 0.0
    %193 = vmatpush1.msra.mxu0 0.0
    %194 = vmatprep.subr.mxu0 0.0
    %195 = vmatpush1.msra.mxu0 0.0
    %196 = vmatprep.subr.mxu0 0.0
    %197 = vmatpush1.msra.mxu0 0.0
    %198 = vmatprep.subr.mxu0 0.0
    %199 = vmatpush1.msra.mxu0 0.0
    %200 = vmatprep.subr.mxu0 0.0
    %201 = vmatpush1.msra.mxu0 0.0
    %202 = vmatprep.subr.mxu0 0.0
    %203 = vmatpush1.msra.mxu0 0.0
    %204 = vmatprep.subr.mxu0 0.0
    %205 = vmatpush1.msra.mxu0 0.0
    %206 = vmatprep.subr.mxu0 0.0
    %207 = vmatpush1.msra.mxu0 0.0
    %208 = vmatprep.subr.mxu0 0.0
    %209 = vmatpush1.msra.mxu0 0.0
    %210 = vmatprep.subr.mxu0 0.0
    %211 = vmatpush1.msra.mxu0 0.0
    %212 = vmatprep.subr.mxu0 0.0
    %213 = vmatpush1.msra.mxu0 0.0
    %214 = vmatprep.subr.mxu0 0.0
    %215 = vmatpush1.msra.mxu0 0.0
    %216 = vmatprep.subr.mxu0 0.0
    %217 = vmatpush1.msra.mxu0 0.0
    %218 = vmatprep.subr.mxu0 0.0
    %219 = vmatpush1.msra.mxu0 0.0
    %220 = vmatprep.subr.mxu0 0.0
    %221 = vmatpush1.msra.mxu0 0.0
    %222 = vmatprep.mubr.f32.mxu0 0.0
    %223 = vmatmul.mubr.f32.gmra.mrb[0].mxu0 %v99
    %v224 = vpop.f32.mrb[0].mxu0
    %v225 = vadd.f32 0.0, %v224
    %v226 = vpop.f32.mrb[0].mxu0
    %227 = vmatprep.mubr.f32.mxu0 0.0
    %228 = vmatmul.mubr.f32.gmra.mrb[0].mxu0 %v102
    %v229 = vpop.f32.mrb[0].mxu0
    %v230 = vadd.f32 0.0, %v229
    %v231 = vpop.f32.mrb[0].mxu0
    %232 = vmatprep.mubr.f32.mxu0 0.0
    %233 = vmatmul.mubr.f32.gmra.mrb[0].mxu0 %v105
    %v234 = vpop.f32.mrb[0].mxu0
    %v235 = vadd.f32 0.0, %v234
    %v236 = vpop.f32.mrb[0].mxu0
    %237 = vmatprep.mubr.f32.mxu0 0.0
    %238 = vmatmul.mubr.f32.gmra.mrb[0].mxu0 %v108
    %v239 = vpop.f32.mrb[0].mxu0
    %v240 = vadd.f32 0.0, %v239
    %v241 = vpop.f32.mrb[0].mxu0
    %242 = vmatprep.mubr.f32.mxu0 0.0
    %243 = vmatmul.mubr.f32.gmra.mrb[0].mxu0 %v111
    %v244 = vpop.f32.mrb[0].mxu0
    %v245 = vadd.f32 0.0, %v244
    %v246 = vpop.f32.mrb[0].mxu0
    %247 = vmatprep.mubr.f32.mxu0 0.0
    %248 = vmatmul.mubr.f32.gmra.mrb[0].mxu0 %v114
    %v249 = vpop.f32.mrb[0].mxu0
    %v250 = vadd.f32 0.0, %v249
    %v251 = vpop.f32.mrb[0].mxu0
    %252 = vmatprep.mubr.f32.mxu0 0.0
    %253 = vmatmul.mubr.f32.gmra.mrb[0].mxu0 %v117
    %v254 = vpop.f32.mrb[0].mxu0
    %v255 = vadd.f32 0.0, %v254
    %v256 = vpop.f32.mrb[0].mxu0
    %257 = vmatprep.mubr.f32.mxu0 0.0
    %258 = vmatmul.mubr.f32.gmra.mrb[0].mxu0 %v120
    %v259 = vpop.f32.mrb[0].mxu0
    %v260 = vadd.f32 0.0, %v259
    %v261 = vpop.f32.mrb[0].mxu0
    %262 = vmatprep.mubr.f32.mxu0 0.0
    %263 = vmatmul.mubr.f32.gmra.mrb[0].mxu0 %v123
    %v264 = vpop.f32.mrb[0].mxu0
    %v265 = vadd.f32 0.0, %v264
    %v266 = vpop.f32.mrb[0].mxu0
    %267 = vmatprep.mubr.f32.mxu0 0.0
    %268 = vmatmul.mubr.f32.gmra.mrb[0].mxu0 %v126
    %v269 = vpop.f32.mrb[0].mxu0
    %v270 = vadd.f32 0.0, %v269
    %v271 = vpop.f32.mrb[0].mxu0
    %272 = vmatprep.mubr.f32.mxu0 0.0
    %273 = vmatmul.mubr.f32.gmra.mrb[0].mxu0 %v129
    %v274 = vpop.f32.mrb[0].mxu0
    %v275 = vadd.f32 0.0, %v274
    %v276 = vpop.f32.mrb[0].mxu0
    %277 = vmatprep.mubr.f32.mxu0 0.0
    %278 = vmatmul.mubr.f32.gmra.mrb[0].mxu0 %v132
    %v279 = vpop.f32.mrb[0].mxu0
    %v280 = vadd.f32 0.0, %v279
    %v281 = vpop.f32.mrb[0].mxu0
    %282 = vmatprep.mubr.f32.mxu0 0.0
    %283 = vmatmul.mubr.f32.gmra.mrb[0].mxu0 %v135
    %v284 = vpop.f32.mrb[0].mxu0
    %v285 = vadd.f32 0.0, %v284
    %v286 = vpop.f32.mrb[0].mxu0
    %287 = vmatprep.mubr.f32.mxu0 0.0
    %288 = vmatmul.mubr.f32.gmra.mrb[0].mxu0 %v138
    %v289 = vpop.f32.mrb[0].mxu0
    %v290 = vadd.f32 0.0, %v289
    %v291 = vpop.f32.mrb[0].mxu0
    %292 = vmatprep.mubr.f32.mxu0 0.0
    %293 = vmatmul.mubr.f32.gmra.mrb[0].mxu0 %v141
    %v294 = vpop.f32.mrb[0].mxu0
    %v295 = vadd.f32 0.0, %v294
    %v296 = vpop.f32.mrb[0].mxu0
    %297 = vmatprep.mubr.f32.mxu0 0.0
    %298 = vmatmul.mubr.f32.gmra.mrb[0].mxu0 %v144
    %v299 = vpop.f32.mrb[0].mxu0
    %v300 = vadd.f32 0.0, %v299
    %v301 = vpop.f32.mrb[0].mxu0
    %302 = vmatprep.mubr.f32.mxu0 0.0
    %303 = vmatmul.mubr.f32.gmra.mrb[0].mxu0 %v147
    %v304 = vpop.f32.mrb[0].mxu0
    %v305 = vadd.f32 0.0, %v304
    %v306 = vpop.f32.mrb[0].mxu0
    %307 = vmatprep.mubr.f32.mxu0 0.0
    %308 = vmatmul.mubr.f32.gmra.mrb[0].mxu0 %v150
    %v309 = vpop.f32.mrb[0].mxu0
    %v310 = vadd.f32 0.0, %v309
    %v311 = vpop.f32.mrb[0].mxu0
    %312 = vmatprep.mubr.f32.mxu0 0.0
    %313 = vmatmul.mubr.f32.gmra.mrb[0].mxu0 %v153
    %v314 = vpop.f32.mrb[0].mxu0
    %v315 = vadd.f32 0.0, %v314
    %v316 = vpop.f32.mrb[0].mxu0
    %317 = vmatprep.mubr.f32.mxu0 0.0
    %318 = vmatmul.mubr.f32.gmra.mrb[0].mxu0 %v156
    %v319 = vpop.f32.mrb[0].mxu0
    %v320 = vadd.f32 0.0, %v319
    %v321 = vpop.f32.mrb[0].mxu0
    %322 = vdwg.mxu0
    %v323 = vmax.f32 %v225, %v235
    %v324 = vmax.f32 %v230, %v240
    %v325 = vmin.f32 %v225, %v235
    %v326 = vmin.f32 %v230, %v240
    %v327 = vmax.f32 %v323, %v245
    %v328 = vmax.f32 %v324, %v250
    %v329 = vmin.f32 %v325, %v245
    %v330 = vmin.f32 %v326, %v250
    %v331 = vmax.f32 %v327, %v255
    %v332 = vmax.f32 %v328, %v260
    %v333 = vmin.f32 %v329, %v255
    %v334 = vmin.f32 %v330, %v260
    %v335 = vmax.f32 %v331, %v265
    %v336 = vmax.f32 %v332, %v270
    %v337 = vmin.f32 %v333, %v265
    %v338 = vmin.f32 %v334, %v270
    %v339 = vmax.f32 %v335, %v275
    %v340 = vmax.f32 %v336, %v280
    %v341 = vmin.f32 %v337, %v275
    %v342 = vmin.f32 %v338, %v280
    %v343 = vmax.f32 %v339, %v285
    %v344 = vmax.f32 %v340, %v290
    %v345 = vmin.f32 %v341, %v285
    %v346 = vmin.f32 %v342, %v290
    %v347 = vmax.f32 %v343, %v295
    %v348 = vmax.f32 %v344, %v300
    %v349 = vmin.f32 %v345, %v295
    %v350 = vmin.f32 %v346, %v300
    %v351 = vmax.f32 %v347, %v305
    %v352 = vmax.f32 %v348, %v310
    %v353 = vmin.f32 %v349, %v305
    %v354 = vmin.f32 %v350, %v310
    %v355 = vmax.f32 %v351, %v315
    %v356 = vmax.f32 %v352, %v320
    %v357 = vmin.f32 %v353, %v315
    %v358 = vmin.f32 %v354, %v320
    %v359 = vld [vmem:[%s0 + $0x10] sm:$0xff]
    %v360 = vld [vmem:[%s0 + $0x18] sm:$0xff]
    %v361 = vld [vmem:[%s0 + $0x20] sm:$0xff]
    %v362 = vld [vmem:[%s0 + $0x28] sm:$0xff]
    %v363 = vld [vmem:[%s0 + $0x30] sm:$0xff]
    %v364 = vld [vmem:[%s0 + $0x38] sm:$0xff]
    %v365 = vld [vmem:[%s0 + $0x40] sm:$0xff]
    %v366 = vld [vmem:[%s0 + $0x48] sm:$0xff]
    %v367 = vld [vmem:[%s0 + $0x50] sm:$0xff]
    %v368 = vld [vmem:[%s0 + $0x58] sm:$0xff]
    %v369 = vld [vmem:[%s0 + $0x60] sm:$0xff]
    %v370 = vld [vmem:[%s0 + $0x68] sm:$0xff]
    %v371 = vld [vmem:[%s0 + $0x70] sm:$0xff]
    %v372 = vld [vmem:[%s0 + $0x78] sm:$0xff]
    %373 = vmatprep.subr.mxu0 0.0
    %374 = vmatpush1.msra.mxu0 %v359
    %375 = vmatprep.subr.mxu0 0.0
    %376 = vmatpush1.msra.mxu0 %v360
    %377 = vmatprep.subr.mxu0 0.0
    %378 = vmatpush1.msra.mxu0 %v361
    %379 = vmatprep.subr.mxu0 0.0
    %380 = vmatpush1.msra.mxu0 %v362
    %381 = vmatprep.subr.mxu0 0.0
    %382 = vmatpush1.msra.mxu0 %v363
    %383 = vmatprep.subr.mxu0 0.0
    %384 = vmatpush1.msra.mxu0 %v364
    %385 = vmatprep.subr.mxu0 0.0
    %386 = vmatpush1.msra.mxu0 %v365
    %387 = vmatprep.subr.mxu0 0.0
    %388 = vmatpush1.msra.mxu0 %v366
    %389 = vmatprep.subr.mxu0 0.0
    %390 = vmatpush1.msra.mxu0 %v367
    %391 = vmatprep.subr.mxu0 0.0
    %392 = vmatpush1.msra.mxu0 %v368
    %393 = vmatprep.subr.mxu0 0.0
    %394 = vmatpush1.msra.mxu0 %v369
    %395 = vmatprep.subr.mxu0 0.0
    %396 = vmatpush1.msra.mxu0 %v370
    %397 = vmatprep.subr.mxu0 0.0
    %398 = vmatpush1.msra.mxu0 %v371
    %399 = vmatprep.subr.mxu0 0.0
    %400 = vmatpush1.msra.mxu0 %v372
    %401 = vmatprep.subr.mxu0 0.0
    %402 = vmatpush1.msra.mxu0 0.0
    %403 = vmatprep.subr.mxu0 0.0
    %404 = vmatpush1.msra.mxu0 0.0
    %405 = vmatprep.subr.mxu0 0.0
    %406 = vmatpush1.msra.mxu0 0.0
    %407 = vmatprep.subr.mxu0 0.0
    %408 = vmatpush1.msra.mxu0 0.0
    %409 = vmatprep.subr.mxu0 0.0
    %410 = vmatpush1.msra.mxu0 0.0
    %411 = vmatprep.subr.mxu0 0.0
    %412 = vmatpush1.msra.mxu0 0.0
    %413 = vmatprep.subr.mxu0 0.0
    %414 = vmatpush1.msra.mxu0 0.0
    %415 = vmatprep.subr.mxu0 0.0
    %416 = vmatpush1.msra.mxu0 0.0
    %417 = vmatprep.subr.mxu0 0.0
    %418 = vmatpush1.msra.mxu0 0.0
    %419 = vmatprep.subr.mxu0 0.0
    %420 = vmatpush1.msra.mxu0 0.0
    %421 = vmatprep.subr.mxu0 0.0
    %422 = vmatpush1.msra.mxu0 0.0
    %423 = vmatprep.subr.mxu0 0.0
    %424 = vmatpush1.msra.mxu0 0.0
    %425 = vmatprep.subr.mxu0 0.0
    %426 = vmatpush1.msra.mxu0 0.0
    %427 = vmatprep.subr.mxu0 0.0
    %428 = vmatpush1.msra.mxu0 0.0
    %429 = vmatprep.subr.mxu0 0.0
    %430 = vmatpush1.msra.mxu0 0.0
    %431 = vmatprep.subr.mxu0 0.0
    %432 = vmatpush1.msra.mxu0 0.0
    %433 = vmatprep.subr.mxu0 0.0
    %434 = vmatpush1.msra.mxu0 0.0
    %435 = vmatprep.subr.mxu0 0.0
    %436 = vmatpush1.msra.mxu0 0.0
    %437 = vmatprep.mubr.f32.mxu0 0.0
    %438 = vmatmul.mubr.f32.gmra.mrb[0].mxu0 %v99
    %v439 = vpop.f32.mrb[0].mxu0
    %v440 = vadd.f32 0.0, %v439
    %v441 = vpop.f32.mrb[0].mxu0
    %442 = vmatprep.mubr.f32.mxu0 0.0
    %443 = vmatmul.mubr.f32.gmra.mrb[0].mxu0 %v102
    %v444 = vpop.f32.mrb[0].mxu0
    %v445 = vadd.f32 0.0, %v444
    %v446 = vpop.f32.mrb[0].mxu0
    %447 = vmatprep.mubr.f32.mxu0 0.0
    %448 = vmatmul.mubr.f32.gmra.mrb[0].mxu0 %v105
    %v449 = vpop.f32.mrb[0].mxu0
    %v450 = vadd.f32 0.0, %v449
    %v451 = vpop.f32.mrb[0].mxu0
    %452 = vmatprep.mubr.f32.mxu0 0.0
    %453 = vmatmul.mubr.f32.gmra.mrb[0].mxu0 %v108
    %v454 = vpop.f32.mrb[0].mxu0
    %v455 = vadd.f32 0.0, %v454
    %v456 = vpop.f32.mrb[0].mxu0
    %457 = vmatprep.mubr.f32.mxu0 0.0
    %458 = vmatmul.mubr.f32.gmra.mrb[0].mxu0 %v111
    %v459 = vpop.f32.mrb[0].mxu0
    %v460 = vadd.f32 0.0, %v459
    %v461 = vpop.f32.mrb[0].mxu0
    %462 = vmatprep.mubr.f32.mxu0 0.0
    %463 = vmatmul.mubr.f32.gmra.mrb[0].mxu0 %v114
    %v464 = vpop.f32.mrb[0].mxu0
    %v465 = vadd.f32 0.0, %v464
    %v466 = vpop.f32.mrb[0].mxu0
    %467 = vmatprep.mubr.f32.mxu0 0.0
    %468 = vmatmul.mubr.f32.gmra.mrb[0].mxu0 %v117
    %v469 = vpop.f32.mrb[0].mxu0
    %v470 = vadd.f32 0.0, %v469
    %v471 = vpop.f32.mrb[0].mxu0
    %472 = vmatprep.mubr.f32.mxu0 0.0
    %473 = vmatmul.mubr.f32.gmra.mrb[0].mxu0 %v120
    %v474 = vpop.f32.mrb[0].mxu0
    %v475 = vadd.f32 0.0, %v474
    %v476 = vpop.f32.mrb[0].mxu0
    %477 = vmatprep.mubr.f32.mxu0 0.0
    %478 = vmatmul.mubr.f32.gmra.mrb[0].mxu0 %v123
    %v479 = vpop.f32.mrb[0].mxu0
    %v480 = vadd.f32 0.0, %v479
    %v481 = vpop.f32.mrb[0].mxu0
    %482 = vmatprep.mubr.f32.mxu0 0.0
    %483 = vmatmul.mubr.f32.gmra.mrb[0].mxu0 %v126
    %v484 = vpop.f32.mrb[0].mxu0
    %v485 = vadd.f32 0.0, %v484
    %v486 = vpop.f32.mrb[0].mxu0
    %487 = vmatprep.mubr.f32.mxu0 0.0
    %488 = vmatmul.mubr.f32.gmra.mrb[0].mxu0 %v129
    %v489 = vpop.f32.mrb[0].mxu0
    %v490 = vadd.f32 0.0, %v489
    %v491 = vpop.f32.mrb[0].mxu0
    %492 = vmatprep.mubr.f32.mxu0 0.0
    %493 = vmatmul.mubr.f32.gmra.mrb[0].mxu0 %v132
    %v494 = vpop.f32.mrb[0].mxu0
    %v495 = vadd.f32 0.0, %v494
    %v496 = vpop.f32.mrb[0].mxu0
    %497 = vmatprep.mubr.f32.mxu0 0.0
    %498 = vmatmul.mubr.f32.gmra.mrb[0].mxu0 %v135
    %v499 = vpop.f32.mrb[0].mxu0
    %v500 = vadd.f32 0.0, %v499
    %v501 = vpop.f32.mrb[0].mxu0
    %502 = vmatprep.mubr.f32.mxu0 0.0
    %503 = vmatmul.mubr.f32.gmra.mrb[0].mxu0 %v138
    %v504 = vpop.f32.mrb[0].mxu0
    %v505 = vadd.f32 0.0, %v504
    %v506 = vpop.f32.mrb[0].mxu0
    %507 = vmatprep.mubr.f32.mxu0 0.0
    %508 = vmatmul.mubr.f32.gmra.mrb[0].mxu0 %v141
    %v509 = vpop.f32.mrb[0].mxu0
    %v510 = vadd.f32 0.0, %v509
    %v511 = vpop.f32.mrb[0].mxu0
    %512 = vmatprep.mubr.f32.mxu0 0.0
    %513 = vmatmul.mubr.f32.gmra.mrb[0].mxu0 %v144
    %v514 = vpop.f32.mrb[0].mxu0
    %v515 = vadd.f32 0.0, %v514
    %v516 = vpop.f32.mrb[0].mxu0
    %517 = vmatprep.mubr.f32.mxu0 0.0
    %518 = vmatmul.mubr.f32.gmra.mrb[0].mxu0 %v147
    %v519 = vpop.f32.mrb[0].mxu0
    %v520 = vadd.f32 0.0, %v519
    %v521 = vpop.f32.mrb[0].mxu0
    %522 = vmatprep.mubr.f32.mxu0 0.0
    %523 = vmatmul.mubr.f32.gmra.mrb[0].mxu0 %v150
    %v524 = vpop.f32.mrb[0].mxu0
    %v525 = vadd.f32 0.0, %v524
    %v526 = vpop.f32.mrb[0].mxu0
    %527 = vmatprep.mubr.f32.mxu0 0.0
    %528 = vmatmul.mubr.f32.gmra.mrb[0].mxu0 %v153
    %v529 = vpop.f32.mrb[0].mxu0
    %v530 = vadd.f32 0.0, %v529
    %v531 = vpop.f32.mrb[0].mxu0
    %532 = vmatprep.mubr.f32.mxu0 0.0
    %533 = vmatmul.mubr.f32.gmra.mrb[0].mxu0 %v156
    %v534 = vpop.f32.mrb[0].mxu0
    %v535 = vadd.f32 0.0, %v534
    %v536 = vpop.f32.mrb[0].mxu0
    %537 = vdwg.mxu0
    %v538 = vmax.f32 %v440, %v450
    %v539 = vmax.f32 %v445, %v455
    %v540 = vmin.f32 %v440, %v450
    %v541 = vmin.f32 %v445, %v455
    %v542 = vmax.f32 %v538, %v460
    %v543 = vmax.f32 %v539, %v465
    %v544 = vmin.f32 %v540, %v460
    %v545 = vmin.f32 %v541, %v465
    %v546 = vmax.f32 %v542, %v470
    %v547 = vmax.f32 %v543, %v475
    %v548 = vmin.f32 %v544, %v470
    %v549 = vmin.f32 %v545, %v475
    %v550 = vmax.f32 %v546, %v480
    %v551 = vmax.f32 %v547, %v485
    %v552 = vmin.f32 %v548, %v480
    %v553 = vmin.f32 %v549, %v485
    %v554 = vmax.f32 %v550, %v490
    %v555 = vmax.f32 %v551, %v495
    %v556 = vmin.f32 %v552, %v490
    %v557 = vmin.f32 %v553, %v495
    %v558 = vmax.f32 %v554, %v500
    %v559 = vmax.f32 %v555, %v505
    %v560 = vmin.f32 %v556, %v500
    %v561 = vmin.f32 %v557, %v505
    %v562 = vmax.f32 %v558, %v510
    %v563 = vmax.f32 %v559, %v515
    %v564 = vmin.f32 %v560, %v510
    %v565 = vmin.f32 %v561, %v515
    %v566 = vmax.f32 %v562, %v520
    %v567 = vmax.f32 %v563, %v525
    %v568 = vmin.f32 %v564, %v520
    %v569 = vmin.f32 %v565, %v525
    %v570 = vmax.f32 %v566, %v530
    %v571 = vmax.f32 %v567, %v535
    %v572 = vmin.f32 %v568, %v530
    %v573 = vmin.f32 %v569, %v535
    %v574 = vmax.f32 %v355, %v570
    %v575 = vmax.f32 %v356, %v571
    %v576 = vmin.f32 %v357, %v572
    %v577 = vmin.f32 %v358, %v573
    %v578 = vld [vmem:[%s0 + $0x20] sm:$0xff]
    %v579 = vld [vmem:[%s0 + $0x28] sm:$0xff]
    %v580 = vld [vmem:[%s0 + $0x30] sm:$0xff]
    %v581 = vld [vmem:[%s0 + $0x38] sm:$0xff]
    %v582 = vld [vmem:[%s0 + $0x40] sm:$0xff]
    %v583 = vld [vmem:[%s0 + $0x48] sm:$0xff]
    %v584 = vld [vmem:[%s0 + $0x50] sm:$0xff]
    %v585 = vld [vmem:[%s0 + $0x58] sm:$0xff]
    %v586 = vld [vmem:[%s0 + $0x60] sm:$0xff]
    %v587 = vld [vmem:[%s0 + $0x68] sm:$0xff]
    %v588 = vld [vmem:[%s0 + $0x70] sm:$0xff]
    %v589 = vld [vmem:[%s0 + $0x78] sm:$0xff]
    %v590 = vld [vmem:[%s0 + $0x80] sm:$0xff]
    %v591 = vld [vmem:[%s0 + $0x88] sm:$0xff]
    %592 = vmatprep.subr.mxu0 0.0
    %593 = vmatpush1.msra.mxu0 %v578
    %594 = vmatprep.subr.mxu0 0.0
    %595 = vmatpush1.msra.mxu0 %v579
    %596 = vmatprep.subr.mxu0 0.0
    %597 = vmatpush1.msra.mxu0 %v580
    %598 = vmatprep.subr.mxu0 0.0
    %599 = vmatpush1.msra.mxu0 %v581
    %600 = vmatprep.subr.mxu0 0.0
    %601 = vmatpush1.msra.mxu0 %v582
    %602 = vmatprep.subr.mxu0 0.0
    %603 = vmatpush1.msra.mxu0 %v583
    %604 = vmatprep.subr.mxu0 0.0
    %605 = vmatpush1.msra.mxu0 %v584
    %606 = vmatprep.subr.mxu0 0.0
    %607 = vmatpush1.msra.mxu0 %v585
    %608 = vmatprep.subr.mxu0 0.0
    %609 = vmatpush1.msra.mxu0 %v586
    %610 = vmatprep.subr.mxu0 0.0
    %611 = vmatpush1.msra.mxu0 %v587
    %612 = vmatprep.subr.mxu0 0.0
    %613 = vmatpush1.msra.mxu0 %v588
    %614 = vmatprep.subr.mxu0 0.0
    %615 = vmatpush1.msra.mxu0 %v589
    %616 = vmatprep.subr.mxu0 0.0
    %617 = vmatpush1.msra.mxu0 %v590
    %618 = vmatprep.subr.mxu0 0.0
    %619 = vmatpush1.msra.mxu0 %v591
    %620 = vmatprep.subr.mxu0 0.0
    %621 = vmatpush1.msra.mxu0 0.0
    %622 = vmatprep.subr.mxu0 0.0
    %623 = vmatpush1.msra.mxu0 0.0
    %624 = vmatprep.subr.mxu0 0.0
    %625 = vmatpush1.msra.mxu0 0.0
    %626 = vmatprep.subr.mxu0 0.0
    %627 = vmatpush1.msra.mxu0 0.0
    %628 = vmatprep.subr.mxu0 0.0
    %629 = vmatpush1.msra.mxu0 0.0
    %630 = vmatprep.subr.mxu0 0.0
    %631 = vmatpush1.msra.mxu0 0.0
    %632 = vmatprep.subr.mxu0 0.0
    %633 = vmatpush1.msra.mxu0 0.0
    %634 = vmatprep.subr.mxu0 0.0
    %635 = vmatpush1.msra.mxu0 0.0
    %636 = vmatprep.subr.mxu0 0.0
    %637 = vmatpush1.msra.mxu0 0.0
    %638 = vmatprep.subr.mxu0 0.0
    %639 = vmatpush1.msra.mxu0 0.0
    %640 = vmatprep.subr.mxu0 0.0
    %641 = vmatpush1.msra.mxu0 0.0
    %642 = vmatprep.subr.mxu0 0.0
    %643 = vmatpush1.msra.mxu0 0.0
    %644 = vmatprep.subr.mxu0 0.0
    %645 = vmatpush1.msra.mxu0 0.0
    %646 = vmatprep.subr.mxu0 0.0
    %647 = vmatpush1.msra.mxu0 0.0
    %648 = vmatprep.subr.mxu0 0.0
    %649 = vmatpush1.msra.mxu0 0.0
    %650 = vmatprep.subr.mxu0 0.0
    %651 = vmatpush1.msra.mxu0 0.0
    %652 = vmatprep.subr.mxu0 0.0
    %653 = vmatpush1.msra.mxu0 0.0
    %654 = vmatprep.subr.mxu0 0.0
    %655 = vmatpush1.msra.mxu0 0.0
    %656 = vmatprep.mubr.f32.mxu0 0.0
    %657 = vmatmul.mubr.f32.gmra.mrb[0].mxu0 %v99
    %v658 = vpop.f32.mrb[0].mxu0
    %v659 = vadd.f32 0.0, %v658
    %v660 = vpop.f32.mrb[0].mxu0
    %661 = vmatprep.mubr.f32.mxu0 0.0
    %662 = vmatmul.mubr.f32.gmra.mrb[0].mxu0 %v102
    %v663 = vpop.f32.mrb[0].mxu0
    %v664 = vadd.f32 0.0, %v663
    %v665 = vpop.f32.mrb[0].mxu0
    %666 = vmatprep.mubr.f32.mxu0 0.0
    %667 = vmatmul.mubr.f32.gmra.mrb[0].mxu0 %v105
    %v668 = vpop.f32.mrb[0].mxu0
    %v669 = vadd.f32 0.0, %v668
    %v670 = vpop.f32.mrb[0].mxu0
    %671 = vmatprep.mubr.f32.mxu0 0.0
    %672 = vmatmul.mubr.f32.gmra.mrb[0].mxu0 %v108
    %v673 = vpop.f32.mrb[0].mxu0
    %v674 = vadd.f32 0.0, %v673
    %v675 = vpop.f32.mrb[0].mxu0
    %676 = vmatprep.mubr.f32.mxu0 0.0
    %677 = vmatmul.mubr.f32.gmra.mrb[0].mxu0 %v111
    %v678 = vpop.f32.mrb[0].mxu0
    %v679 = vadd.f32 0.0, %v678
    %v680 = vpop.f32.mrb[0].mxu0
    %681 = vmatprep.mubr.f32.mxu0 0.0
    %682 = vmatmul.mubr.f32.gmra.mrb[0].mxu0 %v114
    %v683 = vpop.f32.mrb[0].mxu0
    %v684 = vadd.f32 0.0, %v683
    %v685 = vpop.f32.mrb[0].mxu0
    %686 = vmatprep.mubr.f32.mxu0 0.0
    %687 = vmatmul.mubr.f32.gmra.mrb[0].mxu0 %v117
    %v688 = vpop.f32.mrb[0].mxu0
    %v689 = vadd.f32 0.0, %v688
    %v690 = vpop.f32.mrb[0].mxu0
    %691 = vmatprep.mubr.f32.mxu0 0.0
    %692 = vmatmul.mubr.f32.gmra.mrb[0].mxu0 %v120
    %v693 = vpop.f32.mrb[0].mxu0
    %v694 = vadd.f32 0.0, %v693
    %v695 = vpop.f32.mrb[0].mxu0
    %696 = vmatprep.mubr.f32.mxu0 0.0
    %697 = vmatmul.mubr.f32.gmra.mrb[0].mxu0 %v123
    %v698 = vpop.f32.mrb[0].mxu0
    %v699 = vadd.f32 0.0, %v698
    %v700 = vpop.f32.mrb[0].mxu0
    %701 = vmatprep.mubr.f32.mxu0 0.0
    %702 = vmatmul.mubr.f32.gmra.mrb[0].mxu0 %v126
    %v703 = vpop.f32.mrb[0].mxu0
    %v704 = vadd.f32 0.0, %v703
    %v705 = vpop.f32.mrb[0].mxu0
    %706 = vmatprep.mubr.f32.mxu0 0.0
    %707 = vmatmul.mubr.f32.gmra.mrb[0].mxu0 %v129
    %v708 = vpop.f32.mrb[0].mxu0
    %v709 = vadd.f32 0.0, %v708
    %v710 = vpop.f32.mrb[0].mxu0
    %711 = vmatprep.mubr.f32.mxu0 0.0
    %712 = vmatmul.mubr.f32.gmra.mrb[0].mxu0 %v132
    %v713 = vpop.f32.mrb[0].mxu0
    %v714 = vadd.f32 0.0, %v713
    %v715 = vpop.f32.mrb[0].mxu0
    %716 = vmatprep.mubr.f32.mxu0 0.0
    %717 = vmatmul.mubr.f32.gmra.mrb[0].mxu0 %v135
    %v718 = vpop.f32.mrb[0].mxu0
    %v719 = vadd.f32 0.0, %v718
    %v720 = vpop.f32.mrb[0].mxu0
    %721 = vmatprep.mubr.f32.mxu0 0.0
    %722 = vmatmul.mubr.f32.gmra.mrb[0].mxu0 %v138
    %v723 = vpop.f32.mrb[0].mxu0
    %v724 = vadd.f32 0.0, %v723
    %v725 = vpop.f32.mrb[0].mxu0
    %726 = vmatprep.mubr.f32.mxu0 0.0
    %727 = vmatmul.mubr.f32.gmra.mrb[0].mxu0 %v141
    %v728 = vpop.f32.mrb[0].mxu0
    %v729 = vadd.f32 0.0, %v728
    %v730 = vpop.f32.mrb[0].mxu0
    %731 = vmatprep.mubr.f32.mxu0 0.0
    %732 = vmatmul.mubr.f32.gmra.mrb[0].mxu0 %v144
    %v733 = vpop.f32.mrb[0].mxu0
    %v734 = vadd.f32 0.0, %v733
    %v735 = vpop.f32.mrb[0].mxu0
    %736 = vmatprep.mubr.f32.mxu0 0.0
    %737 = vmatmul.mubr.f32.gmra.mrb[0].mxu0 %v147
    %v738 = vpop.f32.mrb[0].mxu0
    %v739 = vadd.f32 0.0, %v738
    %v740 = vpop.f32.mrb[0].mxu0
    %741 = vmatprep.mubr.f32.mxu0 0.0
    %742 = vmatmul.mubr.f32.gmra.mrb[0].mxu0 %v150
    %v743 = vpop.f32.mrb[0].mxu0
    %v744 = vadd.f32 0.0, %v743
    %v745 = vpop.f32.mrb[0].mxu0
    %746 = vmatprep.mubr.f32.mxu0 0.0
    %747 = vmatmul.mubr.f32.gmra.mrb[0].mxu0 %v153
    %v748 = vpop.f32.mrb[0].mxu0
    %v749 = vadd.f32 0.0, %v748
    %v750 = vpop.f32.mrb[0].mxu0
    %751 = vmatprep.mubr.f32.mxu0 0.0
    %752 = vmatmul.mubr.f32.gmra.mrb[0].mxu0 %v156
    %v753 = vpop.f32.mrb[0].mxu0
    %v754 = vadd.f32 0.0, %v753
    %v755 = vpop.f32.mrb[0].mxu0
    %756 = vdwg.mxu0
    %v757 = vmax.f32 %v659, %v669
    %v758 = vmax.f32 %v664, %v674
    %v759 = vmin.f32 %v659, %v669
    %v760 = vmin.f32 %v664, %v674
    %v761 = vmax.f32 %v757, %v679
    %v762 = vmax.f32 %v758, %v684
    %v763 = vmin.f32 %v759, %v679
    %v764 = vmin.f32 %v760, %v684
    %v765 = vmax.f32 %v761, %v689
    %v766 = vmax.f32 %v762, %v694
    %v767 = vmin.f32 %v763, %v689
    %v768 = vmin.f32 %v764, %v694
    %v769 = vmax.f32 %v765, %v699
    %v770 = vmax.f32 %v766, %v704
    %v771 = vmin.f32 %v767, %v699
    %v772 = vmin.f32 %v768, %v704
    %v773 = vmax.f32 %v769, %v709
    %v774 = vmax.f32 %v770, %v714
    %v775 = vmin.f32 %v771, %v709
    %v776 = vmin.f32 %v772, %v714
    %v777 = vmax.f32 %v773, %v719
    %v778 = vmax.f32 %v774, %v724
    %v779 = vmin.f32 %v775, %v719
    %v780 = vmin.f32 %v776, %v724
    %v781 = vmax.f32 %v777, %v729
    %v782 = vmax.f32 %v778, %v734
    %v783 = vmin.f32 %v779, %v729
    %v784 = vmin.f32 %v780, %v734
    %v785 = vmax.f32 %v781, %v739
    %v786 = vmax.f32 %v782, %v744
    %v787 = vmin.f32 %v783, %v739
    %v788 = vmin.f32 %v784, %v744
    %v789 = vmax.f32 %v785, %v749
    %v790 = vmax.f32 %v786, %v754
    %v791 = vmin.f32 %v787, %v749
    %v792 = vmin.f32 %v788, %v754
    %v793 = vmax.f32 %v574, %v789
    %v794 = vmax.f32 %v575, %v790
    %v795 = vmin.f32 %v576, %v791
    %v796 = vmin.f32 %v577, %v792
    %v797 = vld [vmem:[%s0 + $0x30] sm:$0xff]
    %v798 = vld [vmem:[%s0 + $0x38] sm:$0xff]
    %v799 = vld [vmem:[%s0 + $0x40] sm:$0xff]
    %v800 = vld [vmem:[%s0 + $0x48] sm:$0xff]
    %v801 = vld [vmem:[%s0 + $0x50] sm:$0xff]
    %v802 = vld [vmem:[%s0 + $0x58] sm:$0xff]
    %v803 = vld [vmem:[%s0 + $0x60] sm:$0xff]
    %v804 = vld [vmem:[%s0 + $0x68] sm:$0xff]
    %v805 = vld [vmem:[%s0 + $0x70] sm:$0xff]
    %v806 = vld [vmem:[%s0 + $0x78] sm:$0xff]
    %v807 = vld [vmem:[%s0 + $0x80] sm:$0xff]
    %v808 = vld [vmem:[%s0 + $0x88] sm:$0xff]
    %v809 = vld [vmem:[%s0 + $0x90] sm:$0xff]
    %v810 = vld [vmem:[%s0 + $0x98] sm:$0xff]
    %811 = vmatprep.subr.mxu0 0.0
    %812 = vmatpush1.msra.mxu0 %v797
    %813 = vmatprep.subr.mxu0 0.0
    %814 = vmatpush1.msra.mxu0 %v798
    %815 = vmatprep.subr.mxu0 0.0
    %816 = vmatpush1.msra.mxu0 %v799
    %817 = vmatprep.subr.mxu0 0.0
    %818 = vmatpush1.msra.mxu0 %v800
    %819 = vmatprep.subr.mxu0 0.0
    %820 = vmatpush1.msra.mxu0 %v801
    %821 = vmatprep.subr.mxu0 0.0
    %822 = vmatpush1.msra.mxu0 %v802
    %823 = vmatprep.subr.mxu0 0.0
    %824 = vmatpush1.msra.mxu0 %v803
    %825 = vmatprep.subr.mxu0 0.0
    %826 = vmatpush1.msra.mxu0 %v804
    %827 = vmatprep.subr.mxu0 0.0
    %828 = vmatpush1.msra.mxu0 %v805
    %829 = vmatprep.subr.mxu0 0.0
    %830 = vmatpush1.msra.mxu0 %v806
    %831 = vmatprep.subr.mxu0 0.0
    %832 = vmatpush1.msra.mxu0 %v807
    %833 = vmatprep.subr.mxu0 0.0
    %834 = vmatpush1.msra.mxu0 %v808
    %835 = vmatprep.subr.mxu0 0.0
    %836 = vmatpush1.msra.mxu0 %v809
    %837 = vmatprep.subr.mxu0 0.0
    %838 = vmatpush1.msra.mxu0 %v810
    %839 = vmatprep.subr.mxu0 0.0
    %840 = vmatpush1.msra.mxu0 0.0
    %841 = vmatprep.subr.mxu0 0.0
    %842 = vmatpush1.msra.mxu0 0.0
    %843 = vmatprep.subr.mxu0 0.0
    %844 = vmatpush1.msra.mxu0 0.0
    %845 = vmatprep.subr.mxu0 0.0
    %846 = vmatpush1.msra.mxu0 0.0
    %847 = vmatprep.subr.mxu0 0.0
    %848 = vmatpush1.msra.mxu0 0.0
    %849 = vmatprep.subr.mxu0 0.0
    %850 = vmatpush1.msra.mxu0 0.0
    %851 = vmatprep.subr.mxu0 0.0
    %852 = vmatpush1.msra.mxu0 0.0
    %853 = vmatprep.subr.mxu0 0.0
    %854 = vmatpush1.msra.mxu0 0.0
    %855 = vmatprep.subr.mxu0 0.0
    %856 = vmatpush1.msra.mxu0 0.0
    %857 = vmatprep.subr.mxu0 0.0
    %858 = vmatpush1.msra.mxu0 0.0
    %859 = vmatprep.subr.mxu0 0.0
    %860 = vmatpush1.msra.mxu0 0.0
    %861 = vmatprep.subr.mxu0 0.0
    %862 = vmatpush1.msra.mxu0 0.0
    %863 = vmatprep.subr.mxu0 0.0
    %864 = vmatpush1.msra.mxu0 0.0
    %865 = vmatprep.subr.mxu0 0.0
    %866 = vmatpush1.msra.mxu0 0.0
    %867 = vmatprep.subr.mxu0 0.0
    %868 = vmatpush1.msra.mxu0 0.0
    %869 = vmatprep.subr.mxu0 0.0
    %870 = vmatpush1.msra.mxu0 0.0
    %871 = vmatprep.subr.mxu0 0.0
    %872 = vmatpush1.msra.mxu0 0.0
    %873 = vmatprep.subr.mxu0 0.0
    %874 = vmatpush1.msra.mxu0 0.0
    %875 = vmatprep.mubr.f32.mxu0 0.0
    %876 = vmatmul.mubr.f32.gmra.mrb[0].mxu0 %v99
    %v877 = vpop.f32.mrb[0].mxu0
    %v878 = vadd.f32 0.0, %v877
    %v879 = vpop.f32.mrb[0].mxu0
    %880 = vmatprep.mubr.f32.mxu0 0.0
    %881 = vmatmul.mubr.f32.gmra.mrb[0].mxu0 %v102
    %v882 = vpop.f32.mrb[0].mxu0
    %v883 = vadd.f32 0.0, %v882
    %v884 = vpop.f32.mrb[0].mxu0
    %885 = vmatprep.mubr.f32.mxu0 0.0
    %886 = vmatmul.mubr.f32.gmra.mrb[0].mxu0 %v105
    %v887 = vpop.f32.mrb[0].mxu0
    %v888 = vadd.f32 0.0, %v887
    %v889 = vpop.f32.mrb[0].mxu0
    %890 = vmatprep.mubr.f32.mxu0 0.0
    %891 = vmatmul.mubr.f32.gmra.mrb[0].mxu0 %v108
    %v892 = vpop.f32.mrb[0].mxu0
    %v893 = vadd.f32 0.0, %v892
    %v894 = vpop.f32.mrb[0].mxu0
    %895 = vmatprep.mubr.f32.mxu0 0.0
    %896 = vmatmul.mubr.f32.gmra.mrb[0].mxu0 %v111
    %v897 = vpop.f32.mrb[0].mxu0
    %v898 = vadd.f32 0.0, %v897
    %v899 = vpop.f32.mrb[0].mxu0
    %900 = vmatprep.mubr.f32.mxu0 0.0
    %901 = vmatmul.mubr.f32.gmra.mrb[0].mxu0 %v114
    %v902 = vpop.f32.mrb[0].mxu0
    %v903 = vadd.f32 0.0, %v902
    %v904 = vpop.f32.mrb[0].mxu0
    %905 = vmatprep.mubr.f32.mxu0 0.0
    %906 = vmatmul.mubr.f32.gmra.mrb[0].mxu0 %v117
    %v907 = vpop.f32.mrb[0].mxu0
    %v908 = vadd.f32 0.0, %v907
    %v909 = vpop.f32.mrb[0].mxu0
    %910 = vmatprep.mubr.f32.mxu0 0.0
    %911 = vmatmul.mubr.f32.gmra.mrb[0].mxu0 %v120
    %v912 = vpop.f32.mrb[0].mxu0
    %v913 = vadd.f32 0.0, %v912
    %v914 = vpop.f32.mrb[0].mxu0
    %915 = vmatprep.mubr.f32.mxu0 0.0
    %916 = vmatmul.mubr.f32.gmra.mrb[0].mxu0 %v123
    %v917 = vpop.f32.mrb[0].mxu0
    %v918 = vadd.f32 0.0, %v917
    %v919 = vpop.f32.mrb[0].mxu0
    %920 = vmatprep.mubr.f32.mxu0 0.0
    %921 = vmatmul.mubr.f32.gmra.mrb[0].mxu0 %v126
    %v922 = vpop.f32.mrb[0].mxu0
    %v923 = vadd.f32 0.0, %v922
    %v924 = vpop.f32.mrb[0].mxu0
    %925 = vmatprep.mubr.f32.mxu0 0.0
    %926 = vmatmul.mubr.f32.gmra.mrb[0].mxu0 %v129
    %v927 = vpop.f32.mrb[0].mxu0
    %v928 = vadd.f32 0.0, %v927
    %v929 = vpop.f32.mrb[0].mxu0
    %930 = vmatprep.mubr.f32.mxu0 0.0
    %931 = vmatmul.mubr.f32.gmra.mrb[0].mxu0 %v132
    %v932 = vpop.f32.mrb[0].mxu0
    %v933 = vadd.f32 0.0, %v932
    %v934 = vpop.f32.mrb[0].mxu0
    %935 = vmatprep.mubr.f32.mxu0 0.0
    %936 = vmatmul.mubr.f32.gmra.mrb[0].mxu0 %v135
    %v937 = vpop.f32.mrb[0].mxu0
    %v938 = vadd.f32 0.0, %v937
    %v939 = vpop.f32.mrb[0].mxu0
    %940 = vmatprep.mubr.f32.mxu0 0.0
    %941 = vmatmul.mubr.f32.gmra.mrb[0].mxu0 %v138
    %v942 = vpop.f32.mrb[0].mxu0
    %v943 = vadd.f32 0.0, %v942
    %v944 = vpop.f32.mrb[0].mxu0
    %945 = vmatprep.mubr.f32.mxu0 0.0
    %946 = vmatmul.mubr.f32.gmra.mrb[0].mxu0 %v141
    %v947 = vpop.f32.mrb[0].mxu0
    %v948 = vadd.f32 0.0, %v947
    %v949 = vpop.f32.mrb[0].mxu0
    %950 = vmatprep.mubr.f32.mxu0 0.0
    %951 = vmatmul.mubr.f32.gmra.mrb[0].mxu0 %v144
    %v952 = vpop.f32.mrb[0].mxu0
    %v953 = vadd.f32 0.0, %v952
    %v954 = vpop.f32.mrb[0].mxu0
    %955 = vmatprep.mubr.f32.mxu0 0.0
    %956 = vmatmul.mubr.f32.gmra.mrb[0].mxu0 %v147
    %v957 = vpop.f32.mrb[0].mxu0
    %v958 = vadd.f32 0.0, %v957
    %v959 = vpop.f32.mrb[0].mxu0
    %960 = vmatprep.mubr.f32.mxu0 0.0
    %961 = vmatmul.mubr.f32.gmra.mrb[0].mxu0 %v150
    %v962 = vpop.f32.mrb[0].mxu0
    %v963 = vadd.f32 0.0, %v962
    %v964 = vpop.f32.mrb[0].mxu0
    %965 = vmatprep.mubr.f32.mxu0 0.0
    %966 = vmatmul.mubr.f32.gmra.mrb[0].mxu0 %v153
    %v967 = vpop.f32.mrb[0].mxu0
    %v968 = vadd.f32 0.0, %v967
    %v969 = vpop.f32.mrb[0].mxu0
    %970 = vmatprep.mubr.f32.mxu0 0.0
    %971 = vmatmul.mubr.f32.gmra.mrb[0].mxu0 %v156
    %v972 = vpop.f32.mrb[0].mxu0
    %v973 = vadd.f32 0.0, %v972
    %v974 = vpop.f32.mrb[0].mxu0
    %975 = vdwg.mxu0
    %v976 = vmax.f32 %v878, %v888
    %v977 = vmax.f32 %v883, %v893
    %v978 = vmin.f32 %v878, %v888
    %v979 = vmin.f32 %v883, %v893
    %v980 = vmax.f32 %v976, %v898
    %v981 = vmax.f32 %v977, %v903
    %v982 = vmin.f32 %v978, %v898
    %v983 = vmin.f32 %v979, %v903
    %v984 = vmax.f32 %v980, %v908
    %v985 = vmax.f32 %v981, %v913
    %v986 = vmin.f32 %v982, %v908
    %v987 = vmin.f32 %v983, %v913
    %v988 = vmax.f32 %v984, %v918
    %v989 = vmax.f32 %v985, %v923
    %v990 = vmin.f32 %v986, %v918
    %v991 = vmin.f32 %v987, %v923
    %v992 = vmax.f32 %v988, %v928
    %v993 = vmax.f32 %v989, %v933
    %v994 = vmin.f32 %v990, %v928
    %v995 = vmin.f32 %v991, %v933
    %v996 = vmax.f32 %v992, %v938
    %v997 = vmax.f32 %v993, %v943
    %v998 = vmin.f32 %v994, %v938
    %v999 = vmin.f32 %v995, %v943
    %v1000 = vmax.f32 %v996, %v948
    %v1001 = vmax.f32 %v997, %v953
    %v1002 = vmin.f32 %v998, %v948
    %v1003 = vmin.f32 %v999, %v953
    %v1004 = vmax.f32 %v1000, %v958
    %v1005 = vmax.f32 %v1001, %v963
    %v1006 = vmin.f32 %v1002, %v958
    %v1007 = vmin.f32 %v1003, %v963
    %v1008 = vmax.f32 %v1004, %v968
    %v1009 = vmax.f32 %v1005, %v973
    %v1010 = vmin.f32 %v1006, %v968
    %v1011 = vmin.f32 %v1007, %v973
    %v1012 = vmax.f32 %v793, %v1008
    %v1013 = vmax.f32 %v794, %v1009
    %v1014 = vmin.f32 %v795, %v1010
    %v1015 = vmin.f32 %v796, %v1011
    %v1016 = vld [vmem:[%s0 + $0x40] sm:$0xff]
    %v1017 = vld [vmem:[%s0 + $0x48] sm:$0xff]
    %v1018 = vld [vmem:[%s0 + $0x50] sm:$0xff]
    %v1019 = vld [vmem:[%s0 + $0x58] sm:$0xff]
    %v1020 = vld [vmem:[%s0 + $0x60] sm:$0xff]
    %v1021 = vld [vmem:[%s0 + $0x68] sm:$0xff]
    %v1022 = vld [vmem:[%s0 + $0x70] sm:$0xff]
    %v1023 = vld [vmem:[%s0 + $0x78] sm:$0xff]
    %v1024 = vld [vmem:[%s0 + $0x80] sm:$0xff]
    %v1025 = vld [vmem:[%s0 + $0x88] sm:$0xff]
    %v1026 = vld [vmem:[%s0 + $0x90] sm:$0xff]
    %v1027 = vld [vmem:[%s0 + $0x98] sm:$0xff]
    %v1028 = vld [vmem:[%s0 + $0xa0] sm:$0xff]
    %v1029 = vld [vmem:[%s0 + $0xa8] sm:$0xff]
    %1030 = vmatprep.subr.mxu0 0.0
    %1031 = vmatpush1.msra.mxu0 %v1016
    %1032 = vmatprep.subr.mxu0 0.0
    %1033 = vmatpush1.msra.mxu0 %v1017
    %1034 = vmatprep.subr.mxu0 0.0
    %1035 = vmatpush1.msra.mxu0 %v1018
    %1036 = vmatprep.subr.mxu0 0.0
    %1037 = vmatpush1.msra.mxu0 %v1019
    %1038 = vmatprep.subr.mxu0 0.0
    %1039 = vmatpush1.msra.mxu0 %v1020
    %1040 = vmatprep.subr.mxu0 0.0
    %1041 = vmatpush1.msra.mxu0 %v1021
    %1042 = vmatprep.subr.mxu0 0.0
    %1043 = vmatpush1.msra.mxu0 %v1022
    %1044 = vmatprep.subr.mxu0 0.0
    %1045 = vmatpush1.msra.mxu0 %v1023
    %1046 = vmatprep.subr.mxu0 0.0
    %1047 = vmatpush1.msra.mxu0 %v1024
    %1048 = vmatprep.subr.mxu0 0.0
    %1049 = vmatpush1.msra.mxu0 %v1025
    %1050 = vmatprep.subr.mxu0 0.0
    %1051 = vmatpush1.msra.mxu0 %v1026
    %1052 = vmatprep.subr.mxu0 0.0
    %1053 = vmatpush1.msra.mxu0 %v1027
    %1054 = vmatprep.subr.mxu0 0.0
    %1055 = vmatpush1.msra.mxu0 %v1028
    %1056 = vmatprep.subr.mxu0 0.0
    %1057 = vmatpush1.msra.mxu0 %v1029
    %1058 = vmatprep.subr.mxu0 0.0
    %1059 = vmatpush1.msra.mxu0 0.0
    %1060 = vmatprep.subr.mxu0 0.0
    %1061 = vmatpush1.msra.mxu0 0.0
    %1062 = vmatprep.subr.mxu0 0.0
    %1063 = vmatpush1.msra.mxu0 0.0
    %1064 = vmatprep.subr.mxu0 0.0
    %1065 = vmatpush1.msra.mxu0 0.0
    %1066 = vmatprep.subr.mxu0 0.0
    %1067 = vmatpush1.msra.mxu0 0.0
    %1068 = vmatprep.subr.mxu0 0.0
    %1069 = vmatpush1.msra.mxu0 0.0
    %1070 = vmatprep.subr.mxu0 0.0
    %1071 = vmatpush1.msra.mxu0 0.0
    %1072 = vmatprep.subr.mxu0 0.0
    %1073 = vmatpush1.msra.mxu0 0.0
    %1074 = vmatprep.subr.mxu0 0.0
    %1075 = vmatpush1.msra.mxu0 0.0
    %1076 = vmatprep.subr.mxu0 0.0
    %1077 = vmatpush1.msra.mxu0 0.0
    %1078 = vmatprep.subr.mxu0 0.0
    %1079 = vmatpush1.msra.mxu0 0.0
    %1080 = vmatprep.subr.mxu0 0.0
    %1081 = vmatpush1.msra.mxu0 0.0
    %1082 = vmatprep.subr.mxu0 0.0
    %1083 = vmatpush1.msra.mxu0 0.0
    %1084 = vmatprep.subr.mxu0 0.0
    %1085 = vmatpush1.msra.mxu0 0.0
    %1086 = vmatprep.subr.mxu0 0.0
    %1087 = vmatpush1.msra.mxu0 0.0
    %1088 = vmatprep.subr.mxu0 0.0
    %1089 = vmatpush1.msra.mxu0 0.0
    %1090 = vmatprep.subr.mxu0 0.0
    %1091 = vmatpush1.msra.mxu0 0.0
    %1092 = vmatprep.subr.mxu0 0.0
    %1093 = vmatpush1.msra.mxu0 0.0
    %1094 = vmatprep.mubr.f32.mxu0 0.0
    %1095 = vmatmul.mubr.f32.gmra.mrb[0].mxu0 %v99
    %v1096 = vpop.f32.mrb[0].mxu0
    %v1097 = vadd.f32 0.0, %v1096
    %v1098 = vpop.f32.mrb[0].mxu0
    %1099 = vmatprep.mubr.f32.mxu0 0.0
    %1100 = vmatmul.mubr.f32.gmra.mrb[0].mxu0 %v102
    %v1101 = vpop.f32.mrb[0].mxu0
    %v1102 = vadd.f32 0.0, %v1101
    %v1103 = vpop.f32.mrb[0].mxu0
    %1104 = vmatprep.mubr.f32.mxu0 0.0
    %1105 = vmatmul.mubr.f32.gmra.mrb[0].mxu0 %v105
    %v1106 = vpop.f32.mrb[0].mxu0
    %v1107 = vadd.f32 0.0, %v1106
    %v1108 = vpop.f32.mrb[0].mxu0
    %1109 = vmatprep.mubr.f32.mxu0 0.0
    %1110 = vmatmul.mubr.f32.gmra.mrb[0].mxu0 %v108
    %v1111 = vpop.f32.mrb[0].mxu0
    %v1112 = vadd.f32 0.0, %v1111
    %v1113 = vpop.f32.mrb[0].mxu0
    %1114 = vmatprep.mubr.f32.mxu0 0.0
    %1115 = vmatmul.mubr.f32.gmra.mrb[0].mxu0 %v111
    %v1116 = vpop.f32.mrb[0].mxu0
    %v1117 = vadd.f32 0.0, %v1116
    %v1118 = vpop.f32.mrb[0].mxu0
    %1119 = vmatprep.mubr.f32.mxu0 0.0
    %1120 = vmatmul.mubr.f32.gmra.mrb[0].mxu0 %v114
    %v1121 = vpop.f32.mrb[0].mxu0
    %v1122 = vadd.f32 0.0, %v1121
    %v1123 = vpop.f32.mrb[0].mxu0
    %1124 = vmatprep.mubr.f32.mxu0 0.0
    %1125 = vmatmul.mubr.f32.gmra.mrb[0].mxu0 %v117
    %v1126 = vpop.f32.mrb[0].mxu0
    %v1127 = vadd.f32 0.0, %v1126
    %v1128 = vpop.f32.mrb[0].mxu0
    %1129 = vmatprep.mubr.f32.mxu0 0.0
    %1130 = vmatmul.mubr.f32.gmra.mrb[0].mxu0 %v120
    %v1131 = vpop.f32.mrb[0].mxu0
    %v1132 = vadd.f32 0.0, %v1131
    %v1133 = vpop.f32.mrb[0].mxu0
    %1134 = vmatprep.mubr.f32.mxu0 0.0
    %1135 = vmatmul.mubr.f32.gmra.mrb[0].mxu0 %v123
    %v1136 = vpop.f32.mrb[0].mxu0
    %v1137 = vadd.f32 0.0, %v1136
    %v1138 = vpop.f32.mrb[0].mxu0
    %1139 = vmatprep.mubr.f32.mxu0 0.0
    %1140 = vmatmul.mubr.f32.gmra.mrb[0].mxu0 %v126
    %v1141 = vpop.f32.mrb[0].mxu0
    %v1142 = vadd.f32 0.0, %v1141
    %v1143 = vpop.f32.mrb[0].mxu0
    %1144 = vmatprep.mubr.f32.mxu0 0.0
    %1145 = vmatmul.mubr.f32.gmra.mrb[0].mxu0 %v129
    %v1146 = vpop.f32.mrb[0].mxu0
    %v1147 = vadd.f32 0.0, %v1146
    %v1148 = vpop.f32.mrb[0].mxu0
    %1149 = vmatprep.mubr.f32.mxu0 0.0
    %1150 = vmatmul.mubr.f32.gmra.mrb[0].mxu0 %v132
    %v1151 = vpop.f32.mrb[0].mxu0
    %v1152 = vadd.f32 0.0, %v1151
    %v1153 = vpop.f32.mrb[0].mxu0
    %1154 = vmatprep.mubr.f32.mxu0 0.0
    %1155 = vmatmul.mubr.f32.gmra.mrb[0].mxu0 %v135
    %v1156 = vpop.f32.mrb[0].mxu0
    %v1157 = vadd.f32 0.0, %v1156
    %v1158 = vpop.f32.mrb[0].mxu0
    %1159 = vmatprep.mubr.f32.mxu0 0.0
    %1160 = vmatmul.mubr.f32.gmra.mrb[0].mxu0 %v138
    %v1161 = vpop.f32.mrb[0].mxu0
    %v1162 = vadd.f32 0.0, %v1161
    %v1163 = vpop.f32.mrb[0].mxu0
    %1164 = vmatprep.mubr.f32.mxu0 0.0
    %1165 = vmatmul.mubr.f32.gmra.mrb[0].mxu0 %v141
    %v1166 = vpop.f32.mrb[0].mxu0
    %v1167 = vadd.f32 0.0, %v1166
    %v1168 = vpop.f32.mrb[0].mxu0
    %1169 = vmatprep.mubr.f32.mxu0 0.0
    %1170 = vmatmul.mubr.f32.gmra.mrb[0].mxu0 %v144
    %v1171 = vpop.f32.mrb[0].mxu0
    %v1172 = vadd.f32 0.0, %v1171
    %v1173 = vpop.f32.mrb[0].mxu0
    %1174 = vmatprep.mubr.f32.mxu0 0.0
    %1175 = vmatmul.mubr.f32.gmra.mrb[0].mxu0 %v147
    %v1176 = vpop.f32.mrb[0].mxu0
    %v1177 = vadd.f32 0.0, %v1176
    %v1178 = vpop.f32.mrb[0].mxu0
    %1179 = vmatprep.mubr.f32.mxu0 0.0
    %1180 = vmatmul.mubr.f32.gmra.mrb[0].mxu0 %v150
    %v1181 = vpop.f32.mrb[0].mxu0
    %v1182 = vadd.f32 0.0, %v1181
    %v1183 = vpop.f32.mrb[0].mxu0
    %1184 = vmatprep.mubr.f32.mxu0 0.0
    %1185 = vmatmul.mubr.f32.gmra.mrb[0].mxu0 %v153
    %v1186 = vpop.f32.mrb[0].mxu0
    %v1187 = vadd.f32 0.0, %v1186
    %v1188 = vpop.f32.mrb[0].mxu0
    %1189 = vmatprep.mubr.f32.mxu0 0.0
    %1190 = vmatmul.mubr.f32.gmra.mrb[0].mxu0 %v156
    %v1191 = vpop.f32.mrb[0].mxu0
    %v1192 = vadd.f32 0.0, %v1191
    %v1193 = vpop.f32.mrb[0].mxu0
    %1194 = vdwg.mxu0
    %v1195 = vmax.f32 %v1097, %v1107
    %v1196 = vmax.f32 %v1102, %v1112
    %v1197 = vmin.f32 %v1097, %v1107
    %v1198 = vmin.f32 %v1102, %v1112
    %v1199 = vmax.f32 %v1195, %v1117
    %v1200 = vmax.f32 %v1196, %v1122
    %v1201 = vmin.f32 %v1197, %v1117
    %v1202 = vmin.f32 %v1198, %v1122
    %v1203 = vmax.f32 %v1199, %v1127
    %v1204 = vmax.f32 %v1200, %v1132
    %v1205 = vmin.f32 %v1201, %v1127
    %v1206 = vmin.f32 %v1202, %v1132
    %v1207 = vmax.f32 %v1203, %v1137
    %v1208 = vmax.f32 %v1204, %v1142
    %v1209 = vmin.f32 %v1205, %v1137
    %v1210 = vmin.f32 %v1206, %v1142
    %v1211 = vmax.f32 %v1207, %v1147
    %v1212 = vmax.f32 %v1208, %v1152
    %v1213 = vmin.f32 %v1209, %v1147
    %v1214 = vmin.f32 %v1210, %v1152
    %v1215 = vmax.f32 %v1211, %v1157
    %v1216 = vmax.f32 %v1212, %v1162
    %v1217 = vmin.f32 %v1213, %v1157
    %v1218 = vmin.f32 %v1214, %v1162
    %v1219 = vmax.f32 %v1215, %v1167
    %v1220 = vmax.f32 %v1216, %v1172
    %v1221 = vmin.f32 %v1217, %v1167
    %v1222 = vmin.f32 %v1218, %v1172
    %v1223 = vmax.f32 %v1219, %v1177
    %v1224 = vmax.f32 %v1220, %v1182
    %v1225 = vmin.f32 %v1221, %v1177
    %v1226 = vmin.f32 %v1222, %v1182
    %v1227 = vmax.f32 %v1223, %v1187
    %v1228 = vmax.f32 %v1224, %v1192
    %v1229 = vmin.f32 %v1225, %v1187
    %v1230 = vmin.f32 %v1226, %v1192
    %v1231 = vmax.f32 %v1012, %v1227
    %v1232 = vmax.f32 %v1013, %v1228
    %v1233 = vmin.f32 %v1014, %v1229
    %v1234 = vmin.f32 %v1015, %v1230
    %v1235 = vld [vmem:[%s0 + $0x50] sm:$0xff]
    %v1236 = vld [vmem:[%s0 + $0x58] sm:$0xff]
    %v1237 = vld [vmem:[%s0 + $0x60] sm:$0xff]
    %v1238 = vld [vmem:[%s0 + $0x68] sm:$0xff]
    %v1239 = vld [vmem:[%s0 + $0x70] sm:$0xff]
    %v1240 = vld [vmem:[%s0 + $0x78] sm:$0xff]
    %v1241 = vld [vmem:[%s0 + $0x80] sm:$0xff]
    %v1242 = vld [vmem:[%s0 + $0x88] sm:$0xff]
    %v1243 = vld [vmem:[%s0 + $0x90] sm:$0xff]
    %v1244 = vld [vmem:[%s0 + $0x98] sm:$0xff]
    %v1245 = vld [vmem:[%s0 + $0xa0] sm:$0xff]
    %v1246 = vld [vmem:[%s0 + $0xa8] sm:$0xff]
    %v1247 = vld [vmem:[%s0 + $0xb0] sm:$0xff]
    %v1248 = vld [vmem:[%s0 + $0xb8] sm:$0xff]
    %1249 = vmatprep.subr.mxu0 0.0
    %1250 = vmatpush1.msra.mxu0 %v1235
    %1251 = vmatprep.subr.mxu0 0.0
    %1252 = vmatpush1.msra.mxu0 %v1236
    %1253 = vmatprep.subr.mxu0 0.0
    %1254 = vmatpush1.msra.mxu0 %v1237
    %1255 = vmatprep.subr.mxu0 0.0
    %1256 = vmatpush1.msra.mxu0 %v1238
    %1257 = vmatprep.subr.mxu0 0.0
    %1258 = vmatpush1.msra.mxu0 %v1239
    %1259 = vmatprep.subr.mxu0 0.0
    %1260 = vmatpush1.msra.mxu0 %v1240
    %1261 = vmatprep.subr.mxu0 0.0
    %1262 = vmatpush1.msra.mxu0 %v1241
    %1263 = vmatprep.subr.mxu0 0.0
    %1264 = vmatpush1.msra.mxu0 %v1242
    %1265 = vmatprep.subr.mxu0 0.0
    %1266 = vmatpush1.msra.mxu0 %v1243
    %1267 = vmatprep.subr.mxu0 0.0
    %1268 = vmatpush1.msra.mxu0 %v1244
    %1269 = vmatprep.subr.mxu0 0.0
    %1270 = vmatpush1.msra.mxu0 %v1245
    %1271 = vmatprep.subr.mxu0 0.0
    %1272 = vmatpush1.msra.mxu0 %v1246
    %1273 = vmatprep.subr.mxu0 0.0
    %1274 = vmatpush1.msra.mxu0 %v1247
    %1275 = vmatprep.subr.mxu0 0.0
    %1276 = vmatpush1.msra.mxu0 %v1248
    %1277 = vmatprep.subr.mxu0 0.0
    %1278 = vmatpush1.msra.mxu0 0.0
    %1279 = vmatprep.subr.mxu0 0.0
    %1280 = vmatpush1.msra.mxu0 0.0
    %1281 = vmatprep.subr.mxu0 0.0
    %1282 = vmatpush1.msra.mxu0 0.0
    %1283 = vmatprep.subr.mxu0 0.0
    %1284 = vmatpush1.msra.mxu0 0.0
    %1285 = vmatprep.subr.mxu0 0.0
    %1286 = vmatpush1.msra.mxu0 0.0
    %1287 = vmatprep.subr.mxu0 0.0
    %1288 = vmatpush1.msra.mxu0 0.0
    %1289 = vmatprep.subr.mxu0 0.0
    %1290 = vmatpush1.msra.mxu0 0.0
    %1291 = vmatprep.subr.mxu0 0.0
    %1292 = vmatpush1.msra.mxu0 0.0
    %1293 = vmatprep.subr.mxu0 0.0
    %1294 = vmatpush1.msra.mxu0 0.0
    %1295 = vmatprep.subr.mxu0 0.0
    %1296 = vmatpush1.msra.mxu0 0.0
    %1297 = vmatprep.subr.mxu0 0.0
    %1298 = vmatpush1.msra.mxu0 0.0
    %1299 = vmatprep.subr.mxu0 0.0
    %1300 = vmatpush1.msra.mxu0 0.0
    %1301 = vmatprep.subr.mxu0 0.0
    %1302 = vmatpush1.msra.mxu0 0.0
    %1303 = vmatprep.subr.mxu0 0.0
    %1304 = vmatpush1.msra.mxu0 0.0
    %1305 = vmatprep.subr.mxu0 0.0
    %1306 = vmatpush1.msra.mxu0 0.0
    %1307 = vmatprep.subr.mxu0 0.0
    %1308 = vmatpush1.msra.mxu0 0.0
    %1309 = vmatprep.subr.mxu0 0.0
    %1310 = vmatpush1.msra.mxu0 0.0
    %1311 = vmatprep.subr.mxu0 0.0
    %1312 = vmatpush1.msra.mxu0 0.0
    %1313 = vmatprep.mubr.f32.mxu0 0.0
    %1314 = vmatmul.mubr.f32.gmra.mrb[0].mxu0 %v99
    %v1315 = vpop.f32.mrb[0].mxu0
    %v1316 = vadd.f32 0.0, %v1315
    %v1317 = vpop.f32.mrb[0].mxu0
    %1318 = vmatprep.mubr.f32.mxu0 0.0
    %1319 = vmatmul.mubr.f32.gmra.mrb[0].mxu0 %v102
    %v1320 = vpop.f32.mrb[0].mxu0
    %v1321 = vadd.f32 0.0, %v1320
    %v1322 = vpop.f32.mrb[0].mxu0
    %1323 = vmatprep.mubr.f32.mxu0 0.0
    %1324 = vmatmul.mubr.f32.gmra.mrb[0].mxu0 %v105
    %v1325 = vpop.f32.mrb[0].mxu0
    %v1326 = vadd.f32 0.0, %v1325
    %v1327 = vpop.f32.mrb[0].mxu0
    %1328 = vmatprep.mubr.f32.mxu0 0.0
    %1329 = vmatmul.mubr.f32.gmra.mrb[0].mxu0 %v108
    %v1330 = vpop.f32.mrb[0].mxu0
    %v1331 = vadd.f32 0.0, %v1330
    %v1332 = vpop.f32.mrb[0].mxu0
    %1333 = vmatprep.mubr.f32.mxu0 0.0
    %1334 = vmatmul.mubr.f32.gmra.mrb[0].mxu0 %v111
    %v1335 = vpop.f32.mrb[0].mxu0
    %v1336 = vadd.f32 0.0, %v1335
    %v1337 = vpop.f32.mrb[0].mxu0
    %1338 = vmatprep.mubr.f32.mxu0 0.0
    %1339 = vmatmul.mubr.f32.gmra.mrb[0].mxu0 %v114
    %v1340 = vpop.f32.mrb[0].mxu0
    %v1341 = vadd.f32 0.0, %v1340
    %v1342 = vpop.f32.mrb[0].mxu0
    %1343 = vmatprep.mubr.f32.mxu0 0.0
    %1344 = vmatmul.mubr.f32.gmra.mrb[0].mxu0 %v117
    %v1345 = vpop.f32.mrb[0].mxu0
    %v1346 = vadd.f32 0.0, %v1345
    %v1347 = vpop.f32.mrb[0].mxu0
    %1348 = vmatprep.mubr.f32.mxu0 0.0
    %1349 = vmatmul.mubr.f32.gmra.mrb[0].mxu0 %v120
    %v1350 = vpop.f32.mrb[0].mxu0
    %v1351 = vadd.f32 0.0, %v1350
    %v1352 = vpop.f32.mrb[0].mxu0
    %1353 = vmatprep.mubr.f32.mxu0 0.0
    %1354 = vmatmul.mubr.f32.gmra.mrb[0].mxu0 %v123
    %v1355 = vpop.f32.mrb[0].mxu0
    %v1356 = vadd.f32 0.0, %v1355
    %v1357 = vpop.f32.mrb[0].mxu0
    %1358 = vmatprep.mubr.f32.mxu0 0.0
    %1359 = vmatmul.mubr.f32.gmra.mrb[0].mxu0 %v126
    %v1360 = vpop.f32.mrb[0].mxu0
    %v1361 = vadd.f32 0.0, %v1360
    %v1362 = vpop.f32.mrb[0].mxu0
    %1363 = vmatprep.mubr.f32.mxu0 0.0
    %1364 = vmatmul.mubr.f32.gmra.mrb[0].mxu0 %v129
    %v1365 = vpop.f32.mrb[0].mxu0
    %v1366 = vadd.f32 0.0, %v1365
    %v1367 = vpop.f32.mrb[0].mxu0
    %1368 = vmatprep.mubr.f32.mxu0 0.0
    %1369 = vmatmul.mubr.f32.gmra.mrb[0].mxu0 %v132
    %v1370 = vpop.f32.mrb[0].mxu0
    %v1371 = vadd.f32 0.0, %v1370
    %v1372 = vpop.f32.mrb[0].mxu0
    %1373 = vmatprep.mubr.f32.mxu0 0.0
    %1374 = vmatmul.mubr.f32.gmra.mrb[0].mxu0 %v135
    %v1375 = vpop.f32.mrb[0].mxu0
    %v1376 = vadd.f32 0.0, %v1375
    %v1377 = vpop.f32.mrb[0].mxu0
    %1378 = vmatprep.mubr.f32.mxu0 0.0
    %1379 = vmatmul.mubr.f32.gmra.mrb[0].mxu0 %v138
    %v1380 = vpop.f32.mrb[0].mxu0
    %v1381 = vadd.f32 0.0, %v1380
    %v1382 = vpop.f32.mrb[0].mxu0
    %1383 = vmatprep.mubr.f32.mxu0 0.0
    %1384 = vmatmul.mubr.f32.gmra.mrb[0].mxu0 %v141
    %v1385 = vpop.f32.mrb[0].mxu0
    %v1386 = vadd.f32 0.0, %v1385
    %v1387 = vpop.f32.mrb[0].mxu0
    %1388 = vmatprep.mubr.f32.mxu0 0.0
    %1389 = vmatmul.mubr.f32.gmra.mrb[0].mxu0 %v144
    %v1390 = vpop.f32.mrb[0].mxu0
    %v1391 = vadd.f32 0.0, %v1390
    %v1392 = vpop.f32.mrb[0].mxu0
    %1393 = vmatprep.mubr.f32.mxu0 0.0
    %1394 = vmatmul.mubr.f32.gmra.mrb[0].mxu0 %v147
    %v1395 = vpop.f32.mrb[0].mxu0
    %v1396 = vadd.f32 0.0, %v1395
    %v1397 = vpop.f32.mrb[0].mxu0
    %1398 = vmatprep.mubr.f32.mxu0 0.0
    %1399 = vmatmul.mubr.f32.gmra.mrb[0].mxu0 %v150
    %v1400 = vpop.f32.mrb[0].mxu0
    %v1401 = vadd.f32 0.0, %v1400
    %v1402 = vpop.f32.mrb[0].mxu0
    %1403 = vmatprep.mubr.f32.mxu0 0.0
    %1404 = vmatmul.mubr.f32.gmra.mrb[0].mxu0 %v153
    %v1405 = vpop.f32.mrb[0].mxu0
    %v1406 = vadd.f32 0.0, %v1405
    %v1407 = vpop.f32.mrb[0].mxu0
    %1408 = vmatprep.mubr.f32.mxu0 0.0
    %1409 = vmatmul.mubr.f32.gmra.mrb[0].mxu0 %v156
    %v1410 = vpop.f32.mrb[0].mxu0
    %v1411 = vadd.f32 0.0, %v1410
    %v1412 = vpop.f32.mrb[0].mxu0
    %1413 = vdwg.mxu0
    %v1414 = vmax.f32 %v1316, %v1326
    %v1415 = vmax.f32 %v1321, %v1331
    %v1416 = vmin.f32 %v1316, %v1326
    %v1417 = vmin.f32 %v1321, %v1331
    %v1418 = vmax.f32 %v1414, %v1336
    %v1419 = vmax.f32 %v1415, %v1341
    %v1420 = vmin.f32 %v1416, %v1336
    %v1421 = vmin.f32 %v1417, %v1341
    %v1422 = vmax.f32 %v1418, %v1346
    %v1423 = vmax.f32 %v1419, %v1351
    %v1424 = vmin.f32 %v1420, %v1346
    %v1425 = vmin.f32 %v1421, %v1351
    %v1426 = vmax.f32 %v1422, %v1356
    %v1427 = vmax.f32 %v1423, %v1361
    %v1428 = vmin.f32 %v1424, %v1356
    %v1429 = vmin.f32 %v1425, %v1361
    %v1430 = vmax.f32 %v1426, %v1366
    %v1431 = vmax.f32 %v1427, %v1371
    %v1432 = vmin.f32 %v1428, %v1366
    %v1433 = vmin.f32 %v1429, %v1371
    %v1434 = vmax.f32 %v1430, %v1376
    %v1435 = vmax.f32 %v1431, %v1381
    %v1436 = vmin.f32 %v1432, %v1376
    %v1437 = vmin.f32 %v1433, %v1381
    %v1438 = vmax.f32 %v1434, %v1386
    %v1439 = vmax.f32 %v1435, %v1391
    %v1440 = vmin.f32 %v1436, %v1386
    %v1441 = vmin.f32 %v1437, %v1391
    %v1442 = vmax.f32 %v1438, %v1396
    %v1443 = vmax.f32 %v1439, %v1401
    %v1444 = vmin.f32 %v1440, %v1396
    %v1445 = vmin.f32 %v1441, %v1401
    %v1446 = vmax.f32 %v1442, %v1406
    %v1447 = vmax.f32 %v1443, %v1411
    %v1448 = vmin.f32 %v1444, %v1406
    %v1449 = vmin.f32 %v1445, %v1411
    %v1450 = vmax.f32 %v1231, %v1446
    %v1451 = vmax.f32 %v1232, %v1447
    %v1452 = vmin.f32 %v1233, %v1448
    %v1453 = vmin.f32 %v1234, %v1449
    %v1454 = vld [vmem:[%s0 + $0x60] sm:$0xff]
    %v1455 = vld [vmem:[%s0 + $0x68] sm:$0xff]
    %v1456 = vld [vmem:[%s0 + $0x70] sm:$0xff]
    %v1457 = vld [vmem:[%s0 + $0x78] sm:$0xff]
    %v1458 = vld [vmem:[%s0 + $0x80] sm:$0xff]
    %v1459 = vld [vmem:[%s0 + $0x88] sm:$0xff]
    %v1460 = vld [vmem:[%s0 + $0x90] sm:$0xff]
    %v1461 = vld [vmem:[%s0 + $0x98] sm:$0xff]
    %v1462 = vld [vmem:[%s0 + $0xa0] sm:$0xff]
    %v1463 = vld [vmem:[%s0 + $0xa8] sm:$0xff]
    %v1464 = vld [vmem:[%s0 + $0xb0] sm:$0xff]
    %v1465 = vld [vmem:[%s0 + $0xb8] sm:$0xff]
    %v1466 = vld [vmem:[%s0 + $0xc0] sm:$0xff]
    %v1467 = vld [vmem:[%s0 + $0xc8] sm:$0xff]
    %1468 = vmatprep.subr.mxu0 0.0
    %1469 = vmatpush1.msra.mxu0 %v1454
    %1470 = vmatprep.subr.mxu0 0.0
    %1471 = vmatpush1.msra.mxu0 %v1455
    %1472 = vmatprep.subr.mxu0 0.0
    %1473 = vmatpush1.msra.mxu0 %v1456
    %1474 = vmatprep.subr.mxu0 0.0
    %1475 = vmatpush1.msra.mxu0 %v1457
    %1476 = vmatprep.subr.mxu0 0.0
    %1477 = vmatpush1.msra.mxu0 %v1458
    %1478 = vmatprep.subr.mxu0 0.0
    %1479 = vmatpush1.msra.mxu0 %v1459
    %1480 = vmatprep.subr.mxu0 0.0
    %1481 = vmatpush1.msra.mxu0 %v1460
    %1482 = vmatprep.subr.mxu0 0.0
    %1483 = vmatpush1.msra.mxu0 %v1461
    %1484 = vmatprep.subr.mxu0 0.0
    %1485 = vmatpush1.msra.mxu0 %v1462
    %1486 = vmatprep.subr.mxu0 0.0
    %1487 = vmatpush1.msra.mxu0 %v1463
    %1488 = vmatprep.subr.mxu0 0.0
    %1489 = vmatpush1.msra.mxu0 %v1464
    %1490 = vmatprep.subr.mxu0 0.0
    %1491 = vmatpush1.msra.mxu0 %v1465
    %1492 = vmatprep.subr.mxu0 0.0
    %1493 = vmatpush1.msra.mxu0 %v1466
    %1494 = vmatprep.subr.mxu0 0.0
    %1495 = vmatpush1.msra.mxu0 %v1467
    %1496 = vmatprep.subr.mxu0 0.0
    %1497 = vmatpush1.msra.mxu0 0.0
    %1498 = vmatprep.subr.mxu0 0.0
    %1499 = vmatpush1.msra.mxu0 0.0
    %1500 = vmatprep.subr.mxu0 0.0
    %1501 = vmatpush1.msra.mxu0 0.0
    %1502 = vmatprep.subr.mxu0 0.0
    %1503 = vmatpush1.msra.mxu0 0.0
    %1504 = vmatprep.subr.mxu0 0.0
    %1505 = vmatpush1.msra.mxu0 0.0
    %1506 = vmatprep.subr.mxu0 0.0
    %1507 = vmatpush1.msra.mxu0 0.0
    %1508 = vmatprep.subr.mxu0 0.0
    %1509 = vmatpush1.msra.mxu0 0.0
    %1510 = vmatprep.subr.mxu0 0.0
    %1511 = vmatpush1.msra.mxu0 0.0
    %1512 = vmatprep.subr.mxu0 0.0
    %1513 = vmatpush1.msra.mxu0 0.0
    %1514 = vmatprep.subr.mxu0 0.0
    %1515 = vmatpush1.msra.mxu0 0.0
    %1516 = vmatprep.subr.mxu0 0.0
    %1517 = vmatpush1.msra.mxu0 0.0
    %1518 = vmatprep.subr.mxu0 0.0
    %1519 = vmatpush1.msra.mxu0 0.0
    %1520 = vmatprep.subr.mxu0 0.0
    %1521 = vmatpush1.msra.mxu0 0.0
    %1522 = vmatprep.subr.mxu0 0.0
    %1523 = vmatpush1.msra.mxu0 0.0
    %1524 = vmatprep.subr.mxu0 0.0
    %1525 = vmatpush1.msra.mxu0 0.0
    %1526 = vmatprep.subr.mxu0 0.0
    %1527 = vmatpush1.msra.mxu0 0.0
    %1528 = vmatprep.subr.mxu0 0.0
    %1529 = vmatpush1.msra.mxu0 0.0
    %1530 = vmatprep.subr.mxu0 0.0
    %1531 = vmatpush1.msra.mxu0 0.0
    %1532 = vmatprep.mubr.f32.mxu0 0.0
    %1533 = vmatmul.mubr.f32.gmra.mrb[0].mxu0 %v99
    %v1534 = vpop.f32.mrb[0].mxu0
    %v1535 = vadd.f32 0.0, %v1534
    %v1536 = vpop.f32.mrb[0].mxu0
    %1537 = vmatprep.mubr.f32.mxu0 0.0
    %1538 = vmatmul.mubr.f32.gmra.mrb[0].mxu0 %v102
    %v1539 = vpop.f32.mrb[0].mxu0
    %v1540 = vadd.f32 0.0, %v1539
    %v1541 = vpop.f32.mrb[0].mxu0
    %1542 = vmatprep.mubr.f32.mxu0 0.0
    %1543 = vmatmul.mubr.f32.gmra.mrb[0].mxu0 %v105
    %v1544 = vpop.f32.mrb[0].mxu0
    %v1545 = vadd.f32 0.0, %v1544
    %v1546 = vpop.f32.mrb[0].mxu0
    %1547 = vmatprep.mubr.f32.mxu0 0.0
    %1548 = vmatmul.mubr.f32.gmra.mrb[0].mxu0 %v108
    %v1549 = vpop.f32.mrb[0].mxu0
    %v1550 = vadd.f32 0.0, %v1549
    %v1551 = vpop.f32.mrb[0].mxu0
    %1552 = vmatprep.mubr.f32.mxu0 0.0
    %1553 = vmatmul.mubr.f32.gmra.mrb[0].mxu0 %v111
    %v1554 = vpop.f32.mrb[0].mxu0
    %v1555 = vadd.f32 0.0, %v1554
    %v1556 = vpop.f32.mrb[0].mxu0
    %1557 = vmatprep.mubr.f32.mxu0 0.0
    %1558 = vmatmul.mubr.f32.gmra.mrb[0].mxu0 %v114
    %v1559 = vpop.f32.mrb[0].mxu0
    %v1560 = vadd.f32 0.0, %v1559
    %v1561 = vpop.f32.mrb[0].mxu0
    %1562 = vmatprep.mubr.f32.mxu0 0.0
    %1563 = vmatmul.mubr.f32.gmra.mrb[0].mxu0 %v117
    %v1564 = vpop.f32.mrb[0].mxu0
    %v1565 = vadd.f32 0.0, %v1564
    %v1566 = vpop.f32.mrb[0].mxu0
    %1567 = vmatprep.mubr.f32.mxu0 0.0
    %1568 = vmatmul.mubr.f32.gmra.mrb[0].mxu0 %v120
    %v1569 = vpop.f32.mrb[0].mxu0
    %v1570 = vadd.f32 0.0, %v1569
    %v1571 = vpop.f32.mrb[0].mxu0
    %1572 = vmatprep.mubr.f32.mxu0 0.0
    %1573 = vmatmul.mubr.f32.gmra.mrb[0].mxu0 %v123
    %v1574 = vpop.f32.mrb[0].mxu0
    %v1575 = vadd.f32 0.0, %v1574
    %v1576 = vpop.f32.mrb[0].mxu0
    %1577 = vmatprep.mubr.f32.mxu0 0.0
    %1578 = vmatmul.mubr.f32.gmra.mrb[0].mxu0 %v126
    %v1579 = vpop.f32.mrb[0].mxu0
    %v1580 = vadd.f32 0.0, %v1579
    %v1581 = vpop.f32.mrb[0].mxu0
    %1582 = vmatprep.mubr.f32.mxu0 0.0
    %1583 = vmatmul.mubr.f32.gmra.mrb[0].mxu0 %v129
    %v1584 = vpop.f32.mrb[0].mxu0
    %v1585 = vadd.f32 0.0, %v1584
    %v1586 = vpop.f32.mrb[0].mxu0
    %1587 = vmatprep.mubr.f32.mxu0 0.0
    %1588 = vmatmul.mubr.f32.gmra.mrb[0].mxu0 %v132
    %v1589 = vpop.f32.mrb[0].mxu0
    %v1590 = vadd.f32 0.0, %v1589
    %v1591 = vpop.f32.mrb[0].mxu0
    %1592 = vmatprep.mubr.f32.mxu0 0.0
    %1593 = vmatmul.mubr.f32.gmra.mrb[0].mxu0 %v135
    %v1594 = vpop.f32.mrb[0].mxu0
    %v1595 = vadd.f32 0.0, %v1594
    %v1596 = vpop.f32.mrb[0].mxu0
    %1597 = vmatprep.mubr.f32.mxu0 0.0
    %1598 = vmatmul.mubr.f32.gmra.mrb[0].mxu0 %v138
    %v1599 = vpop.f32.mrb[0].mxu0
    %v1600 = vadd.f32 0.0, %v1599
    %v1601 = vpop.f32.mrb[0].mxu0
    %1602 = vmatprep.mubr.f32.mxu0 0.0
    %1603 = vmatmul.mubr.f32.gmra.mrb[0].mxu0 %v141
    %v1604 = vpop.f32.mrb[0].mxu0
    %v1605 = vadd.f32 0.0, %v1604
    %v1606 = vpop.f32.mrb[0].mxu0
    %1607 = vmatprep.mubr.f32.mxu0 0.0
    %1608 = vmatmul.mubr.f32.gmra.mrb[0].mxu0 %v144
    %v1609 = vpop.f32.mrb[0].mxu0
    %v1610 = vadd.f32 0.0, %v1609
    %v1611 = vpop.f32.mrb[0].mxu0
    %1612 = vmatprep.mubr.f32.mxu0 0.0
    %1613 = vmatmul.mubr.f32.gmra.mrb[0].mxu0 %v147
    %v1614 = vpop.f32.mrb[0].mxu0
    %v1615 = vadd.f32 0.0, %v1614
    %v1616 = vpop.f32.mrb[0].mxu0
    %1617 = vmatprep.mubr.f32.mxu0 0.0
    %1618 = vmatmul.mubr.f32.gmra.mrb[0].mxu0 %v150
    %v1619 = vpop.f32.mrb[0].mxu0
    %v1620 = vadd.f32 0.0, %v1619
    %v1621 = vpop.f32.mrb[0].mxu0
    %1622 = vmatprep.mubr.f32.mxu0 0.0
    %1623 = vmatmul.mubr.f32.gmra.mrb[0].mxu0 %v153
    %v1624 = vpop.f32.mrb[0].mxu0
    %v1625 = vadd.f32 0.0, %v1624
    %v1626 = vpop.f32.mrb[0].mxu0
    %1627 = vmatprep.mubr.f32.mxu0 0.0
    %1628 = vmatmul.mubr.f32.gmra.mrb[0].mxu0 %v156
    %v1629 = vpop.f32.mrb[0].mxu0
    %v1630 = vadd.f32 0.0, %v1629
    %v1631 = vpop.f32.mrb[0].mxu0
    %1632 = vdwg.mxu0
    %v1633 = vmax.f32 %v1535, %v1545
    %v1634 = vmax.f32 %v1540, %v1550
    %v1635 = vmin.f32 %v1535, %v1545
    %v1636 = vmin.f32 %v1540, %v1550
    %v1637 = vmax.f32 %v1633, %v1555
    %v1638 = vmax.f32 %v1634, %v1560
    %v1639 = vmin.f32 %v1635, %v1555
    %v1640 = vmin.f32 %v1636, %v1560
    %v1641 = vmax.f32 %v1637, %v1565
    %v1642 = vmax.f32 %v1638, %v1570
    %v1643 = vmin.f32 %v1639, %v1565
    %v1644 = vmin.f32 %v1640, %v1570
    %v1645 = vmax.f32 %v1641, %v1575
    %v1646 = vmax.f32 %v1642, %v1580
    %v1647 = vmin.f32 %v1643, %v1575
    %v1648 = vmin.f32 %v1644, %v1580
    %v1649 = vmax.f32 %v1645, %v1585
    %v1650 = vmax.f32 %v1646, %v1590
    %v1651 = vmin.f32 %v1647, %v1585
    %v1652 = vmin.f32 %v1648, %v1590
    %v1653 = vmax.f32 %v1649, %v1595
    %v1654 = vmax.f32 %v1650, %v1600
    %v1655 = vmin.f32 %v1651, %v1595
    %v1656 = vmin.f32 %v1652, %v1600
    %v1657 = vmax.f32 %v1653, %v1605
    %v1658 = vmax.f32 %v1654, %v1610
    %v1659 = vmin.f32 %v1655, %v1605
    %v1660 = vmin.f32 %v1656, %v1610
    %v1661 = vmax.f32 %v1657, %v1615
    %v1662 = vmax.f32 %v1658, %v1620
    %v1663 = vmin.f32 %v1659, %v1615
    %v1664 = vmin.f32 %v1660, %v1620
    %v1665 = vmax.f32 %v1661, %v1625
    %v1666 = vmax.f32 %v1662, %v1630
    %v1667 = vmin.f32 %v1663, %v1625
    %v1668 = vmin.f32 %v1664, %v1630
    %v1669 = vmax.f32 %v1450, %v1665
    %v1670 = vmax.f32 %v1451, %v1666
    %v1671 = vmin.f32 %v1452, %v1667
    %v1672 = vmin.f32 %v1453, %v1668
    %v1673 = vld [vmem:[%s0 + $0x70] sm:$0xff]
    %v1674 = vld [vmem:[%s0 + $0x78] sm:$0xff]
    %v1675 = vld [vmem:[%s0 + $0x80] sm:$0xff]
    %v1676 = vld [vmem:[%s0 + $0x88] sm:$0xff]
    %v1677 = vld [vmem:[%s0 + $0x90] sm:$0xff]
    %v1678 = vld [vmem:[%s0 + $0x98] sm:$0xff]
    %v1679 = vld [vmem:[%s0 + $0xa0] sm:$0xff]
    %v1680 = vld [vmem:[%s0 + $0xa8] sm:$0xff]
    %v1681 = vld [vmem:[%s0 + $0xb0] sm:$0xff]
    %v1682 = vld [vmem:[%s0 + $0xb8] sm:$0xff]
    %v1683 = vld [vmem:[%s0 + $0xc0] sm:$0xff]
    %v1684 = vld [vmem:[%s0 + $0xc8] sm:$0xff]
    %v1685 = vld [vmem:[%s0 + $0xd0] sm:$0xff]
    %v1686 = vld [vmem:[%s0 + $0xd8] sm:$0xff]
    %1687 = vmatprep.subr.mxu0 0.0
    %1688 = vmatpush1.msra.mxu0 %v1673
    %1689 = vmatprep.subr.mxu0 0.0
    %1690 = vmatpush1.msra.mxu0 %v1674
    %1691 = vmatprep.subr.mxu0 0.0
    %1692 = vmatpush1.msra.mxu0 %v1675
    %1693 = vmatprep.subr.mxu0 0.0
    %1694 = vmatpush1.msra.mxu0 %v1676
    %1695 = vmatprep.subr.mxu0 0.0
    %1696 = vmatpush1.msra.mxu0 %v1677
    %1697 = vmatprep.subr.mxu0 0.0
    %1698 = vmatpush1.msra.mxu0 %v1678
    %1699 = vmatprep.subr.mxu0 0.0
    %1700 = vmatpush1.msra.mxu0 %v1679
    %1701 = vmatprep.subr.mxu0 0.0
    %1702 = vmatpush1.msra.mxu0 %v1680
    %1703 = vmatprep.subr.mxu0 0.0
    %1704 = vmatpush1.msra.mxu0 %v1681
    %1705 = vmatprep.subr.mxu0 0.0
    %1706 = vmatpush1.msra.mxu0 %v1682
    %1707 = vmatprep.subr.mxu0 0.0
    %1708 = vmatpush1.msra.mxu0 %v1683
    %1709 = vmatprep.subr.mxu0 0.0
    %1710 = vmatpush1.msra.mxu0 %v1684
    %1711 = vmatprep.subr.mxu0 0.0
    %1712 = vmatpush1.msra.mxu0 %v1685
    %1713 = vmatprep.subr.mxu0 0.0
    %1714 = vmatpush1.msra.mxu0 %v1686
    %1715 = vmatprep.subr.mxu0 0.0
    %1716 = vmatpush1.msra.mxu0 0.0
    %1717 = vmatprep.subr.mxu0 0.0
    %1718 = vmatpush1.msra.mxu0 0.0
    %1719 = vmatprep.subr.mxu0 0.0
    %1720 = vmatpush1.msra.mxu0 0.0
    %1721 = vmatprep.subr.mxu0 0.0
    %1722 = vmatpush1.msra.mxu0 0.0
    %1723 = vmatprep.subr.mxu0 0.0
    %1724 = vmatpush1.msra.mxu0 0.0
    %1725 = vmatprep.subr.mxu0 0.0
    %1726 = vmatpush1.msra.mxu0 0.0
    %1727 = vmatprep.subr.mxu0 0.0
    %1728 = vmatpush1.msra.mxu0 0.0
    %1729 = vmatprep.subr.mxu0 0.0
    %1730 = vmatpush1.msra.mxu0 0.0
    %1731 = vmatprep.subr.mxu0 0.0
    %1732 = vmatpush1.msra.mxu0 0.0
    %1733 = vmatprep.subr.mxu0 0.0
    %1734 = vmatpush1.msra.mxu0 0.0
    %1735 = vmatprep.subr.mxu0 0.0
    %1736 = vmatpush1.msra.mxu0 0.0
    %1737 = vmatprep.subr.mxu0 0.0
    %1738 = vmatpush1.msra.mxu0 0.0
    %1739 = vmatprep.subr.mxu0 0.0
    %1740 = vmatpush1.msra.mxu0 0.0
    %1741 = vmatprep.subr.mxu0 0.0
    %1742 = vmatpush1.msra.mxu0 0.0
    %1743 = vmatprep.subr.mxu0 0.0
    %1744 = vmatpush1.msra.mxu0 0.0
    %1745 = vmatprep.subr.mxu0 0.0
    %1746 = vmatpush1.msra.mxu0 0.0
    %1747 = vmatprep.subr.mxu0 0.0
    %1748 = vmatpush1.msra.mxu0 0.0
    %1749 = vmatprep.subr.mxu0 0.0
    %1750 = vmatpush1.msra.mxu0 0.0
    %1751 = vmatprep.mubr.f32.mxu0 0.0
    %1752 = vmatmul.mubr.f32.gmra.mrb[0].mxu0 %v99
    %v1753 = vpop.f32.mrb[0].mxu0
    %v1754 = vadd.f32 0.0, %v1753
    %v1755 = vpop.f32.mrb[0].mxu0
    %1756 = vmatprep.mubr.f32.mxu0 0.0
    %1757 = vmatmul.mubr.f32.gmra.mrb[0].mxu0 %v102
    %v1758 = vpop.f32.mrb[0].mxu0
    %v1759 = vadd.f32 0.0, %v1758
    %v1760 = vpop.f32.mrb[0].mxu0
    %1761 = vmatprep.mubr.f32.mxu0 0.0
    %1762 = vmatmul.mubr.f32.gmra.mrb[0].mxu0 %v105
    %v1763 = vpop.f32.mrb[0].mxu0
    %v1764 = vadd.f32 0.0, %v1763
    %v1765 = vpop.f32.mrb[0].mxu0
    %1766 = vmatprep.mubr.f32.mxu0 0.0
    %1767 = vmatmul.mubr.f32.gmra.mrb[0].mxu0 %v108
    %v1768 = vpop.f32.mrb[0].mxu0
    %v1769 = vadd.f32 0.0, %v1768
    %v1770 = vpop.f32.mrb[0].mxu0
    %1771 = vmatprep.mubr.f32.mxu0 0.0
    %1772 = vmatmul.mubr.f32.gmra.mrb[0].mxu0 %v111
    %v1773 = vpop.f32.mrb[0].mxu0
    %v1774 = vadd.f32 0.0, %v1773
    %v1775 = vpop.f32.mrb[0].mxu0
    %1776 = vmatprep.mubr.f32.mxu0 0.0
    %1777 = vmatmul.mubr.f32.gmra.mrb[0].mxu0 %v114
    %v1778 = vpop.f32.mrb[0].mxu0
    %v1779 = vadd.f32 0.0, %v1778
    %v1780 = vpop.f32.mrb[0].mxu0
    %1781 = vmatprep.mubr.f32.mxu0 0.0
    %1782 = vmatmul.mubr.f32.gmra.mrb[0].mxu0 %v117
    %v1783 = vpop.f32.mrb[0].mxu0
    %v1784 = vadd.f32 0.0, %v1783
    %v1785 = vpop.f32.mrb[0].mxu0
    %1786 = vmatprep.mubr.f32.mxu0 0.0
    %1787 = vmatmul.mubr.f32.gmra.mrb[0].mxu0 %v120
    %v1788 = vpop.f32.mrb[0].mxu0
    %v1789 = vadd.f32 0.0, %v1788
    %v1790 = vpop.f32.mrb[0].mxu0
    %1791 = vmatprep.mubr.f32.mxu0 0.0
    %1792 = vmatmul.mubr.f32.gmra.mrb[0].mxu0 %v123
    %v1793 = vpop.f32.mrb[0].mxu0
    %v1794 = vadd.f32 0.0, %v1793
    %v1795 = vpop.f32.mrb[0].mxu0
    %1796 = vmatprep.mubr.f32.mxu0 0.0
    %1797 = vmatmul.mubr.f32.gmra.mrb[0].mxu0 %v126
    %v1798 = vpop.f32.mrb[0].mxu0
    %v1799 = vadd.f32 0.0, %v1798
    %v1800 = vpop.f32.mrb[0].mxu0
    %1801 = vmatprep.mubr.f32.mxu0 0.0
    %1802 = vmatmul.mubr.f32.gmra.mrb[0].mxu0 %v129
    %v1803 = vpop.f32.mrb[0].mxu0
    %v1804 = vadd.f32 0.0, %v1803
    %v1805 = vpop.f32.mrb[0].mxu0
    %1806 = vmatprep.mubr.f32.mxu0 0.0
    %1807 = vmatmul.mubr.f32.gmra.mrb[0].mxu0 %v132
    %v1808 = vpop.f32.mrb[0].mxu0
    %v1809 = vadd.f32 0.0, %v1808
    %v1810 = vpop.f32.mrb[0].mxu0
    %1811 = vmatprep.mubr.f32.mxu0 0.0
    %1812 = vmatmul.mubr.f32.gmra.mrb[0].mxu0 %v135
    %v1813 = vpop.f32.mrb[0].mxu0
    %v1814 = vadd.f32 0.0, %v1813
    %v1815 = vpop.f32.mrb[0].mxu0
    %1816 = vmatprep.mubr.f32.mxu0 0.0
    %1817 = vmatmul.mubr.f32.gmra.mrb[0].mxu0 %v138
    %v1818 = vpop.f32.mrb[0].mxu0
    %v1819 = vadd.f32 0.0, %v1818
    %v1820 = vpop.f32.mrb[0].mxu0
    %1821 = vmatprep.mubr.f32.mxu0 0.0
    %1822 = vmatmul.mubr.f32.gmra.mrb[0].mxu0 %v141
    %v1823 = vpop.f32.mrb[0].mxu0
    %v1824 = vadd.f32 0.0, %v1823
    %v1825 = vpop.f32.mrb[0].mxu0
    %1826 = vmatprep.mubr.f32.mxu0 0.0
    %1827 = vmatmul.mubr.f32.gmra.mrb[0].mxu0 %v144
    %v1828 = vpop.f32.mrb[0].mxu0
    %v1829 = vadd.f32 0.0, %v1828
    %v1830 = vpop.f32.mrb[0].mxu0
    %1831 = vmatprep.mubr.f32.mxu0 0.0
    %1832 = vmatmul.mubr.f32.gmra.mrb[0].mxu0 %v147
    %v1833 = vpop.f32.mrb[0].mxu0
    %v1834 = vadd.f32 0.0, %v1833
    %v1835 = vpop.f32.mrb[0].mxu0
    %1836 = vmatprep.mubr.f32.mxu0 0.0
    %1837 = vmatmul.mubr.f32.gmra.mrb[0].mxu0 %v150
    %v1838 = vpop.f32.mrb[0].mxu0
    %v1839 = vadd.f32 0.0, %v1838
    %v1840 = vpop.f32.mrb[0].mxu0
    %1841 = vmatprep.mubr.f32.mxu0 0.0
    %1842 = vmatmul.mubr.f32.gmra.mrb[0].mxu0 %v153
    %v1843 = vpop.f32.mrb[0].mxu0
    %v1844 = vadd.f32 0.0, %v1843
    %v1845 = vpop.f32.mrb[0].mxu0
    %1846 = vmatprep.mubr.f32.mxu0 0.0
    %1847 = vmatmul.mubr.f32.gmra.mrb[0].mxu0 %v156
    %v1848 = vpop.f32.mrb[0].mxu0
    %v1849 = vadd.f32 0.0, %v1848
    %v1850 = vpop.f32.mrb[0].mxu0
    %1851 = vdwg.mxu0
    %v1852 = vmax.f32 %v1754, %v1764
    %v1853 = vmax.f32 %v1759, %v1769
    %v1854 = vmin.f32 %v1754, %v1764
    %v1855 = vmin.f32 %v1759, %v1769
    %v1856 = vmax.f32 %v1852, %v1774
    %v1857 = vmax.f32 %v1853, %v1779
    %v1858 = vmin.f32 %v1854, %v1774
    %v1859 = vmin.f32 %v1855, %v1779
    %v1860 = vmax.f32 %v1856, %v1784
    %v1861 = vmax.f32 %v1857, %v1789
    %v1862 = vmin.f32 %v1858, %v1784
    %v1863 = vmin.f32 %v1859, %v1789
    %v1864 = vmax.f32 %v1860, %v1794
    %v1865 = vmax.f32 %v1861, %v1799
    %v1866 = vmin.f32 %v1862, %v1794
    %v1867 = vmin.f32 %v1863, %v1799
    %v1868 = vmax.f32 %v1864, %v1804
    %v1869 = vmax.f32 %v1865, %v1809
    %v1870 = vmin.f32 %v1866, %v1804
    %v1871 = vmin.f32 %v1867, %v1809
    %v1872 = vmax.f32 %v1868, %v1814
    %v1873 = vmax.f32 %v1869, %v1819
    %v1874 = vmin.f32 %v1870, %v1814
    %v1875 = vmin.f32 %v1871, %v1819
    %v1876 = vmax.f32 %v1872, %v1824
    %v1877 = vmax.f32 %v1873, %v1829
    %v1878 = vmin.f32 %v1874, %v1824
    %v1879 = vmin.f32 %v1875, %v1829
    %v1880 = vmax.f32 %v1876, %v1834
    %v1881 = vmax.f32 %v1877, %v1839
    %v1882 = vmin.f32 %v1878, %v1834
    %v1883 = vmin.f32 %v1879, %v1839
    %v1884 = vmax.f32 %v1880, %v1844
    %v1885 = vmax.f32 %v1881, %v1849
    %v1886 = vmin.f32 %v1882, %v1844
    %v1887 = vmin.f32 %v1883, %v1849
    %v1888 = vmax.f32 %v1669, %v1884
    %v1889 = vmax.f32 %v1670, %v1885
    %v1890 = vmin.f32 %v1671, %v1886
    %v1891 = vmin.f32 %v1672, %v1887
    %v1892 = vld [vmem:[%s0 + $0x80] sm:$0xff]
    %v1893 = vld [vmem:[%s0 + $0x88] sm:$0xff]
    %v1894 = vld [vmem:[%s0 + $0x90] sm:$0xff]
    %v1895 = vld [vmem:[%s0 + $0x98] sm:$0xff]
    %v1896 = vld [vmem:[%s0 + $0xa0] sm:$0xff]
    %v1897 = vld [vmem:[%s0 + $0xa8] sm:$0xff]
    %v1898 = vld [vmem:[%s0 + $0xb0] sm:$0xff]
    %v1899 = vld [vmem:[%s0 + $0xb8] sm:$0xff]
    %v1900 = vld [vmem:[%s0 + $0xc0] sm:$0xff]
    %v1901 = vld [vmem:[%s0 + $0xc8] sm:$0xff]
    %v1902 = vld [vmem:[%s0 + $0xd0] sm:$0xff]
    %v1903 = vld [vmem:[%s0 + $0xd8] sm:$0xff]
    %v1904 = vld [vmem:[%s0 + $0xe0] sm:$0xff]
    %v1905 = vld [vmem:[%s0 + $0xe8] sm:$0xff]
    %1906 = vmatprep.subr.mxu0 0.0
    %1907 = vmatpush1.msra.mxu0 %v1892
    %1908 = vmatprep.subr.mxu0 0.0
    %1909 = vmatpush1.msra.mxu0 %v1893
    %1910 = vmatprep.subr.mxu0 0.0
    %1911 = vmatpush1.msra.mxu0 %v1894
    %1912 = vmatprep.subr.mxu0 0.0
    %1913 = vmatpush1.msra.mxu0 %v1895
    %1914 = vmatprep.subr.mxu0 0.0
    %1915 = vmatpush1.msra.mxu0 %v1896
    %1916 = vmatprep.subr.mxu0 0.0
    %1917 = vmatpush1.msra.mxu0 %v1897
    %1918 = vmatprep.subr.mxu0 0.0
    %1919 = vmatpush1.msra.mxu0 %v1898
    %1920 = vmatprep.subr.mxu0 0.0
    %1921 = vmatpush1.msra.mxu0 %v1899
    %1922 = vmatprep.subr.mxu0 0.0
    %1923 = vmatpush1.msra.mxu0 %v1900
    %1924 = vmatprep.subr.mxu0 0.0
    %1925 = vmatpush1.msra.mxu0 %v1901
    %1926 = vmatprep.subr.mxu0 0.0
    %1927 = vmatpush1.msra.mxu0 %v1902
    %1928 = vmatprep.subr.mxu0 0.0
    %1929 = vmatpush1.msra.mxu0 %v1903
    %1930 = vmatprep.subr.mxu0 0.0
    %1931 = vmatpush1.msra.mxu0 %v1904
    %1932 = vmatprep.subr.mxu0 0.0
    %1933 = vmatpush1.msra.mxu0 %v1905
    %1934 = vmatprep.subr.mxu0 0.0
    %1935 = vmatpush1.msra.mxu0 0.0
    %1936 = vmatprep.subr.mxu0 0.0
    %1937 = vmatpush1.msra.mxu0 0.0
    %1938 = vmatprep.subr.mxu0 0.0
    %1939 = vmatpush1.msra.mxu0 0.0
    %1940 = vmatprep.subr.mxu0 0.0
    %1941 = vmatpush1.msra.mxu0 0.0
    %1942 = vmatprep.subr.mxu0 0.0
    %1943 = vmatpush1.msra.mxu0 0.0
    %1944 = vmatprep.subr.mxu0 0.0
    %1945 = vmatpush1.msra.mxu0 0.0
    %1946 = vmatprep.subr.mxu0 0.0
    %1947 = vmatpush1.msra.mxu0 0.0
    %1948 = vmatprep.subr.mxu0 0.0
    %1949 = vmatpush1.msra.mxu0 0.0
    %1950 = vmatprep.subr.mxu0 0.0
    %1951 = vmatpush1.msra.mxu0 0.0
    %1952 = vmatprep.subr.mxu0 0.0
    %1953 = vmatpush1.msra.mxu0 0.0
    %1954 = vmatprep.subr.mxu0 0.0
    %1955 = vmatpush1.msra.mxu0 0.0
    %1956 = vmatprep.subr.mxu0 0.0
    %1957 = vmatpush1.msra.mxu0 0.0
    %1958 = vmatprep.subr.mxu0 0.0
    %1959 = vmatpush1.msra.mxu0 0.0
    %1960 = vmatprep.subr.mxu0 0.0
    %1961 = vmatpush1.msra.mxu0 0.0
    %1962 = vmatprep.subr.mxu0 0.0
    %1963 = vmatpush1.msra.mxu0 0.0
    %1964 = vmatprep.subr.mxu0 0.0
    %1965 = vmatpush1.msra.mxu0 0.0
    %1966 = vmatprep.subr.mxu0 0.0
    %1967 = vmatpush1.msra.mxu0 0.0
    %1968 = vmatprep.subr.mxu0 0.0
    %1969 = vmatpush1.msra.mxu0 0.0
    %1970 = vmatprep.mubr.f32.mxu0 0.0
    %1971 = vmatmul.mubr.f32.gmra.mrb[0].mxu0 %v99
    %v1972 = vpop.f32.mrb[0].mxu0
    %v1973 = vadd.f32 0.0, %v1972
    %v1974 = vpop.f32.mrb[0].mxu0
    %1975 = vmatprep.mubr.f32.mxu0 0.0
    %1976 = vmatmul.mubr.f32.gmra.mrb[0].mxu0 %v102
    %v1977 = vpop.f32.mrb[0].mxu0
    %v1978 = vadd.f32 0.0, %v1977
    %v1979 = vpop.f32.mrb[0].mxu0
    %1980 = vmatprep.mubr.f32.mxu0 0.0
    %1981 = vmatmul.mubr.f32.gmra.mrb[0].mxu0 %v105
    %v1982 = vpop.f32.mrb[0].mxu0
    %v1983 = vadd.f32 0.0, %v1982
    %v1984 = vpop.f32.mrb[0].mxu0
    %1985 = vmatprep.mubr.f32.mxu0 0.0
    %1986 = vmatmul.mubr.f32.gmra.mrb[0].mxu0 %v108
    %v1987 = vpop.f32.mrb[0].mxu0
    %v1988 = vadd.f32 0.0, %v1987
    %v1989 = vpop.f32.mrb[0].mxu0
    %1990 = vmatprep.mubr.f32.mxu0 0.0
    %1991 = vmatmul.mubr.f32.gmra.mrb[0].mxu0 %v111
    %v1992 = vpop.f32.mrb[0].mxu0
    %v1993 = vadd.f32 0.0, %v1992
    %v1994 = vpop.f32.mrb[0].mxu0
    %1995 = vmatprep.mubr.f32.mxu0 0.0
    %1996 = vmatmul.mubr.f32.gmra.mrb[0].mxu0 %v114
    %v1997 = vpop.f32.mrb[0].mxu0
    %v1998 = vadd.f32 0.0, %v1997
    %v1999 = vpop.f32.mrb[0].mxu0
    %2000 = vmatprep.mubr.f32.mxu0 0.0
    %2001 = vmatmul.mubr.f32.gmra.mrb[0].mxu0 %v117
    %v2002 = vpop.f32.mrb[0].mxu0
    %v2003 = vadd.f32 0.0, %v2002
    %v2004 = vpop.f32.mrb[0].mxu0
    %2005 = vmatprep.mubr.f32.mxu0 0.0
    %2006 = vmatmul.mubr.f32.gmra.mrb[0].mxu0 %v120
    %v2007 = vpop.f32.mrb[0].mxu0
    %v2008 = vadd.f32 0.0, %v2007
    %v2009 = vpop.f32.mrb[0].mxu0
    %2010 = vmatprep.mubr.f32.mxu0 0.0
    %2011 = vmatmul.mubr.f32.gmra.mrb[0].mxu0 %v123
    %v2012 = vpop.f32.mrb[0].mxu0
    %v2013 = vadd.f32 0.0, %v2012
    %v2014 = vpop.f32.mrb[0].mxu0
    %2015 = vmatprep.mubr.f32.mxu0 0.0
    %2016 = vmatmul.mubr.f32.gmra.mrb[0].mxu0 %v126
    %v2017 = vpop.f32.mrb[0].mxu0
    %v2018 = vadd.f32 0.0, %v2017
    %v2019 = vpop.f32.mrb[0].mxu0
    %2020 = vmatprep.mubr.f32.mxu0 0.0
    %2021 = vmatmul.mubr.f32.gmra.mrb[0].mxu0 %v129
    %v2022 = vpop.f32.mrb[0].mxu0
    %v2023 = vadd.f32 0.0, %v2022
    %v2024 = vpop.f32.mrb[0].mxu0
    %2025 = vmatprep.mubr.f32.mxu0 0.0
    %2026 = vmatmul.mubr.f32.gmra.mrb[0].mxu0 %v132
    %v2027 = vpop.f32.mrb[0].mxu0
    %v2028 = vadd.f32 0.0, %v2027
    %v2029 = vpop.f32.mrb[0].mxu0
    %2030 = vmatprep.mubr.f32.mxu0 0.0
    %2031 = vmatmul.mubr.f32.gmra.mrb[0].mxu0 %v135
    %v2032 = vpop.f32.mrb[0].mxu0
    %v2033 = vadd.f32 0.0, %v2032
    %v2034 = vpop.f32.mrb[0].mxu0
    %2035 = vmatprep.mubr.f32.mxu0 0.0
    %2036 = vmatmul.mubr.f32.gmra.mrb[0].mxu0 %v138
    %v2037 = vpop.f32.mrb[0].mxu0
    %v2038 = vadd.f32 0.0, %v2037
    %v2039 = vpop.f32.mrb[0].mxu0
    %2040 = vmatprep.mubr.f32.mxu0 0.0
    %2041 = vmatmul.mubr.f32.gmra.mrb[0].mxu0 %v141
    %v2042 = vpop.f32.mrb[0].mxu0
    %v2043 = vadd.f32 0.0, %v2042
    %v2044 = vpop.f32.mrb[0].mxu0
    %2045 = vmatprep.mubr.f32.mxu0 0.0
    %2046 = vmatmul.mubr.f32.gmra.mrb[0].mxu0 %v144
    %v2047 = vpop.f32.mrb[0].mxu0
    %v2048 = vadd.f32 0.0, %v2047
    %v2049 = vpop.f32.mrb[0].mxu0
    %2050 = vmatprep.mubr.f32.mxu0 0.0
    %2051 = vmatmul.mubr.f32.gmra.mrb[0].mxu0 %v147
    %v2052 = vpop.f32.mrb[0].mxu0
    %v2053 = vadd.f32 0.0, %v2052
    %v2054 = vpop.f32.mrb[0].mxu0
    %2055 = vmatprep.mubr.f32.mxu0 0.0
    %2056 = vmatmul.mubr.f32.gmra.mrb[0].mxu0 %v150
    %v2057 = vpop.f32.mrb[0].mxu0
    %v2058 = vadd.f32 0.0, %v2057
    %v2059 = vpop.f32.mrb[0].mxu0
    %2060 = vmatprep.mubr.f32.mxu0 0.0
    %2061 = vmatmul.mubr.f32.gmra.mrb[0].mxu0 %v153
    %v2062 = vpop.f32.mrb[0].mxu0
    %v2063 = vadd.f32 0.0, %v2062
    %v2064 = vpop.f32.mrb[0].mxu0
    %2065 = vmatprep.mubr.f32.mxu0 0.0
    %2066 = vmatmul.mubr.f32.gmra.mrb[0].mxu0 %v156
    %v2067 = vpop.f32.mrb[0].mxu0
    %v2068 = vadd.f32 0.0, %v2067
    %v2069 = vpop.f32.mrb[0].mxu0
    %2070 = vdwg.mxu0
    %v2071 = vmax.f32 %v1973, %v1983
    %v2072 = vmax.f32 %v1978, %v1988
    %v2073 = vmin.f32 %v1973, %v1983
    %v2074 = vmin.f32 %v1978, %v1988
    %v2075 = vmax.f32 %v2071, %v1993
    %v2076 = vmax.f32 %v2072, %v1998
    %v2077 = vmin.f32 %v2073, %v1993
    %v2078 = vmin.f32 %v2074, %v1998
    %v2079 = vmax.f32 %v2075, %v2003
    %v2080 = vmax.f32 %v2076, %v2008
    %v2081 = vmin.f32 %v2077, %v2003
    %v2082 = vmin.f32 %v2078, %v2008
    %v2083 = vmax.f32 %v2079, %v2013
    %v2084 = vmax.f32 %v2080, %v2018
    %v2085 = vmin.f32 %v2081, %v2013
    %v2086 = vmin.f32 %v2082, %v2018
    %v2087 = vmax.f32 %v2083, %v2023
    %v2088 = vmax.f32 %v2084, %v2028
    %v2089 = vmin.f32 %v2085, %v2023
    %v2090 = vmin.f32 %v2086, %v2028
    %v2091 = vmax.f32 %v2087, %v2033
    %v2092 = vmax.f32 %v2088, %v2038
    %v2093 = vmin.f32 %v2089, %v2033
    %v2094 = vmin.f32 %v2090, %v2038
    %v2095 = vmax.f32 %v2091, %v2043
    %v2096 = vmax.f32 %v2092, %v2048
    %v2097 = vmin.f32 %v2093, %v2043
    %v2098 = vmin.f32 %v2094, %v2048
    %v2099 = vmax.f32 %v2095, %v2053
    %v2100 = vmax.f32 %v2096, %v2058
    %v2101 = vmin.f32 %v2097, %v2053
    %v2102 = vmin.f32 %v2098, %v2058
    %v2103 = vmax.f32 %v2099, %v2063
    %v2104 = vmax.f32 %v2100, %v2068
    %v2105 = vmin.f32 %v2101, %v2063
    %v2106 = vmin.f32 %v2102, %v2068
    %v2107 = vmax.f32 %v1888, %v2103
    %v2108 = vmax.f32 %v1889, %v2104
    %v2109 = vmin.f32 %v1890, %v2105
    %v2110 = vmin.f32 %v1891, %v2106
    %v2111 = vld [vmem:[%s0 + $0x90] sm:$0xff]
    %v2112 = vld [vmem:[%s0 + $0x98] sm:$0xff]
    %v2113 = vld [vmem:[%s0 + $0xa0] sm:$0xff]
    %v2114 = vld [vmem:[%s0 + $0xa8] sm:$0xff]
    %v2115 = vld [vmem:[%s0 + $0xb0] sm:$0xff]
    %v2116 = vld [vmem:[%s0 + $0xb8] sm:$0xff]
    %v2117 = vld [vmem:[%s0 + $0xc0] sm:$0xff]
    %v2118 = vld [vmem:[%s0 + $0xc8] sm:$0xff]
    %v2119 = vld [vmem:[%s0 + $0xd0] sm:$0xff]
    %v2120 = vld [vmem:[%s0 + $0xd8] sm:$0xff]
    %v2121 = vld [vmem:[%s0 + $0xe0] sm:$0xff]
    %v2122 = vld [vmem:[%s0 + $0xe8] sm:$0xff]
    %v2123 = vld [vmem:[%s0 + $0xf0] sm:$0xff]
    %v2124 = vld [vmem:[%s0 + $0xf8] sm:$0xff]
    %2125 = vmatprep.subr.mxu0 0.0
    %2126 = vmatpush1.msra.mxu0 %v2111
    %2127 = vmatprep.subr.mxu0 0.0
    %2128 = vmatpush1.msra.mxu0 %v2112
    %2129 = vmatprep.subr.mxu0 0.0
    %2130 = vmatpush1.msra.mxu0 %v2113
    %2131 = vmatprep.subr.mxu0 0.0
    %2132 = vmatpush1.msra.mxu0 %v2114
    %2133 = vmatprep.subr.mxu0 0.0
    %2134 = vmatpush1.msra.mxu0 %v2115
    %2135 = vmatprep.subr.mxu0 0.0
    %2136 = vmatpush1.msra.mxu0 %v2116
    %2137 = vmatprep.subr.mxu0 0.0
    %2138 = vmatpush1.msra.mxu0 %v2117
    %2139 = vmatprep.subr.mxu0 0.0
    %2140 = vmatpush1.msra.mxu0 %v2118
    %2141 = vmatprep.subr.mxu0 0.0
    %2142 = vmatpush1.msra.mxu0 %v2119
    %2143 = vmatprep.subr.mxu0 0.0
    %2144 = vmatpush1.msra.mxu0 %v2120
    %2145 = vmatprep.subr.mxu0 0.0
    %2146 = vmatpush1.msra.mxu0 %v2121
    %2147 = vmatprep.subr.mxu0 0.0
    %2148 = vmatpush1.msra.mxu0 %v2122
    %2149 = vmatprep.subr.mxu0 0.0
    %2150 = vmatpush1.msra.mxu0 %v2123
    %2151 = vmatprep.subr.mxu0 0.0
    %2152 = vmatpush1.msra.mxu0 %v2124
    %2153 = vmatprep.subr.mxu0 0.0
    %2154 = vmatpush1.msra.mxu0 0.0
    %2155 = vmatprep.subr.mxu0 0.0
    %2156 = vmatpush1.msra.mxu0 0.0
    %2157 = vmatprep.subr.mxu0 0.0
    %2158 = vmatpush1.msra.mxu0 0.0
    %2159 = vmatprep.subr.mxu0 0.0
    %2160 = vmatpush1.msra.mxu0 0.0
    %2161 = vmatprep.subr.mxu0 0.0
    %2162 = vmatpush1.msra.mxu0 0.0
    %2163 = vmatprep.subr.mxu0 0.0
    %2164 = vmatpush1.msra.mxu0 0.0
    %2165 = vmatprep.subr.mxu0 0.0
    %2166 = vmatpush1.msra.mxu0 0.0
    %2167 = vmatprep.subr.mxu0 0.0
    %2168 = vmatpush1.msra.mxu0 0.0
    %2169 = vmatprep.subr.mxu0 0.0
    %2170 = vmatpush1.msra.mxu0 0.0
    %2171 = vmatprep.subr.mxu0 0.0
    %2172 = vmatpush1.msra.mxu0 0.0
    %2173 = vmatprep.subr.mxu0 0.0
    %2174 = vmatpush1.msra.mxu0 0.0
    %2175 = vmatprep.subr.mxu0 0.0
    %2176 = vmatpush1.msra.mxu0 0.0
    %2177 = vmatprep.subr.mxu0 0.0
    %2178 = vmatpush1.msra.mxu0 0.0
    %2179 = vmatprep.subr.mxu0 0.0
    %2180 = vmatpush1.msra.mxu0 0.0
    %2181 = vmatprep.subr.mxu0 0.0
    %2182 = vmatpush1.msra.mxu0 0.0
    %2183 = vmatprep.subr.mxu0 0.0
    %2184 = vmatpush1.msra.mxu0 0.0
    %2185 = vmatprep.subr.mxu0 0.0
    %2186 = vmatpush1.msra.mxu0 0.0
    %2187 = vmatprep.subr.mxu0 0.0
    %2188 = vmatpush1.msra.mxu0 0.0
    %2189 = vmatprep.mubr.f32.mxu0 0.0
    %2190 = vmatmul.mubr.f32.gmra.mrb[0].mxu0 %v99
    %v2191 = vpop.f32.mrb[0].mxu0
    %v2192 = vadd.f32 0.0, %v2191
    %v2193 = vpop.f32.mrb[0].mxu0
    %2194 = vmatprep.mubr.f32.mxu0 0.0
    %2195 = vmatmul.mubr.f32.gmra.mrb[0].mxu0 %v102
    %v2196 = vpop.f32.mrb[0].mxu0
    %v2197 = vadd.f32 0.0, %v2196
    %v2198 = vpop.f32.mrb[0].mxu0
    %2199 = vmatprep.mubr.f32.mxu0 0.0
    %2200 = vmatmul.mubr.f32.gmra.mrb[0].mxu0 %v105
    %v2201 = vpop.f32.mrb[0].mxu0
    %v2202 = vadd.f32 0.0, %v2201
    %v2203 = vpop.f32.mrb[0].mxu0
    %2204 = vmatprep.mubr.f32.mxu0 0.0
    %2205 = vmatmul.mubr.f32.gmra.mrb[0].mxu0 %v108
    %v2206 = vpop.f32.mrb[0].mxu0
    %v2207 = vadd.f32 0.0, %v2206
    %v2208 = vpop.f32.mrb[0].mxu0
    %2209 = vmatprep.mubr.f32.mxu0 0.0
    %2210 = vmatmul.mubr.f32.gmra.mrb[0].mxu0 %v111
    %v2211 = vpop.f32.mrb[0].mxu0
    %v2212 = vadd.f32 0.0, %v2211
    %v2213 = vpop.f32.mrb[0].mxu0
    %2214 = vmatprep.mubr.f32.mxu0 0.0
    %2215 = vmatmul.mubr.f32.gmra.mrb[0].mxu0 %v114
    %v2216 = vpop.f32.mrb[0].mxu0
    %v2217 = vadd.f32 0.0, %v2216
    %v2218 = vpop.f32.mrb[0].mxu0
    %2219 = vmatprep.mubr.f32.mxu0 0.0
    %2220 = vmatmul.mubr.f32.gmra.mrb[0].mxu0 %v117
    %v2221 = vpop.f32.mrb[0].mxu0
    %v2222 = vadd.f32 0.0, %v2221
    %v2223 = vpop.f32.mrb[0].mxu0
    %2224 = vmatprep.mubr.f32.mxu0 0.0
    %2225 = vmatmul.mubr.f32.gmra.mrb[0].mxu0 %v120
    %v2226 = vpop.f32.mrb[0].mxu0
    %v2227 = vadd.f32 0.0, %v2226
    %v2228 = vpop.f32.mrb[0].mxu0
    %2229 = vmatprep.mubr.f32.mxu0 0.0
    %2230 = vmatmul.mubr.f32.gmra.mrb[0].mxu0 %v123
    %v2231 = vpop.f32.mrb[0].mxu0
    %v2232 = vadd.f32 0.0, %v2231
    %v2233 = vpop.f32.mrb[0].mxu0
    %2234 = vmatprep.mubr.f32.mxu0 0.0
    %2235 = vmatmul.mubr.f32.gmra.mrb[0].mxu0 %v126
    %v2236 = vpop.f32.mrb[0].mxu0
    %v2237 = vadd.f32 0.0, %v2236
    %v2238 = vpop.f32.mrb[0].mxu0
    %2239 = vmatprep.mubr.f32.mxu0 0.0
    %2240 = vmatmul.mubr.f32.gmra.mrb[0].mxu0 %v129
    %v2241 = vpop.f32.mrb[0].mxu0
    %v2242 = vadd.f32 0.0, %v2241
    %v2243 = vpop.f32.mrb[0].mxu0
    %2244 = vmatprep.mubr.f32.mxu0 0.0
    %2245 = vmatmul.mubr.f32.gmra.mrb[0].mxu0 %v132
    %v2246 = vpop.f32.mrb[0].mxu0
    %v2247 = vadd.f32 0.0, %v2246
    %v2248 = vpop.f32.mrb[0].mxu0
    %2249 = vmatprep.mubr.f32.mxu0 0.0
    %2250 = vmatmul.mubr.f32.gmra.mrb[0].mxu0 %v135
    %v2251 = vpop.f32.mrb[0].mxu0
    %v2252 = vadd.f32 0.0, %v2251
    %v2253 = vpop.f32.mrb[0].mxu0
    %2254 = vmatprep.mubr.f32.mxu0 0.0
    %2255 = vmatmul.mubr.f32.gmra.mrb[0].mxu0 %v138
    %v2256 = vpop.f32.mrb[0].mxu0
    %v2257 = vadd.f32 0.0, %v2256
    %v2258 = vpop.f32.mrb[0].mxu0
    %2259 = vmatprep.mubr.f32.mxu0 0.0
    %2260 = vmatmul.mubr.f32.gmra.mrb[0].mxu0 %v141
    %v2261 = vpop.f32.mrb[0].mxu0
    %v2262 = vadd.f32 0.0, %v2261
    %v2263 = vpop.f32.mrb[0].mxu0
    %2264 = vmatprep.mubr.f32.mxu0 0.0
    %2265 = vmatmul.mubr.f32.gmra.mrb[0].mxu0 %v144
    %v2266 = vpop.f32.mrb[0].mxu0
    %v2267 = vadd.f32 0.0, %v2266
    %v2268 = vpop.f32.mrb[0].mxu0
    %2269 = vmatprep.mubr.f32.mxu0 0.0
    %2270 = vmatmul.mubr.f32.gmra.mrb[0].mxu0 %v147
    %v2271 = vpop.f32.mrb[0].mxu0
    %v2272 = vadd.f32 0.0, %v2271
    %v2273 = vpop.f32.mrb[0].mxu0
    %2274 = vmatprep.mubr.f32.mxu0 0.0
    %2275 = vmatmul.mubr.f32.gmra.mrb[0].mxu0 %v150
    %v2276 = vpop.f32.mrb[0].mxu0
    %v2277 = vadd.f32 0.0, %v2276
    %v2278 = vpop.f32.mrb[0].mxu0
    %2279 = vmatprep.mubr.f32.mxu0 0.0
    %2280 = vmatmul.mubr.f32.gmra.mrb[0].mxu0 %v153
    %v2281 = vpop.f32.mrb[0].mxu0
    %v2282 = vadd.f32 0.0, %v2281
    %v2283 = vpop.f32.mrb[0].mxu0
    %2284 = vmatprep.mubr.f32.mxu0 0.0
    %2285 = vmatmul.mubr.f32.gmra.mrb[0].mxu0 %v156
    %v2286 = vpop.f32.mrb[0].mxu0
    %v2287 = vadd.f32 0.0, %v2286
    %v2288 = vpop.f32.mrb[0].mxu0
    %2289 = vdwg.mxu0
    %v2290 = vmax.f32 %v2192, %v2202
    %v2291 = vmax.f32 %v2197, %v2207
    %v2292 = vmin.f32 %v2192, %v2202
    %v2293 = vmin.f32 %v2197, %v2207
    %v2294 = vmax.f32 %v2290, %v2212
    %v2295 = vmax.f32 %v2291, %v2217
    %v2296 = vmin.f32 %v2292, %v2212
    %v2297 = vmin.f32 %v2293, %v2217
    %v2298 = vmax.f32 %v2294, %v2222
    %v2299 = vmax.f32 %v2295, %v2227
    %v2300 = vmin.f32 %v2296, %v2222
    %v2301 = vmin.f32 %v2297, %v2227
    %v2302 = vmax.f32 %v2298, %v2232
    %v2303 = vmax.f32 %v2299, %v2237
    %v2304 = vmin.f32 %v2300, %v2232
    %v2305 = vmin.f32 %v2301, %v2237
    %v2306 = vmax.f32 %v2302, %v2242
    %v2307 = vmax.f32 %v2303, %v2247
    %v2308 = vmin.f32 %v2304, %v2242
    %v2309 = vmin.f32 %v2305, %v2247
    %v2310 = vmax.f32 %v2306, %v2252
    %v2311 = vmax.f32 %v2307, %v2257
    %v2312 = vmin.f32 %v2308, %v2252
    %v2313 = vmin.f32 %v2309, %v2257
    %v2314 = vmax.f32 %v2310, %v2262
    %v2315 = vmax.f32 %v2311, %v2267
    %v2316 = vmin.f32 %v2312, %v2262
    %v2317 = vmin.f32 %v2313, %v2267
    %v2318 = vmax.f32 %v2314, %v2272
    %v2319 = vmax.f32 %v2315, %v2277
    %v2320 = vmin.f32 %v2316, %v2272
    %v2321 = vmin.f32 %v2317, %v2277
    %v2322 = vmax.f32 %v2318, %v2282
    %v2323 = vmax.f32 %v2319, %v2287
    %v2324 = vmin.f32 %v2320, %v2282
    %v2325 = vmin.f32 %v2321, %v2287
    %v2326 = vmax.f32 %v2107, %v2322
    %v2327 = vmax.f32 %v2108, %v2323
    %v2328 = vmin.f32 %v2109, %v2324
    %v2329 = vmin.f32 %v2110, %v2325
    %v2330 = vld [vmem:[%s2] sm:$0xff]
    %v2331 = vld [vmem:[%s2 + $0x8] sm:$0xff]
    %v2332 = vld [vmem:[%s2 + $0x10] sm:$0xff]
    %v2333 = vld [vmem:[%s2 + $0x18] sm:$0xff]
    %2335 = vset.pattern.permute.xlu0 0
    %2336 = vperm.xlu0 %2335, %v2330
    %v2337 = vpop.permute.xlu0 %2336
    %2340 = vset.pattern.permute.xlu0 0
    %2341 = vperm.xlu0 %2340, %v2331
    %v2342 = vpop.permute.xlu0 %2341
    %2345 = vset.pattern.permute.xlu0 0
    %2346 = vperm.xlu0 %2345, %v2332
    %v2347 = vpop.permute.xlu0 %2346
    %2350 = vset.pattern.permute.xlu0 0
    %2351 = vperm.xlu0 %2350, %v2333
    %v2352 = vpop.permute.xlu0 %2351
    %v2354 = vadd.f32 %v2326, %v2337
    %v2355 = vadd.f32 %v2327, %v2342
    %v2356 = vadd.f32 %v2328, %v2347
    %v2357 = vadd.f32 %v2329, %v2352
    %v2358 = vld [vmem:[%s3] sm:$0xff]
    %v2359 = vld [vmem:[%s3 + $0x8] sm:$0xff]
    %v2360 = vld [vmem:[%s3 + $0x10] sm:$0xff]
    %v2361 = vld [vmem:[%s3 + $0x18] sm:$0xff]
    %v2362 = vld [vmem:[%s3 + $0x20] sm:$0xff]
    %v2363 = vld [vmem:[%s3 + $0x28] sm:$0xff]
    %v2364 = vld [vmem:[%s3 + $0x30] sm:$0xff]
    %v2365 = vld [vmem:[%s3 + $0x38] sm:$0xff]
    %v2366 = vld [vmem:[%s4] sm:$0xff]
    %v2367 = vld [vmem:[%s4 + $0x8] sm:$0xff]
    %v2368 = vld [vmem:[%s4 + $0x10] sm:$0xff]
    %v2369 = vld [vmem:[%s4 + $0x18] sm:$0xff]
    %v2370 = vld [vmem:[%s4 + $0x20] sm:$0xff]
    %v2371 = vld [vmem:[%s4 + $0x28] sm:$0xff]
    %v2372 = vld [vmem:[%s4 + $0x30] sm:$0xff]
    %v2373 = vld [vmem:[%s4 + $0x38] sm:$0xff]
    %2375 = vset.pattern.permute.xlu0 0
    %2376 = vperm.xlu0 %2375, %v2366
    %v2377 = vpop.permute.xlu0 %2376
    %2380 = vset.pattern.permute.xlu0 0
    %2381 = vperm.xlu0 %2380, %v2367
    %v2382 = vpop.permute.xlu0 %2381
    %2385 = vset.pattern.permute.xlu0 0
    %2386 = vperm.xlu0 %2385, %v2368
    %v2387 = vpop.permute.xlu0 %2386
    %2390 = vset.pattern.permute.xlu0 0
    %2391 = vperm.xlu0 %2390, %v2369
    %v2392 = vpop.permute.xlu0 %2391
    %2395 = vset.pattern.permute.xlu0 0
    %2396 = vperm.xlu0 %2395, %v2370
    %v2397 = vpop.permute.xlu0 %2396
    %2400 = vset.pattern.permute.xlu0 0
    %2401 = vperm.xlu0 %2400, %v2371
    %v2402 = vpop.permute.xlu0 %2401
    %2405 = vset.pattern.permute.xlu0 0
    %2406 = vperm.xlu0 %2405, %v2372
    %v2407 = vpop.permute.xlu0 %2406
    %2410 = vset.pattern.permute.xlu0 0
    %2411 = vperm.xlu0 %2410, %v2373
    %v2412 = vpop.permute.xlu0 %2411
    %vm2414 = vcmask 261120
    %v2416 = vsel %vm2414, %v2358, 0
    %v2419 = vsel %vm2414, %v2359, 0
    %v2422 = vsel %vm2414, %v2360, 0
    %v2425 = vsel %vm2414, %v2361, 0
    %v2428 = vsel %vm2414, %v2362, 0
    %v2431 = vsel %vm2414, %v2363, 0
    %v2434 = vsel %vm2414, %v2364, 0
    %v2437 = vsel %vm2414, %v2365, 0
    %2439 = vmatprep.subr.mxu0 0.0
    %2440 = vmatpush1.msra.mxu0 %v2354
    %2441 = vmatprep.subr.mxu0 0.0
    %2442 = vmatpush1.msra.mxu0 %v2355
    %2443 = vmatprep.subr.mxu0 0.0
    %2444 = vmatpush1.msra.mxu0 %v2356
    %2445 = vmatprep.subr.mxu0 0.0
    %2446 = vmatpush1.msra.mxu0 %v2357
    %2447 = vmatprep.subr.mxu0 0.0
    %2448 = vmatpush1.msra.mxu0 0.0
    %2449 = vmatprep.subr.mxu0 0.0
    %2450 = vmatpush1.msra.mxu0 0.0
    %2451 = vmatprep.subr.mxu0 0.0
    %2452 = vmatpush1.msra.mxu0 0.0
    %2453 = vmatprep.subr.mxu0 0.0
    %2454 = vmatpush1.msra.mxu0 0.0
    %2455 = vmatprep.subr.mxu0 0.0
    %2456 = vmatpush1.msra.mxu0 0.0
    %2457 = vmatprep.subr.mxu0 0.0
    %2458 = vmatpush1.msra.mxu0 0.0
    %2459 = vmatprep.subr.mxu0 0.0
    %2460 = vmatpush1.msra.mxu0 0.0
    %2461 = vmatprep.subr.mxu0 0.0
    %2462 = vmatpush1.msra.mxu0 0.0
    %2463 = vmatprep.subr.mxu0 0.0
    %2464 = vmatpush1.msra.mxu0 0.0
    %2465 = vmatprep.subr.mxu0 0.0
    %2466 = vmatpush1.msra.mxu0 0.0
    %2467 = vmatprep.subr.mxu0 0.0
    %2468 = vmatpush1.msra.mxu0 0.0
    %2469 = vmatprep.subr.mxu0 0.0
    %2470 = vmatpush1.msra.mxu0 0.0
    %2471 = vmatprep.subr.mxu0 0.0
    %2472 = vmatpush1.msra.mxu0 0.0
    %2473 = vmatprep.subr.mxu0 0.0
    %2474 = vmatpush1.msra.mxu0 0.0
    %2475 = vmatprep.subr.mxu0 0.0
    %2476 = vmatpush1.msra.mxu0 0.0
    %2477 = vmatprep.subr.mxu0 0.0
    %2478 = vmatpush1.msra.mxu0 0.0
    %2479 = vmatprep.subr.mxu0 0.0
    %2480 = vmatpush1.msra.mxu0 0.0
    %2481 = vmatprep.subr.mxu0 0.0
    %2482 = vmatpush1.msra.mxu0 0.0
    %2483 = vmatprep.subr.mxu0 0.0
    %2484 = vmatpush1.msra.mxu0 0.0
    %2485 = vmatprep.subr.mxu0 0.0
    %2486 = vmatpush1.msra.mxu0 0.0
    %2487 = vmatprep.subr.mxu0 0.0
    %2488 = vmatpush1.msra.mxu0 0.0
    %2489 = vmatprep.subr.mxu0 0.0
    %2490 = vmatpush1.msra.mxu0 0.0
    %2491 = vmatprep.subr.mxu0 0.0
    %2492 = vmatpush1.msra.mxu0 0.0
    %2493 = vmatprep.subr.mxu0 0.0
    %2494 = vmatpush1.msra.mxu0 0.0
    %2495 = vmatprep.subr.mxu0 0.0
    %2496 = vmatpush1.msra.mxu0 0.0
    %2497 = vmatprep.subr.mxu0 0.0
    %2498 = vmatpush1.msra.mxu0 0.0
    %2499 = vmatprep.subr.mxu0 0.0
    %2500 = vmatpush1.msra.mxu0 0.0
    %2501 = vmatprep.subr.mxu0 0.0
    %2502 = vmatpush1.msra.mxu0 0.0
    %2503 = vmatprep.mubr.f32.mxu0 0.0
    %2504 = vmatmul.mubr.f32.gmra.mrb[0].mxu0 %v2416
    %v2505 = vpop.f32.mrb[0].mxu0
    %v2506 = vadd.f32 %v2377, %v2505
    %v2507 = vpop.f32.mrb[0].mxu0
    %2508 = vmatprep.mubr.f32.mxu0 0.0
    %2509 = vmatmul.mubr.f32.gmra.mrb[0].mxu0 %v2419
    %v2510 = vpop.f32.mrb[0].mxu0
    %v2511 = vadd.f32 %v2382, %v2510
    %v2512 = vpop.f32.mrb[0].mxu0
    %2513 = vmatprep.mubr.f32.mxu0 0.0
    %2514 = vmatmul.mubr.f32.gmra.mrb[0].mxu0 %v2422
    %v2515 = vpop.f32.mrb[0].mxu0
    %v2516 = vadd.f32 %v2387, %v2515
    %v2517 = vpop.f32.mrb[0].mxu0
    %2518 = vmatprep.mubr.f32.mxu0 0.0
    %2519 = vmatmul.mubr.f32.gmra.mrb[0].mxu0 %v2425
    %v2520 = vpop.f32.mrb[0].mxu0
    %v2521 = vadd.f32 %v2392, %v2520
    %v2522 = vpop.f32.mrb[0].mxu0
    %2523 = vmatprep.mubr.f32.mxu0 0.0
    %2524 = vmatmul.mubr.f32.gmra.mrb[0].mxu0 %v2428
    %v2525 = vpop.f32.mrb[0].mxu0
    %v2526 = vadd.f32 %v2397, %v2525
    %v2527 = vpop.f32.mrb[0].mxu0
    %2528 = vmatprep.mubr.f32.mxu0 0.0
    %2529 = vmatmul.mubr.f32.gmra.mrb[0].mxu0 %v2431
    %v2530 = vpop.f32.mrb[0].mxu0
    %v2531 = vadd.f32 %v2402, %v2530
    %v2532 = vpop.f32.mrb[0].mxu0
    %2533 = vmatprep.mubr.f32.mxu0 0.0
    %2534 = vmatmul.mubr.f32.gmra.mrb[0].mxu0 %v2434
    %v2535 = vpop.f32.mrb[0].mxu0
    %v2536 = vadd.f32 %v2407, %v2535
    %v2537 = vpop.f32.mrb[0].mxu0
    %2538 = vmatprep.mubr.f32.mxu0 0.0
    %2539 = vmatmul.mubr.f32.gmra.mrb[0].mxu0 %v2437
    %v2540 = vpop.f32.mrb[0].mxu0
    %v2541 = vadd.f32 %v2412, %v2540
    %v2542 = vpop.f32.mrb[0].mxu0
    %2543 = vdwg.mxu0
    %v2544 = vmax.f32 %v2506, 0.0
    %v2545 = vmax.f32 %v2511, 0.0
    %v2546 = vmax.f32 %v2516, 0.0
    %v2547 = vmax.f32 %v2521, 0.0
    %v2548 = vmax.f32 %v2526, 0.0
    %v2549 = vmax.f32 %v2531, 0.0
    %v2550 = vmax.f32 %v2536, 0.0
    %v2551 = vmax.f32 %v2541, 0.0
    %v2552 = vld [vmem:[#allocation6] sm:$0xff]
    %v2553 = vld [vmem:[#allocation6 + $0x8] sm:$0xff]
    %v2554 = vld [vmem:[#allocation6 + $0x10] sm:$0xff]
    %v2555 = vld [vmem:[#allocation6 + $0x18] sm:$0xff]
    %v2556 = vld [vmem:[#allocation6 + $0x20] sm:$0xff]
    %v2557 = vld [vmem:[#allocation6 + $0x28] sm:$0xff]
    %v2558 = vld [vmem:[#allocation6 + $0x30] sm:$0xff]
    %v2559 = vld [vmem:[#allocation6 + $0x38] sm:$0xff]
    %v2560 = vld [vmem:[%s6] sm:$0xff]
    %v2561 = vld [vmem:[%s6 + $0x8] sm:$0xff]
    %v2562 = vld [vmem:[%s6 + $0x10] sm:$0xff]
    %v2563 = vld [vmem:[%s6 + $0x18] sm:$0xff]
    %v2564 = vld [vmem:[%s6 + $0x20] sm:$0xff]
    %v2565 = vld [vmem:[%s6 + $0x28] sm:$0xff]
    %v2566 = vld [vmem:[%s6 + $0x30] sm:$0xff]
    %v2567 = vld [vmem:[%s6 + $0x38] sm:$0xff]
    %2569 = vset.pattern.permute.xlu0 0
    %2570 = vperm.xlu0 %2569, %v2560
    %v2571 = vpop.permute.xlu0 %2570
    %2574 = vset.pattern.permute.xlu0 0
    %2575 = vperm.xlu0 %2574, %v2561
    %v2576 = vpop.permute.xlu0 %2575
    %2579 = vset.pattern.permute.xlu0 0
    %2580 = vperm.xlu0 %2579, %v2562
    %v2581 = vpop.permute.xlu0 %2580
    %2584 = vset.pattern.permute.xlu0 0
    %2585 = vperm.xlu0 %2584, %v2563
    %v2586 = vpop.permute.xlu0 %2585
    %2589 = vset.pattern.permute.xlu0 0
    %2590 = vperm.xlu0 %2589, %v2564
    %v2591 = vpop.permute.xlu0 %2590
    %2594 = vset.pattern.permute.xlu0 0
    %2595 = vperm.xlu0 %2594, %v2565
    %v2596 = vpop.permute.xlu0 %2595
    %2599 = vset.pattern.permute.xlu0 0
    %2600 = vperm.xlu0 %2599, %v2566
    %v2601 = vpop.permute.xlu0 %2600
    %2604 = vset.pattern.permute.xlu0 0
    %2605 = vperm.xlu0 %2604, %v2567
    %v2606 = vpop.permute.xlu0 %2605
    %vm2608 = vcmask 523264
    %v2610 = vsel %vm2608, %v2552, 0
    %v2613 = vsel %vm2608, %v2553, 0
    %v2616 = vsel %vm2608, %v2554, 0
    %v2619 = vsel %vm2608, %v2555, 0
    %v2622 = vsel %vm2608, %v2556, 0
    %v2625 = vsel %vm2608, %v2557, 0
    %v2628 = vsel %vm2608, %v2558, 0
    %v2631 = vsel %vm2608, %v2559, 0
    %2633 = vmatprep.subr.mxu0 0.0
    %2634 = vmatpush1.msra.mxu0 %v2544
    %2635 = vmatprep.subr.mxu0 0.0
    %2636 = vmatpush1.msra.mxu0 %v2545
    %2637 = vmatprep.subr.mxu0 0.0
    %2638 = vmatpush1.msra.mxu0 %v2546
    %2639 = vmatprep.subr.mxu0 0.0
    %2640 = vmatpush1.msra.mxu0 %v2547
    %2641 = vmatprep.subr.mxu0 0.0
    %2642 = vmatpush1.msra.mxu0 %v2548
    %2643 = vmatprep.subr.mxu0 0.0
    %2644 = vmatpush1.msra.mxu0 %v2549
    %2645 = vmatprep.subr.mxu0 0.0
    %2646 = vmatpush1.msra.mxu0 %v2550
    %2647 = vmatprep.subr.mxu0 0.0
    %2648 = vmatpush1.msra.mxu0 %v2551
    %2649 = vmatprep.subr.mxu0 0.0
    %2650 = vmatpush1.msra.mxu0 0.0
    %2651 = vmatprep.subr.mxu0 0.0
    %2652 = vmatpush1.msra.mxu0 0.0
    %2653 = vmatprep.subr.mxu0 0.0
    %2654 = vmatpush1.msra.mxu0 0.0
    %2655 = vmatprep.subr.mxu0 0.0
    %2656 = vmatpush1.msra.mxu0 0.0
    %2657 = vmatprep.subr.mxu0 0.0
    %2658 = vmatpush1.msra.mxu0 0.0
    %2659 = vmatprep.subr.mxu0 0.0
    %2660 = vmatpush1.msra.mxu0 0.0
    %2661 = vmatprep.subr.mxu0 0.0
    %2662 = vmatpush1.msra.mxu0 0.0
    %2663 = vmatprep.subr.mxu0 0.0
    %2664 = vmatpush1.msra.mxu0 0.0
    %2665 = vmatprep.subr.mxu0 0.0
    %2666 = vmatpush1.msra.mxu0 0.0
    %2667 = vmatprep.subr.mxu0 0.0
    %2668 = vmatpush1.msra.mxu0 0.0
    %2669 = vmatprep.subr.mxu0 0.0
    %2670 = vmatpush1.msra.mxu0 0.0
    %2671 = vmatprep.subr.mxu0 0.0
    %2672 = vmatpush1.msra.mxu0 0.0
    %2673 = vmatprep.subr.mxu0 0.0
    %2674 = vmatpush1.msra.mxu0 0.0
    %2675 = vmatprep.subr.mxu0 0.0
    %2676 = vmatpush1.msra.mxu0 0.0
    %2677 = vmatprep.subr.mxu0 0.0
    %2678 = vmatpush1.msra.mxu0 0.0
    %2679 = vmatprep.subr.mxu0 0.0
    %2680 = vmatpush1.msra.mxu0 0.0
    %2681 = vmatprep.subr.mxu0 0.0
    %2682 = vmatpush1.msra.mxu0 0.0
    %2683 = vmatprep.subr.mxu0 0.0
    %2684 = vmatpush1.msra.mxu0 0.0
    %2685 = vmatprep.subr.mxu0 0.0
    %2686 = vmatpush1.msra.mxu0 0.0
    %2687 = vmatprep.subr.mxu0 0.0
    %2688 = vmatpush1.msra.mxu0 0.0
    %2689 = vmatprep.subr.mxu0 0.0
    %2690 = vmatpush1.msra.mxu0 0.0
    %2691 = vmatprep.subr.mxu0 0.0
    %2692 = vmatpush1.msra.mxu0 0.0
    %2693 = vmatprep.subr.mxu0 0.0
    %2694 = vmatpush1.msra.mxu0 0.0
    %2695 = vmatprep.subr.mxu0 0.0
    %2696 = vmatpush1.msra.mxu0 0.0
    %2697 = vmatprep.mubr.f32.mxu0 0.0
    %2698 = vmatmul.mubr.f32.gmra.mrb[0].mxu0 %v2610
    %v2699 = vpop.f32.mrb[0].mxu0
    %v2700 = vadd.f32 %v2571, %v2699
    %v2701 = vpop.f32.mrb[0].mxu0
    %2702 = vmatprep.mubr.f32.mxu0 0.0
    %2703 = vmatmul.mubr.f32.gmra.mrb[0].mxu0 %v2613
    %v2704 = vpop.f32.mrb[0].mxu0
    %v2705 = vadd.f32 %v2576, %v2704
    %v2706 = vpop.f32.mrb[0].mxu0
    %2707 = vmatprep.mubr.f32.mxu0 0.0
    %2708 = vmatmul.mubr.f32.gmra.mrb[0].mxu0 %v2616
    %v2709 = vpop.f32.mrb[0].mxu0
    %v2710 = vadd.f32 %v2581, %v2709
    %v2711 = vpop.f32.mrb[0].mxu0
    %2712 = vmatprep.mubr.f32.mxu0 0.0
    %2713 = vmatmul.mubr.f32.gmra.mrb[0].mxu0 %v2619
    %v2714 = vpop.f32.mrb[0].mxu0
    %v2715 = vadd.f32 %v2586, %v2714
    %v2716 = vpop.f32.mrb[0].mxu0
    %2717 = vmatprep.mubr.f32.mxu0 0.0
    %2718 = vmatmul.mubr.f32.gmra.mrb[0].mxu0 %v2622
    %v2719 = vpop.f32.mrb[0].mxu0
    %v2720 = vadd.f32 %v2591, %v2719
    %v2721 = vpop.f32.mrb[0].mxu0
    %2722 = vmatprep.mubr.f32.mxu0 0.0
    %2723 = vmatmul.mubr.f32.gmra.mrb[0].mxu0 %v2625
    %v2724 = vpop.f32.mrb[0].mxu0
    %v2725 = vadd.f32 %v2596, %v2724
    %v2726 = vpop.f32.mrb[0].mxu0
    %2727 = vmatprep.mubr.f32.mxu0 0.0
    %2728 = vmatmul.mubr.f32.gmra.mrb[0].mxu0 %v2628
    %v2729 = vpop.f32.mrb[0].mxu0
    %v2730 = vadd.f32 %v2601, %v2729
    %v2731 = vpop.f32.mrb[0].mxu0
    %2732 = vmatprep.mubr.f32.mxu0 0.0
    %2733 = vmatmul.mubr.f32.gmra.mrb[0].mxu0 %v2631
    %v2734 = vpop.f32.mrb[0].mxu0
    %v2735 = vadd.f32 %v2606, %v2734
    %v2736 = vpop.f32.mrb[0].mxu0
    %2737 = vdwg.mxu0
    %v2738 = vmax.f32 %v2700, 0.0
    %v2739 = vmax.f32 %v2705, 0.0
    %v2740 = vmax.f32 %v2710, 0.0
    %v2741 = vmax.f32 %v2715, 0.0
    %v2742 = vmax.f32 %v2720, 0.0
    %v2743 = vmax.f32 %v2725, 0.0
    %v2744 = vmax.f32 %v2730, 0.0
    %v2745 = vmax.f32 %v2735, 0.0
    %v2746 = vld [vmem:[%s7] sm:$0x1]
    %v2747 = vld [vmem:[#allocation2] sm:$0x1]
    %2749 = vset.pattern.permute.xlu0 0
    %2750 = vperm.xlu0 %2749, %v2747
    %v2751 = vpop.permute.xlu0 %2750
    %v2753 = vlaneseq
    %v2754 = vshrl.u32 %v2753, 7
    %v2755 = vsub.s32 0, %v2754
    %v2756 = vrot.slane %v2751, %v2755
    %v2758 = vsel %vm2608, %v2746, 0
    %2760 = vmatprep.subr.mxu0 0.0
    %2761 = vmatpush1.msra.mxu0 %v2738
    %2762 = vmatprep.subr.mxu0 0.0
    %2763 = vmatpush1.msra.mxu0 %v2739
    %2764 = vmatprep.subr.mxu0 0.0
    %2765 = vmatpush1.msra.mxu0 %v2740
    %2766 = vmatprep.subr.mxu0 0.0
    %2767 = vmatpush1.msra.mxu0 %v2741
    %2768 = vmatprep.subr.mxu0 0.0
    %2769 = vmatpush1.msra.mxu0 %v2742
    %2770 = vmatprep.subr.mxu0 0.0
    %2771 = vmatpush1.msra.mxu0 %v2743
    %2772 = vmatprep.subr.mxu0 0.0
    %2773 = vmatpush1.msra.mxu0 %v2744
    %2774 = vmatprep.subr.mxu0 0.0
    %2775 = vmatpush1.msra.mxu0 %v2745
    %2776 = vmatprep.subr.mxu0 0.0
    %2777 = vmatpush1.msra.mxu0 0.0
    %2778 = vmatprep.subr.mxu0 0.0
    %2779 = vmatpush1.msra.mxu0 0.0
    %2780 = vmatprep.subr.mxu0 0.0
    %2781 = vmatpush1.msra.mxu0 0.0
    %2782 = vmatprep.subr.mxu0 0.0
    %2783 = vmatpush1.msra.mxu0 0.0
    %2784 = vmatprep.subr.mxu0 0.0
    %2785 = vmatpush1.msra.mxu0 0.0
    %2786 = vmatprep.subr.mxu0 0.0
    %2787 = vmatpush1.msra.mxu0 0.0
    %2788 = vmatprep.subr.mxu0 0.0
    %2789 = vmatpush1.msra.mxu0 0.0
    %2790 = vmatprep.subr.mxu0 0.0
    %2791 = vmatpush1.msra.mxu0 0.0
    %2792 = vmatprep.subr.mxu0 0.0
    %2793 = vmatpush1.msra.mxu0 0.0
    %2794 = vmatprep.subr.mxu0 0.0
    %2795 = vmatpush1.msra.mxu0 0.0
    %2796 = vmatprep.subr.mxu0 0.0
    %2797 = vmatpush1.msra.mxu0 0.0
    %2798 = vmatprep.subr.mxu0 0.0
    %2799 = vmatpush1.msra.mxu0 0.0
    %2800 = vmatprep.subr.mxu0 0.0
    %2801 = vmatpush1.msra.mxu0 0.0
    %2802 = vmatprep.subr.mxu0 0.0
    %2803 = vmatpush1.msra.mxu0 0.0
    %2804 = vmatprep.subr.mxu0 0.0
    %2805 = vmatpush1.msra.mxu0 0.0
    %2806 = vmatprep.subr.mxu0 0.0
    %2807 = vmatpush1.msra.mxu0 0.0
    %2808 = vmatprep.subr.mxu0 0.0
    %2809 = vmatpush1.msra.mxu0 0.0
    %2810 = vmatprep.subr.mxu0 0.0
    %2811 = vmatpush1.msra.mxu0 0.0
    %2812 = vmatprep.subr.mxu0 0.0
    %2813 = vmatpush1.msra.mxu0 0.0
    %2814 = vmatprep.subr.mxu0 0.0
    %2815 = vmatpush1.msra.mxu0 0.0
    %2816 = vmatprep.subr.mxu0 0.0
    %2817 = vmatpush1.msra.mxu0 0.0
    %2818 = vmatprep.subr.mxu0 0.0
    %2819 = vmatpush1.msra.mxu0 0.0
    %2820 = vmatprep.subr.mxu0 0.0
    %2821 = vmatpush1.msra.mxu0 0.0
    %2822 = vmatprep.subr.mxu0 0.0
    %2823 = vmatpush1.msra.mxu0 0.0
    %2824 = vmatprep.mubr.f32.mxu0 0.0
    %2825 = vmatmul.mubr.f32.gmra.mrb[0].mxu0 %v2758
    %v2826 = vpop.f32.mrb[0].mxu0
    %v2827 = vadd.f32 %v2756, %v2826
    %v2828 = vpop.f32.mrb[0].mxu0
    %2829 = vdwg.mxu0
    %2830 = vst [vmem:[#allocation8] sm:$0x1] %v2827
    // Predicated region
    $region46: #{tpu_custom_call.1} parent=1 // pred_check
      _
    $region47: #{tpu_custom_call.1} parent=1 // pred_check_branch
      %2832 = sbr.rel (0) target = $region49
    $region48: #{tpu_custom_call.1} parent=1 // pred_region
      %s2834 = ssub.s32 16, 16
      %2835 = vsyncadd [#allocation5], %s2834
      %s2837 = sshll.u32 [#allocation8], 4
      %s2838 = int_to_ptr.vmem [resolvable:$true] %s2837
      %2840 = dma.vmem_to_hbm [thread:$0]  %s2838, 16, %s9, [#allocation5]
    $region49: #{tpu_custom_call.1} parent=1 // pred_fallthru
      _
    // Predicated region
    $region50: #{tpu_custom_call.1} parent=1 // pred_check
      _
    $region51: #{tpu_custom_call.1} parent=1 // pred_check_branch
      %2842 = sbr.rel (0) target = $region53
    $region52: #{tpu_custom_call.1} parent=1 // pred_region
      %2843 = dma.done [#allocation5], 16
    $region53: #{tpu_custom_call.1} parent=1 // pred_fallthru
      _
    %2844 = vsyncpa [#allocation4], 1
    %2845 = vsyncpa [#allocation7], 1
    %2846 = vsyncpa [#allocation5], 1

</llo_original>
